<compile_context>
chip_gen: v7x
topology: tpu7x:2x2x1
jax: 0.10.0
libtpu: 0.0.40
codegen_flags: <defaults>
</compile_context>

<pallas_src>
import functools
import math

import jax
import jax.numpy as jnp
from jax.experimental import pallas as pl
from jax.experimental.pallas import tpu as pltpu


# ----------------------------------------------------------------------------
# Kernel 1: fc1 -> tanh -> fc2 -> phase normalization
# ----------------------------------------------------------------------------
def _prep_kernel(x_ref, w1_ref, b1_ref, w2_ref, b2_ref, np_ref):
    # x_ref: (B, 2*S) flattened [A | P]; np_ref: (B, S) normalized phase output.
    S = np_ref.shape[1]
    x2d = x_ref[...]
    h = jnp.tanh(
        jnp.dot(x2d, w1_ref[...], preferred_element_type=jnp.float32) + b1_ref[...]
    )
    wp = jnp.dot(h, w2_ref[...], preferred_element_type=jnp.float32) + b2_ref[...]
    w = wp[:, 0:1]      # (B, 1)
    phi = wp[:, 1:2]    # (B, 1)
    n = jax.lax.broadcasted_iota(jnp.int32, (1, S), 1).astype(jnp.float32)
    P = x2d[:, S:2 * S]
    nP = P - (w * n - phi) / math.pi
    # torch `%` is remainder (sign of divisor) == jnp.mod for floats.
    np_ref[...] = jnp.mod(nP, 2.0) - 1.0


# ----------------------------------------------------------------------------
# Kernel 2: 2-layer LSTM recurrence + classifier head
#   g0in_ref : (S*Bp, 4H) precomputed layer-0 input projection (g-block 2x-scaled)
#   whh0/wih1/whh1 : (H, 4H) recurrent / input weights (g-block 2x-scaled)
#   b1_ref   : (1, 4H) layer-1 combined bias (g-block 2x-scaled)
#   outputs  : h1hist (S*Bp, H) top-layer hidden history, out3 (Bp, n_classes)
# ----------------------------------------------------------------------------
def _lstm_head_kernel(Bp, H,
                      g0in_ref, whh0_ref, wih1_ref, whh1_ref, b1_ref,
                      c1w_ref, c1b_ref, c2w_ref, c2b_ref, c3w_ref, c3b_ref,
                      h1hist_ref, out3_ref):
    S = g0in_ref.shape[0] // Bp
    H4 = 4 * H

    # Loop-invariant loads / broadcasts hoisted out of the recurrence.
    whh0 = whh0_ref[...]
    wih1 = wih1_ref[...]
    whh1 = whh1_ref[...]
    b1b = jnp.broadcast_to(b1_ref[...], (Bp, H4))

    def cell(s, c):
        # s = sigmoid(full (Bp,4H) gate vreg); PyTorch gate order [i, f, g, o].
        # The g-gate block of the weights/bias was pre-scaled by 2 on the host,
        # so tanh(z_g) = 2*sigmoid(2*z_g) - 1 = 2*s_g - 1.
        i = s[:, 0:H]
        f = s[:, H:2 * H]
        g = 2.0 * s[:, 2 * H:3 * H] - 1.0
        o = s[:, 3 * H:4 * H]
        c_new = f * c + i * g
        h_new = o * jnp.tanh(c_new)
        return h_new, c_new

    def one_step(t, carry):
        h0, c0, h1, c1 = carry
        off = pl.multiple_of(t * Bp, Bp)

        # Layer 0: input projection is precomputed; only the recurrent matmul
        # remains on the serial critical path.
        g0 = g0in_ref[pl.ds(off, Bp), :] + jnp.dot(
            h0, whh0, preferred_element_type=jnp.float32)
        h0n, c0n = cell(jax.nn.sigmoid(g0), c0)

        # Layer 1.
        # NOTE: kept as two matmuls + add; a single (8,64)x(64,128) matmul would
        # need a minor-dim concatenate of (8,32) operands, a lowering risk that
        # is not worth one saved MXU push on this latency-bound loop.
        g1 = (jnp.dot(h0n, wih1, preferred_element_type=jnp.float32)
              + jnp.dot(h1, whh1, preferred_element_type=jnp.float32) + b1b)
        h1n, c1n = cell(jax.nn.sigmoid(g1), c1)

        # Record top-layer hidden state; the 32->2 decode happens after the loop
        # (in XLA glue), keeping the per-step store off the dependency chain.
        h1hist_ref[pl.ds(off, Bp), :] = h1n
        return h0n, c0n, h1n, c1n

    UNROLL = 4  # S = 1024 -> 256 loop iterations of 4 fully-inlined steps

    def unrolled_steps(i, carry):
        for u in range(UNROLL):
            carry = one_step(UNROLL * i + u, carry)
        return carry

    zeros = jnp.zeros((Bp, H), jnp.float32)
    carry = (zeros, zeros, zeros, zeros)
    carry = jax.lax.fori_loop(0, S // UNROLL, unrolled_steps, carry)
    for r in range((S // UNROLL) * UNROLL, S):  # remainder (not taken for S=1024)
        carry = one_step(r, carry)
    h1_last = carry[2]                                        # (Bp, H)

    # Classifier head (BatchNorm folded into c2/c3 weights on the host).
    o1 = jnp.maximum(
        jnp.dot(h1_last, c1w_ref[...], preferred_element_type=jnp.float32)
        + c1b_ref[...], 0.0)
    o2 = jnp.maximum(
        jnp.dot(o1, c2w_ref[...], preferred_element_type=jnp.float32)
        + c2b_ref[...], 0.0)
    out3_ref[...] = (
        jnp.dot(o2, c3w_ref[...], preferred_element_type=jnp.float32)
        + c3b_ref[...])


# ----------------------------------------------------------------------------
# Parameters (deterministic, PyTorch-style uniform fan-in init)
# ----------------------------------------------------------------------------
def init_params(key, n_classes=4, S=1024, hidden=32, inp=2):
    ks = jax.random.split(key, 20)

    def u(k, shape, fan_in):
        b = 1.0 / math.sqrt(fan_in)
        return jax.random.uniform(k, shape, jnp.float32, -b, b)

    H = hidden
    p = {}
    p['fc1_w'] = u(ks[0], (80, 2 * S), 2 * S); p['fc1_b'] = u(ks[1], (80,), 2 * S)
    p['fc2_w'] = u(ks[2], (2, 80), 80);        p['fc2_b'] = u(ks[3], (2,), 80)
    # LSTM layer 0
    p['wih0'] = u(ks[4], (4 * H, inp), H);     p['whh0'] = u(ks[5], (4 * H, H), H)
    p['bih0'] = u(ks[6], (4 * H,), H);         p['bhh0'] = u(ks[7], (4 * H,), H)
    # LSTM layer 1
    p['wih1'] = u(ks[8], (4 * H, H), H);       p['whh1'] = u(ks[9], (4 * H, H), H)
    p['bih1'] = u(ks[10], (4 * H,), H);        p['bhh1'] = u(ks[11], (4 * H,), H)
    # TimeDistributed decoder Linear(hidden -> input)
    p['fcd_w'] = u(ks[12], (inp, H), H);       p['fcd_b'] = u(ks[13], (inp,), H)
    # classifier head
    p['c1_w'] = u(ks[14], (32, 32), 32);       p['c1_b'] = u(ks[15], (32,), 32)
    p['c2_w'] = u(ks[16], (16, 32), 32);       p['c2_b'] = u(ks[17], (16,), 32)
    p['c3_w'] = u(ks[18], (n_classes, 16), 16); p['c3_b'] = u(ks[19], (n_classes,), 16)
    return p


# ----------------------------------------------------------------------------
# Forward wrapper
# ----------------------------------------------------------------------------
def cm_daelstm_forward(x, p, n_classes):
    B, C, S = x.shape
    H = 32
    H4 = 4 * H
    Bp = 8  # batch padded to one sublane tile so per-step row blocks are 8-aligned

    x2d = x.reshape(B, C * S).astype(jnp.float32)

    # --- kernel 1: fc1 -> tanh -> fc2 -> phase normalization -----------------
    nP = pl.pallas_call(
        _prep_kernel,
        out_shape=jax.ShapeDtypeStruct((B, S), jnp.float32),
        in_specs=[pl.BlockSpec(memory_space=pltpu.MemorySpace.VMEM)] * 5,
        out_specs=pl.BlockSpec(memory_space=pltpu.MemorySpace.VMEM),
    )(x2d,
      p['fc1_w'].T, p['fc1_b'].reshape(1, -1),
      p['fc2_w'].T, p['fc2_b'].reshape(1, -1))

    nA = x[:, 0, :].astype(jnp.float32)               # amplitude passes through

    # glue: seq-major, batch-padded LSTM input (S*Bp, 2); feature order (nA, nP)
    xseq = jnp.stack([nA, nP], axis=-1)               # (B, S, 2)
    xseq = jnp.transpose(xseq, (1, 0, 2))             # (S, B, 2)
    xseq = jnp.pad(xseq, ((0, 0), (0, Bp - B), (0, 0)))
    xsb = xseq.reshape(S * Bp, 2)

    def scale_g(a):
        # tanh(z) = 2*sigmoid(2z) - 1: pre-scale the tanh-gate (g) block by 2 so
        # a single full-vreg sigmoid covers all four gates inside the kernel.
        return a.at[..., 2 * H:3 * H].multiply(2.0)

    wih0s = scale_g(p['wih0'].T)                                   # (2,  4H)
    whh0s = scale_g(p['whh0'].T)                                   # (H,  4H)
    b0s = scale_g((p['bih0'] + p['bhh0']).reshape(1, H4))          # (1,  4H)
    wih1s = scale_g(p['wih1'].T)                                   # (H,  4H)
    whh1s = scale_g(p['whh1'].T)                                   # (H,  4H)
    b1s = scale_g((p['bih1'] + p['bhh1']).reshape(1, H4))          # (1,  4H)

    # Layer-0 input projection hoisted out of the recurrence: one bulk matmul
    # (bias folded in) instead of a narrow matmul per step inside the kernel.
    g0in = jnp.dot(xsb, wih0s, preferred_element_type=jnp.float32) + b0s  # (S*Bp, 4H)

    # BatchNorm (inference mode, default running stats: mean=0, var=1, affine
    # identity), folded into the next Linear layer: Lin(BN(y)) = y@(s*W^T)+(t@W^T+b).
    eps = 1e-5
    bn1s = jnp.full((32,), 1.0 / math.sqrt(1.0 + eps), jnp.float32)
    bn1t = jnp.zeros((32,), jnp.float32)
    bn2s = jnp.full((16,), 1.0 / math.sqrt(1.0 + eps), jnp.float32)
    bn2t = jnp.zeros((16,), jnp.float32)
    c2wT = p['c2_w'].T * bn1s[:, None]
    c2b = p['c2_b'] + bn1t @ p['c2_w'].T
    c3wT = p['c3_w'].T * bn2s[:, None]
    c3b = p['c3_b'] + bn2t @ p['c3_w'].T

    kernel = functools.partial(_lstm_head_kernel, Bp, H)
    h1hist, out3_p = pl.pallas_call(
        kernel,
        out_shape=(jax.ShapeDtypeStruct((S * Bp, H), jnp.float32),
                   jax.ShapeDtypeStruct((Bp, n_classes), jnp.float32)),
        in_specs=[pl.BlockSpec(memory_space=pltpu.MemorySpace.VMEM)] * 11,
        out_specs=(pl.BlockSpec(memory_space=pltpu.MemorySpace.VMEM),
                   pl.BlockSpec(memory_space=pltpu.MemorySpace.VMEM)),
    )(g0in, whh0s, wih1s, whh1s, b1s,
      p['c1_w'].T, p['c1_b'].reshape(1, -1),
      c2wT, c2b.reshape(1, -1),
      c3wT, c3b.reshape(1, -1))

    # glue: TimeDistributed Linear(hidden -> input) decoder applied in bulk,
    # then unpad / relayout back to PyTorch shapes.
    h1seq = h1hist.reshape(S, Bp, H)[:, :B, :]                          # (S, B, H)
    rec = jnp.einsum('sbh,hc->sbc', h1seq, p['fcd_w'].T) + p['fcd_b']   # (S, B, 2)
    rec_out = jnp.transpose(rec, (1, 2, 0))          # (B, 2, S) == torch rec_out.transpose(1, 2)
    out3 = out3_p[:B]                                # (B, n_classes)
    return rec_out, out3


if __name__ == "__main__":
    key = jax.random.PRNGKey(0)
    kx, kp = jax.random.split(key)

    n_classes = 4
    B, S = 2, 1024           # S is fixed at 1024 by the module (fc1 in=2048, arange(1024))
    x = jax.random.normal(kx, (B, 2, S), jnp.float32)
    params = init_params(kp, n_classes=n_classes, S=S)

    fwd = jax.jit(functools.partial(cm_daelstm_forward, n_classes=n_classes))
    rec_out, logits = fwd(x, params)
    jax.block_until_ready((rec_out, logits))

    assert rec_out.shape == (B, 2, S), rec_out.shape
    assert logits.shape == (B, n_classes), logits.shape
    assert bool(jnp.all(jnp.isfinite(rec_out))) and bool(jnp.all(jnp.isfinite(logits)))
    print("KERNEL_OK")
</pallas_src>

<mosaic_0001>
module attributes {stable_mosaic.version = 11 : i64} {
  func.func @_prep_kernel(%arg0: memref<2x2048xf32, #tpu.memory_space<vmem>>, %arg1: memref<2048x80xf32, #tpu.memory_space<vmem>>, %arg2: memref<1x80xf32, #tpu.memory_space<vmem>>, %arg3: memref<80x2xf32, #tpu.memory_space<vmem>>, %arg4: memref<1x2xf32, #tpu.memory_space<vmem>>, %arg5: memref<2x1024xf32, #tpu.memory_space<vmem>>) attributes {dimension_semantics = [], scalar_prefetch = 0 : i64, scratch_operands = 0 : i64, tpu.core_type = #tpu.core_type<tc>} {
    %c0 = arith.constant 0 : index
    %c0_0 = arith.constant 0 : index
    %0 = vector.load %arg0[%c0, %c0_0] : memref<2x2048xf32, #tpu.memory_space<vmem>>, vector<2x2048xf32>
    %c0_1 = arith.constant 0 : index
    %c0_2 = arith.constant 0 : index
    %1 = vector.load %arg1[%c0_1, %c0_2] : memref<2048x80xf32, #tpu.memory_space<vmem>>, vector<2048x80xf32>
    %cst = arith.constant dense<0.000000e+00> : vector<2x80xf32>
    %2 = tpu.matmul %0, %1, %cst {dimension_numbers = #tpu.dot_dimension_numbers<[1], [0], [0], [1], [0, 0, 1, 1], [], []>} : vector<2x2048xf32>, vector<2048x80xf32>, vector<2x80xf32> -> vector<2x80xf32>
    %c0_3 = arith.constant 0 : index
    %c0_4 = arith.constant 0 : index
    %3 = vector.load %arg2[%c0_3, %c0_4] : memref<1x80xf32, #tpu.memory_space<vmem>>, vector<1x80xf32>
    %4 = vector.broadcast %3 : vector<1x80xf32> to vector<2x80xf32>
    %5 = arith.addf %2, %4 : vector<2x80xf32>
    %6 = math.tanh %5 : vector<2x80xf32>
    %c0_5 = arith.constant 0 : index
    %c0_6 = arith.constant 0 : index
    %7 = vector.load %arg3[%c0_5, %c0_6] : memref<80x2xf32, #tpu.memory_space<vmem>>, vector<80x2xf32>
    %cst_7 = arith.constant dense<0.000000e+00> : vector<2x2xf32>
    %8 = tpu.matmul %6, %7, %cst_7 {dimension_numbers = #tpu.dot_dimension_numbers<[1], [0], [0], [1], [0, 0, 1, 1], [], []>} : vector<2x80xf32>, vector<80x2xf32>, vector<2x2xf32> -> vector<2x2xf32>
    %c0_8 = arith.constant 0 : index
    %c0_9 = arith.constant 0 : index
    %9 = vector.load %arg4[%c0_8, %c0_9] : memref<1x2xf32, #tpu.memory_space<vmem>>, vector<1x2xf32>
    %10 = vector.broadcast %9 : vector<1x2xf32> to vector<2x2xf32>
    %11 = arith.addf %8, %10 : vector<2x2xf32>
    %12 = vector.extract_strided_slice %11 {offsets = [0, 0], sizes = [2, 1], strides = [1, 1]} : vector<2x2xf32> to vector<2x1xf32>
    %13 = vector.extract_strided_slice %11 {offsets = [0, 1], sizes = [2, 1], strides = [1, 1]} : vector<2x2xf32> to vector<2x1xf32>
    %14 = tpu.iota {dimensions = array<i32: 1>} : vector<1x1024xi32>
    %15 = arith.sitofp %14 : vector<1x1024xi32> to vector<1x1024xf32>
    %16 = vector.extract_strided_slice %0 {offsets = [0, 1024], sizes = [2, 1024], strides = [1, 1]} : vector<2x2048xf32> to vector<2x1024xf32>
    %17 = vector.broadcast %12 : vector<2x1xf32> to vector<2x1024xf32>
    %18 = vector.broadcast %15 : vector<1x1024xf32> to vector<2x1024xf32>
    %19 = arith.mulf %17, %18 : vector<2x1024xf32>
    %20 = vector.broadcast %13 : vector<2x1xf32> to vector<2x1024xf32>
    %21 = arith.subf %19, %20 : vector<2x1024xf32>
    %cst_10 = arith.constant 3.14159274 : f32
    %22 = vector.broadcast %cst_10 : f32 to vector<2x1024xf32>
    %23 = arith.divf %21, %22 : vector<2x1024xf32>
    %24 = arith.subf %16, %23 : vector<2x1024xf32>
    %cst_11 = arith.constant 2.000000e+00 : f32
    %25 = vector.broadcast %cst_11 : f32 to vector<2x1024xf32>
    %26 = arith.remf %24, %25 : vector<2x1024xf32>
    %cst_12 = arith.constant 0.000000e+00 : f32
    %27 = vector.broadcast %cst_12 : f32 to vector<2x1024xf32>
    %28 = arith.cmpf one, %26, %27 : vector<2x1024xf32>
    %cst_13 = arith.constant 0.000000e+00 : f32
    %29 = vector.broadcast %cst_13 : f32 to vector<2x1024xf32>
    %30 = arith.cmpf olt, %26, %29 : vector<2x1024xf32>
    %cst_14 = arith.constant 0.000000e+00 : f32
    %31 = arith.cmpf olt, %cst_11, %cst_14 : f32
    %32 = vector.broadcast %31 : i1 to vector<2x1024xi1>
    %33 = vector.broadcast %32 : vector<2x1024xi1> to vector<2x1024xi1>
    %34 = arith.xori %30, %33 : vector<2x1024xi1>
    %35 = arith.andi %34, %28 : vector<2x1024xi1>
    %36 = vector.broadcast %cst_11 : f32 to vector<2x1024xf32>
    %37 = arith.addf %26, %36 : vector<2x1024xf32>
    %38 = arith.select %35, %37, %26 : vector<2x1024xi1>, vector<2x1024xf32>
    %cst_15 = arith.constant 1.000000e+00 : f32
    %39 = vector.broadcast %cst_15 : f32 to vector<2x1024xf32>
    %40 = arith.subf %38, %39 : vector<2x1024xf32>
    %c0_16 = arith.constant 0 : index
    %c0_17 = arith.constant 0 : index
    %41 = vector.load %arg5[%c0_16, %c0_17] : memref<2x1024xf32, #tpu.memory_space<vmem>>, vector<2x1024xf32>
    tpu.vector_store %arg5[%c0_16, %c0_17], %40 {strides = array<i32>} : memref<2x1024xf32, #tpu.memory_space<vmem>>, vector<2x1024xf32>,
    return
  }
}

module attributes {stable_mosaic.version = 11 : i64} {
  func.func @_lstm_head_kernel(%arg0: memref<8192x128xf32, #tpu.memory_space<vmem>>, %arg1: memref<32x128xf32, #tpu.memory_space<vmem>>, %arg2: memref<32x128xf32, #tpu.memory_space<vmem>>, %arg3: memref<32x128xf32, #tpu.memory_space<vmem>>, %arg4: memref<1x128xf32, #tpu.memory_space<vmem>>, %arg5: memref<32x32xf32, #tpu.memory_space<vmem>>, %arg6: memref<1x32xf32, #tpu.memory_space<vmem>>, %arg7: memref<32x16xf32, #tpu.memory_space<vmem>>, %arg8: memref<1x16xf32, #tpu.memory_space<vmem>>, %arg9: memref<16x4xf32, #tpu.memory_space<vmem>>, %arg10: memref<1x4xf32, #tpu.memory_space<vmem>>, %arg11: memref<8192x32xf32, #tpu.memory_space<vmem>>, %arg12: memref<8x4xf32, #tpu.memory_space<vmem>>) attributes {dimension_semantics = [], scalar_prefetch = 0 : i64, scratch_operands = 0 : i64, tpu.core_type = #tpu.core_type<tc>} {
    %c0 = arith.constant 0 : index
    %c0_0 = arith.constant 0 : index
    %0 = vector.load %arg1[%c0, %c0_0] : memref<32x128xf32, #tpu.memory_space<vmem>>, vector<32x128xf32>
    %c0_1 = arith.constant 0 : index
    %c0_2 = arith.constant 0 : index
    %1 = vector.load %arg2[%c0_1, %c0_2] : memref<32x128xf32, #tpu.memory_space<vmem>>, vector<32x128xf32>
    %c0_3 = arith.constant 0 : index
    %c0_4 = arith.constant 0 : index
    %2 = vector.load %arg3[%c0_3, %c0_4] : memref<32x128xf32, #tpu.memory_space<vmem>>, vector<32x128xf32>
    %c0_5 = arith.constant 0 : index
    %c0_6 = arith.constant 0 : index
    %3 = vector.load %arg4[%c0_5, %c0_6] : memref<1x128xf32, #tpu.memory_space<vmem>>, vector<1x128xf32>
    %4 = vector.shape_cast %3 : vector<1x128xf32> to vector<1x128xf32>
    %5 = vector.broadcast %4 : vector<1x128xf32> to vector<8x128xf32>
    %cst = arith.constant 0.000000e+00 : f32
    %6 = vector.broadcast %cst : f32 to vector<8x32xf32>
    %c0_i32 = arith.constant 0 : i32
    %c256_i32 = arith.constant 256 : i32
    %7 = arith.addi %c0_i32, %c256_i32 : i32
    %c1_i32 = arith.constant 1 : i32
    %8:4 = scf.for %arg13 = %c0_i32 to %7 step %c1_i32 iter_args(%arg14 = %6, %arg15 = %6, %arg16 = %6, %arg17 = %6) -> (vector<8x32xf32>, vector<8x32xf32>, vector<8x32xf32>, vector<8x32xf32>)  : i32 {
      %c4_i32 = arith.constant 4 : i32
      %29 = arith.muli %c4_i32, %arg13 : i32
      %c0_i32_27 = arith.constant 0 : i32
      %30 = arith.addi %29, %c0_i32_27 : i32
      %c8_i32 = arith.constant 8 : i32
      %31 = arith.muli %30, %c8_i32 : i32
      %32 = tpu.assume_multiple %31, 8 : i32
      %33 = arith.index_cast %32 : i32 to index
      %c0_28 = arith.constant 0 : index
      %34 = vector.load %arg0[%33, %c0_28] : memref<8192x128xf32, #tpu.memory_space<vmem>>, vector<8x128xf32>
      %cst_29 = arith.constant dense<0.000000e+00> : vector<8x128xf32>
      %35 = tpu.matmul %arg14, %0, %cst_29 {dimension_numbers = #tpu.dot_dimension_numbers<[1], [0], [0], [1], [0, 0, 1, 1], [], []>} : vector<8x32xf32>, vector<32x128xf32>, vector<8x128xf32> -> vector<8x128xf32>
      %36 = arith.addf %34, %35 : vector<8x128xf32>
      %37 = arith.negf %36 : vector<8x128xf32>
      %38 = math.exp %37 : vector<8x128xf32>
      %cst_30 = arith.constant 1.000000e+00 : f32
      %39 = vector.broadcast %cst_30 : f32 to vector<8x128xf32>
      %40 = arith.addf %39, %38 : vector<8x128xf32>
      %41 = arith.divf %39, %40 : vector<8x128xf32>
      %42 = vector.extract_strided_slice %41 {offsets = [0, 0], sizes = [8, 32], strides = [1, 1]} : vector<8x128xf32> to vector<8x32xf32>
      %43 = vector.extract_strided_slice %41 {offsets = [0, 32], sizes = [8, 32], strides = [1, 1]} : vector<8x128xf32> to vector<8x32xf32>
      %44 = vector.extract_strided_slice %41 {offsets = [0, 64], sizes = [8, 32], strides = [1, 1]} : vector<8x128xf32> to vector<8x32xf32>
      %cst_31 = arith.constant 2.000000e+00 : f32
      %45 = vector.broadcast %cst_31 : f32 to vector<8x32xf32>
      %46 = arith.mulf %45, %44 : vector<8x32xf32>
      %cst_32 = arith.constant 1.000000e+00 : f32
      %47 = vector.broadcast %cst_32 : f32 to vector<8x32xf32>
      %48 = arith.subf %46, %47 : vector<8x32xf32>
      %49 = vector.extract_strided_slice %41 {offsets = [0, 96], sizes = [8, 32], strides = [1, 1]} : vector<8x128xf32> to vector<8x32xf32>
      %50 = arith.mulf %43, %arg15 : vector<8x32xf32>
      %51 = arith.mulf %42, %48 : vector<8x32xf32>
      %52 = arith.addf %50, %51 : vector<8x32xf32>
      %53 = math.tanh %52 : vector<8x32xf32>
      %54 = arith.mulf %49, %53 : vector<8x32xf32>
      %cst_33 = arith.constant dense<0.000000e+00> : vector<8x128xf32>
      %55 = tpu.matmul %54, %1, %cst_33 {dimension_numbers = #tpu.dot_dimension_numbers<[1], [0], [0], [1], [0, 0, 1, 1], [], []>} : vector<8x32xf32>, vector<32x128xf32>, vector<8x128xf32> -> vector<8x128xf32>
      %cst_34 = arith.constant dense<0.000000e+00> : vector<8x128xf32>
      %56 = tpu.matmul %arg16, %2, %cst_34 {dimension_numbers = #tpu.dot_dimension_numbers<[1], [0], [0], [1], [0, 0, 1, 1], [], []>} : vector<8x32xf32>, vector<32x128xf32>, vector<8x128xf32> -> vector<8x128xf32>
      %57 = arith.addf %55, %56 : vector<8x128xf32>
      %58 = arith.addf %57, %5 : vector<8x128xf32>
      %59 = arith.negf %58 : vector<8x128xf32>
      %60 = math.exp %59 : vector<8x128xf32>
      %cst_35 = arith.constant 1.000000e+00 : f32
      %61 = vector.broadcast %cst_35 : f32 to vector<8x128xf32>
      %62 = arith.addf %61, %60 : vector<8x128xf32>
      %63 = arith.divf %61, %62 : vector<8x128xf32>
      %64 = vector.extract_strided_slice %63 {offsets = [0, 0], sizes = [8, 32], strides = [1, 1]} : vector<8x128xf32> to vector<8x32xf32>
      %65 = vector.extract_strided_slice %63 {offsets = [0, 32], sizes = [8, 32], strides = [1, 1]} : vector<8x128xf32> to vector<8x32xf32>
      %66 = vector.extract_strided_slice %63 {offsets = [0, 64], sizes = [8, 32], strides = [1, 1]} : vector<8x128xf32> to vector<8x32xf32>
      %cst_36 = arith.constant 2.000000e+00 : f32
      %67 = vector.broadcast %cst_36 : f32 to vector<8x32xf32>
      %68 = arith.mulf %67, %66 : vector<8x32xf32>
      %cst_37 = arith.constant 1.000000e+00 : f32
      %69 = vector.broadcast %cst_37 : f32 to vector<8x32xf32>
      %70 = arith.subf %68, %69 : vector<8x32xf32>
      %71 = vector.extract_strided_slice %63 {offsets = [0, 96], sizes = [8, 32], strides = [1, 1]} : vector<8x128xf32> to vector<8x32xf32>
      %72 = arith.mulf %65, %arg17 : vector<8x32xf32>
      %73 = arith.mulf %64, %70 : vector<8x32xf32>
      %74 = arith.addf %72, %73 : vector<8x32xf32>
      %75 = math.tanh %74 : vector<8x32xf32>
      %76 = arith.mulf %71, %75 : vector<8x32xf32>
      %77 = arith.index_cast %32 : i32 to index
      %c0_38 = arith.constant 0 : index
      %78 = vector.load %arg11[%77, %c0_38] : memref<8192x32xf32, #tpu.memory_space<vmem>>, vector<8x32xf32>
      tpu.vector_store %arg11[%77, %c0_38], %76 {strides = array<i32>} : memref<8192x32xf32, #tpu.memory_space<vmem>>, vector<8x32xf32>,
      %c4_i32_39 = arith.constant 4 : i32
      %79 = arith.muli %c4_i32_39, %arg13 : i32
      %c1_i32_40 = arith.constant 1 : i32
      %80 = arith.addi %79, %c1_i32_40 : i32
      %c8_i32_41 = arith.constant 8 : i32
      %81 = arith.muli %80, %c8_i32_41 : i32
      %82 = tpu.assume_multiple %81, 8 : i32
      %83 = arith.index_cast %82 : i32 to index
      %c0_42 = arith.constant 0 : index
      %84 = vector.load %arg0[%83, %c0_42] : memref<8192x128xf32, #tpu.memory_space<vmem>>, vector<8x128xf32>
      %cst_43 = arith.constant dense<0.000000e+00> : vector<8x128xf32>
      %85 = tpu.matmul %54, %0, %cst_43 {dimension_numbers = #tpu.dot_dimension_numbers<[1], [0], [0], [1], [0, 0, 1, 1], [], []>} : vector<8x32xf32>, vector<32x128xf32>, vector<8x128xf32> -> vector<8x128xf32>
      %86 = arith.addf %84, %85 : vector<8x128xf32>
      %87 = arith.negf %86 : vector<8x128xf32>
      %88 = math.exp %87 : vector<8x128xf32>
      %cst_44 = arith.constant 1.000000e+00 : f32
      %89 = vector.broadcast %cst_44 : f32 to vector<8x128xf32>
      %90 = arith.addf %89, %88 : vector<8x128xf32>
      %91 = arith.divf %89, %90 : vector<8x128xf32>
      %92 = vector.extract_strided_slice %91 {offsets = [0, 0], sizes = [8, 32], strides = [1, 1]} : vector<8x128xf32> to vector<8x32xf32>
      %93 = vector.extract_strided_slice %91 {offsets = [0, 32], sizes = [8, 32], strides = [1, 1]} : vector<8x128xf32> to vector<8x32xf32>
      %94 = vector.extract_strided_slice %91 {offsets = [0, 64], sizes = [8, 32], strides = [1, 1]} : vector<8x128xf32> to vector<8x32xf32>
      %cst_45 = arith.constant 2.000000e+00 : f32
      %95 = vector.broadcast %cst_45 : f32 to vector<8x32xf32>
      %96 = arith.mulf %95, %94 : vector<8x32xf32>
      %cst_46 = arith.constant 1.000000e+00 : f32
      %97 = vector.broadcast %cst_46 : f32 to vector<8x32xf32>
      %98 = arith.subf %96, %97 : vector<8x32xf32>
      %99 = vector.extract_strided_slice %91 {offsets = [0, 96], sizes = [8, 32], strides = [1, 1]} : vector<8x128xf32> to vector<8x32xf32>
      %100 = arith.mulf %93, %52 : vector<8x32xf32>
      %101 = arith.mulf %92, %98 : vector<8x32xf32>
      %102 = arith.addf %100, %101 : vector<8x32xf32>
      %103 = math.tanh %102 : vector<8x32xf32>
      %104 = arith.mulf %99, %103 : vector<8x32xf32>
      %cst_47 = arith.constant dense<0.000000e+00> : vector<8x128xf32>
      %105 = tpu.matmul %104, %1, %cst_47 {dimension_numbers = #tpu.dot_dimension_numbers<[1], [0], [0], [1], [0, 0, 1, 1], [], []>} : vector<8x32xf32>, vector<32x128xf32>, vector<8x128xf32> -> vector<8x128xf32>
      %cst_48 = arith.constant dense<0.000000e+00> : vector<8x128xf32>
      %106 = tpu.matmul %76, %2, %cst_48 {dimension_numbers = #tpu.dot_dimension_numbers<[1], [0], [0], [1], [0, 0, 1, 1], [], []>} : vector<8x32xf32>, vector<32x128xf32>, vector<8x128xf32> -> vector<8x128xf32>
      %107 = arith.addf %105, %106 : vector<8x128xf32>
      %108 = arith.addf %107, %5 : vector<8x128xf32>
      %109 = arith.negf %108 : vector<8x128xf32>
      %110 = math.exp %109 : vector<8x128xf32>
      %cst_49 = arith.constant 1.000000e+00 : f32
      %111 = vector.broadcast %cst_49 : f32 to vector<8x128xf32>
      %112 = arith.addf %111, %110 : vector<8x128xf32>
      %113 = arith.divf %111, %112 : vector<8x128xf32>
      %114 = vector.extract_strided_slice %113 {offsets = [0, 0], sizes = [8, 32], strides = [1, 1]} : vector<8x128xf32> to vector<8x32xf32>
      %115 = vector.extract_strided_slice %113 {offsets = [0, 32], sizes = [8, 32], strides = [1, 1]} : vector<8x128xf32> to vector<8x32xf32>
      %116 = vector.extract_strided_slice %113 {offsets = [0, 64], sizes = [8, 32], strides = [1, 1]} : vector<8x128xf32> to vector<8x32xf32>
      %cst_50 = arith.constant 2.000000e+00 : f32
      %117 = vector.broadcast %cst_50 : f32 to vector<8x32xf32>
      %118 = arith.mulf %117, %116 : vector<8x32xf32>
      %cst_51 = arith.constant 1.000000e+00 : f32
      %119 = vector.broadcast %cst_51 : f32 to vector<8x32xf32>
      %120 = arith.subf %118, %119 : vector<8x32xf32>
      %121 = vector.extract_strided_slice %113 {offsets = [0, 96], sizes = [8, 32], strides = [1, 1]} : vector<8x128xf32> to vector<8x32xf32>
      %122 = arith.mulf %115, %74 : vector<8x32xf32>
      %123 = arith.mulf %114, %120 : vector<8x32xf32>
      %124 = arith.addf %122, %123 : vector<8x32xf32>
      %125 = math.tanh %124 : vector<8x32xf32>
      %126 = arith.mulf %121, %125 : vector<8x32xf32>
      %127 = arith.index_cast %82 : i32 to index
      %c0_52 = arith.constant 0 : index
      %128 = vector.load %arg11[%127, %c0_52] : memref<8192x32xf32, #tpu.memory_space<vmem>>, vector<8x32xf32>
      tpu.vector_store %arg11[%127, %c0_52], %126 {strides = array<i32>} : memref<8192x32xf32, #tpu.memory_space<vmem>>, vector<8x32xf32>,
      %c4_i32_53 = arith.constant 4 : i32
      %129 = arith.muli %c4_i32_53, %arg13 : i32
      %c2_i32 = arith.constant 2 : i32
      %130 = arith.addi %129, %c2_i32 : i32
      %c8_i32_54 = arith.constant 8 : i32
      %131 = arith.muli %130, %c8_i32_54 : i32
      %132 = tpu.assume_multiple %131, 8 : i32
      %133 = arith.index_cast %132 : i32 to index
      %c0_55 = arith.constant 0 : index
      %134 = vector.load %arg0[%133, %c0_55] : memref<8192x128xf32, #tpu.memory_space<vmem>>, vector<8x128xf32>
      %cst_56 = arith.constant dense<0.000000e+00> : vector<8x128xf32>
      %135 = tpu.matmul %104, %0, %cst_56 {dimension_numbers = #tpu.dot_dimension_numbers<[1], [0], [0], [1], [0, 0, 1, 1], [], []>} : vector<8x32xf32>, vector<32x128xf32>, vector<8x128xf32> -> vector<8x128xf32>
      %136 = arith.addf %134, %135 : vector<8x128xf32>
      %137 = arith.negf %136 : vector<8x128xf32>
      %138 = math.exp %137 : vector<8x128xf32>
      %cst_57 = arith.constant 1.000000e+00 : f32
      %139 = vector.broadcast %cst_57 : f32 to vector<8x128xf32>
      %140 = arith.addf %139, %138 : vector<8x128xf32>
      %141 = arith.divf %139, %140 : vector<8x128xf32>
      %142 = vector.extract_strided_slice %141 {offsets = [0, 0], sizes = [8, 32], strides = [1, 1]} : vector<8x128xf32> to vector<8x32xf32>
      %143 = vector.extract_strided_slice %141 {offsets = [0, 32], sizes = [8, 32], strides = [1, 1]} : vector<8x128xf32> to vector<8x32xf32>
      %144 = vector.extract_strided_slice %141 {offsets = [0, 64], sizes = [8, 32], strides = [1, 1]} : vector<8x128xf32> to vector<8x32xf32>
      %cst_58 = arith.constant 2.000000e+00 : f32
      %145 = vector.broadcast %cst_58 : f32 to vector<8x32xf32>
      %146 = arith.mulf %145, %144 : vector<8x32xf32>
      %cst_59 = arith.constant 1.000000e+00 : f32
      %147 = vector.broadcast %cst_59 : f32 to vector<8x32xf32>
      %148 = arith.subf %146, %147 : vector<8x32xf32>
      %149 = vector.extract_strided_slice %141 {offsets = [0, 96], sizes = [8, 32], strides = [1, 1]} : vector<8x128xf32> to vector<8x32xf32>
      %150 = arith.mulf %143, %102 : vector<8x32xf32>
      %151 = arith.mulf %142, %148 : vector<8x32xf32>
      %152 = arith.addf %150, %151 : vector<8x32xf32>
      %153 = math.tanh %152 : vector<8x32xf32>
      %154 = arith.mulf %149, %153 : vector<8x32xf32>
      %cst_60 = arith.constant dense<0.000000e+00> : vector<8x128xf32>
      %155 = tpu.matmul %154, %1, %cst_60 {dimension_numbers = #tpu.dot_dimension_numbers<[1], [0], [0], [1], [0, 0, 1, 1], [], []>} : vector<8x32xf32>, vector<32x128xf32>, vector<8x128xf32> -> vector<8x128xf32>
      %cst_61 = arith.constant dense<0.000000e+00> : vector<8x128xf32>
      %156 = tpu.matmul %126, %2, %cst_61 {dimension_numbers = #tpu.dot_dimension_numbers<[1], [0], [0], [1], [0, 0, 1, 1], [], []>} : vector<8x32xf32>, vector<32x128xf32>, vector<8x128xf32> -> vector<8x128xf32>
      %157 = arith.addf %155, %156 : vector<8x128xf32>
      %158 = arith.addf %157, %5 : vector<8x128xf32>
      %159 = arith.negf %158 : vector<8x128xf32>
      %160 = math.exp %159 : vector<8x128xf32>
      %cst_62 = arith.constant 1.000000e+00 : f32
      %161 = vector.broadcast %cst_62 : f32 to vector<8x128xf32>
      %162 = arith.addf %161, %160 : vector<8x128xf32>
      %163 = arith.divf %161, %162 : vector<8x128xf32>
      %164 = vector.extract_strided_slice %163 {offsets = [0, 0], sizes = [8, 32], strides = [1, 1]} : vector<8x128xf32> to vector<8x32xf32>
      %165 = vector.extract_strided_slice %163 {offsets = [0, 32], sizes = [8, 32], strides = [1, 1]} : vector<8x128xf32> to vector<8x32xf32>
      %166 = vector.extract_strided_slice %163 {offsets = [0, 64], sizes = [8, 32], strides = [1, 1]} : vector<8x128xf32> to vector<8x32xf32>
      %cst_63 = arith.constant 2.000000e+00 : f32
      %167 = vector.broadcast %cst_63 : f32 to vector<8x32xf32>
      %168 = arith.mulf %167, %166 : vector<8x32xf32>
      %cst_64 = arith.constant 1.000000e+00 : f32
      %169 = vector.broadcast %cst_64 : f32 to vector<8x32xf32>
      %170 = arith.subf %168, %169 : vector<8x32xf32>
      %171 = vector.extract_strided_slice %163 {offsets = [0, 96], sizes = [8, 32], strides = [1, 1]} : vector<8x128xf32> to vector<8x32xf32>
      %172 = arith.mulf %165, %124 : vector<8x32xf32>
      %173 = arith.mulf %164, %170 : vector<8x32xf32>
      %174 = arith.addf %172, %173 : vector<8x32xf32>
      %175 = math.tanh %174 : vector<8x32xf32>
      %176 = arith.mulf %171, %175 : vector<8x32xf32>
      %177 = arith.index_cast %132 : i32 to index
      %c0_65 = arith.constant 0 : index
      %178 = vector.load %arg11[%177, %c0_65] : memref<8192x32xf32, #tpu.memory_space<vmem>>, vector<8x32xf32>
      tpu.vector_store %arg11[%177, %c0_65], %176 {strides = array<i32>} : memref<8192x32xf32, #tpu.memory_space<vmem>>, vector<8x32xf32>,
      %c4_i32_66 = arith.constant 4 : i32
      %179 = arith.muli %c4_i32_66, %arg13 : i32
      %c3_i32 = arith.constant 3 : i32
      %180 = arith.addi %179, %c3_i32 : i32
      %c8_i32_67 = arith.constant 8 : i32
      %181 = arith.muli %180, %c8_i32_67 : i32
      %182 = tpu.assume_multiple %181, 8 : i32
      %183 = arith.index_cast %182 : i32 to index
      %c0_68 = arith.constant 0 : index
      %184 = vector.load %arg0[%183, %c0_68] : memref<8192x128xf32, #tpu.memory_space<vmem>>, vector<8x128xf32>
      %cst_69 = arith.constant dense<0.000000e+00> : vector<8x128xf32>
      %185 = tpu.matmul %154, %0, %cst_69 {dimension_numbers = #tpu.dot_dimension_numbers<[1], [0], [0], [1], [0, 0, 1, 1], [], []>} : vector<8x32xf32>, vector<32x128xf32>, vector<8x128xf32> -> vector<8x128xf32>
      %186 = arith.addf %184, %185 : vector<8x128xf32>
      %187 = arith.negf %186 : vector<8x128xf32>
      %188 = math.exp %187 : vector<8x128xf32>
      %cst_70 = arith.constant 1.000000e+00 : f32
      %189 = vector.broadcast %cst_70 : f32 to vector<8x128xf32>
      %190 = arith.addf %189, %188 : vector<8x128xf32>
      %191 = arith.divf %189, %190 : vector<8x128xf32>
      %192 = vector.extract_strided_slice %191 {offsets = [0, 0], sizes = [8, 32], strides = [1, 1]} : vector<8x128xf32> to vector<8x32xf32>
      %193 = vector.extract_strided_slice %191 {offsets = [0, 32], sizes = [8, 32], strides = [1, 1]} : vector<8x128xf32> to vector<8x32xf32>
      %194 = vector.extract_strided_slice %191 {offsets = [0, 64], sizes = [8, 32], strides = [1, 1]} : vector<8x128xf32> to vector<8x32xf32>
      %cst_71 = arith.constant 2.000000e+00 : f32
      %195 = vector.broadcast %cst_71 : f32 to vector<8x32xf32>
      %196 = arith.mulf %195, %194 : vector<8x32xf32>
      %cst_72 = arith.constant 1.000000e+00 : f32
      %197 = vector.broadcast %cst_72 : f32 to vector<8x32xf32>
      %198 = arith.subf %196, %197 : vector<8x32xf32>
      %199 = vector.extract_strided_slice %191 {offsets = [0, 96], sizes = [8, 32], strides = [1, 1]} : vector<8x128xf32> to vector<8x32xf32>
      %200 = arith.mulf %193, %152 : vector<8x32xf32>
      %201 = arith.mulf %192, %198 : vector<8x32xf32>
      %202 = arith.addf %200, %201 : vector<8x32xf32>
      %203 = math.tanh %202 : vector<8x32xf32>
      %204 = arith.mulf %199, %203 : vector<8x32xf32>
      %cst_73 = arith.constant dense<0.000000e+00> : vector<8x128xf32>
      %205 = tpu.matmul %204, %1, %cst_73 {dimension_numbers = #tpu.dot_dimension_numbers<[1], [0], [0], [1], [0, 0, 1, 1], [], []>} : vector<8x32xf32>, vector<32x128xf32>, vector<8x128xf32> -> vector<8x128xf32>
      %cst_74 = arith.constant dense<0.000000e+00> : vector<8x128xf32>
      %206 = tpu.matmul %176, %2, %cst_74 {dimension_numbers = #tpu.dot_dimension_numbers<[1], [0], [0], [1], [0, 0, 1, 1], [], []>} : vector<8x32xf32>, vector<32x128xf32>, vector<8x128xf32> -> vector<8x128xf32>
      %207 = arith.addf %205, %206 : vector<8x128xf32>
      %208 = arith.addf %207, %5 : vector<8x128xf32>
      %209 = arith.negf %208 : vector<8x128xf32>
      %210 = math.exp %209 : vector<8x128xf32>
      %cst_75 = arith.constant 1.000000e+00 : f32
      %211 = vector.broadcast %cst_75 : f32 to vector<8x128xf32>
      %212 = arith.addf %211, %210 : vector<8x128xf32>
      %213 = arith.divf %211, %212 : vector<8x128xf32>
      %214 = vector.extract_strided_slice %213 {offsets = [0, 0], sizes = [8, 32], strides = [1, 1]} : vector<8x128xf32> to vector<8x32xf32>
      %215 = vector.extract_strided_slice %213 {offsets = [0, 32], sizes = [8, 32], strides = [1, 1]} : vector<8x128xf32> to vector<8x32xf32>
      %216 = vector.extract_strided_slice %213 {offsets = [0, 64], sizes = [8, 32], strides = [1, 1]} : vector<8x128xf32> to vector<8x32xf32>
      %cst_76 = arith.constant 2.000000e+00 : f32
      %217 = vector.broadcast %cst_76 : f32 to vector<8x32xf32>
      %218 = arith.mulf %217, %216 : vector<8x32xf32>
      %cst_77 = arith.constant 1.000000e+00 : f32
      %219 = vector.broadcast %cst_77 : f32 to vector<8x32xf32>
      %220 = arith.subf %218, %219 : vector<8x32xf32>
      %221 = vector.extract_strided_slice %213 {offsets = [0, 96], sizes = [8, 32], strides = [1, 1]} : vector<8x128xf32> to vector<8x32xf32>
      %222 = arith.mulf %215, %174 : vector<8x32xf32>
      %223 = arith.mulf %214, %220 : vector<8x32xf32>
      %224 = arith.addf %222, %223 : vector<8x32xf32>
      %225 = math.tanh %224 : vector<8x32xf32>
      %226 = arith.mulf %221, %225 : vector<8x32xf32>
      %227 = arith.index_cast %182 : i32 to index
      %c0_78 = arith.constant 0 : index
      %228 = vector.load %arg11[%227, %c0_78] : memref<8192x32xf32, #tpu.memory_space<vmem>>, vector<8x32xf32>
      tpu.vector_store %arg11[%227, %c0_78], %226 {strides = array<i32>} : memref<8192x32xf32, #tpu.memory_space<vmem>>, vector<8x32xf32>,
      scf.yield %204, %202, %226, %224 : vector<8x32xf32>, vector<8x32xf32>, vector<8x32xf32>, vector<8x32xf32>
    }
    %c256_i32_7 = arith.constant 256 : i32
    %c0_8 = arith.constant 0 : index
    %c0_9 = arith.constant 0 : index
    %9 = vector.load %arg5[%c0_8, %c0_9] : memref<32x32xf32, #tpu.memory_space<vmem>>, vector<32x32xf32>
    %cst_10 = arith.constant dense<0.000000e+00> : vector<8x32xf32>
    %10 = tpu.matmul %8#2, %9, %cst_10 {dimension_numbers = #tpu.dot_dimension_numbers<[1], [0], [0], [1], [0, 0, 1, 1], [], []>} : vector<8x32xf32>, vector<32x32xf32>, vector<8x32xf32> -> vector<8x32xf32>
    %c0_11 = arith.constant 0 : index
    %c0_12 = arith.constant 0 : index
    %11 = vector.load %arg6[%c0_11, %c0_12] : memref<1x32xf32, #tpu.memory_space<vmem>>, vector<1x32xf32>
    %12 = vector.broadcast %11 : vector<1x32xf32> to vector<8x32xf32>
    %13 = arith.addf %10, %12 : vector<8x32xf32>
    %cst_13 = arith.constant 0.000000e+00 : f32
    %14 = vector.broadcast %cst_13 : f32 to vector<8x32xf32>
    %15 = arith.maximumf %13, %14 : vector<8x32xf32>
    %c0_14 = arith.constant 0 : index
    %c0_15 = arith.constant 0 : index
    %16 = vector.load %arg7[%c0_14, %c0_15] : memref<32x16xf32, #tpu.memory_space<vmem>>, vector<32x16xf32>
    %cst_16 = arith.constant dense<0.000000e+00> : vector<8x16xf32>
    %17 = tpu.matmul %15, %16, %cst_16 {dimension_numbers = #tpu.dot_dimension_numbers<[1], [0], [0], [1], [0, 0, 1, 1], [], []>} : vector<8x32xf32>, vector<32x16xf32>, vector<8x16xf32> -> vector<8x16xf32>
    %c0_17 = arith.constant 0 : index
    %c0_18 = arith.constant 0 : index
    %18 = vector.load %arg8[%c0_17, %c0_18] : memref<1x16xf32, #tpu.memory_space<vmem>>, vector<1x16xf32>
    %19 = vector.broadcast %18 : vector<1x16xf32> to vector<8x16xf32>
    %20 = arith.addf %17, %19 : vector<8x16xf32>
    %cst_19 = arith.constant 0.000000e+00 : f32
    %21 = vector.broadcast %cst_19 : f32 to vector<8x16xf32>
    %22 = arith.maximumf %20, %21 : vector<8x16xf32>
    %c0_20 = arith.constant 0 : index
    %c0_21 = arith.constant 0 : index
    %23 = vector.load %arg9[%c0_20, %c0_21] : memref<16x4xf32, #tpu.memory_space<vmem>>, vector<16x4xf32>
    %cst_22 = arith.constant dense<0.000000e+00> : vector<8x4xf32>
    %24 = tpu.matmul %22, %23, %cst_22 {dimension_numbers = #tpu.dot_dimension_numbers<[1], [0], [0], [1], [0, 0, 1, 1], [], []>} : vector<8x16xf32>, vector<16x4xf32>, vector<8x4xf32> -> vector<8x4xf32>
    %c0_23 = arith.constant 0 : index
    %c0_24 = arith.constant 0 : index
    %25 = vector.load %arg10[%c0_23, %c0_24] : memref<1x4xf32, #tpu.memory_space<vmem>>, vector<1x4xf32>
    %26 = vector.broadcast %25 : vector<1x4xf32> to vector<8x4xf32>
    %27 = arith.addf %24, %26 : vector<8x4xf32>
    %c0_25 = arith.constant 0 : index
    %c0_26 = arith.constant 0 : index
    %28 = vector.load %arg12[%c0_25, %c0_26] : memref<8x4xf32, #tpu.memory_space<vmem>>, vector<8x4xf32>
    tpu.vector_store %arg12[%c0_25, %c0_26], %27 {strides = array<i32>} : memref<8x4xf32, #tpu.memory_space<vmem>>, vector<8x4xf32>,
    return
  }
}

</mosaic_0001>

<llo_original>
// kernel: cm_daelstm_forward.2
$region0: #{cm_daelstm_forward.2}
  #allocation0 [shape = 'u32[]', space=smem, size = 0x4, offset = 0x4, fixed_abs, tag = 'smem constant byte address 0x4 - core index']
  #allocation1 [shape = 'u32[144,128]{1,0:T(1,128)}', space=vmem, size = 0x12000, scoped, tag = 'internal scratch']
  %s0 = inlined_call_operand.vmem [shape: f32[2,2048], index: 0, kind: input, shape index: {}]
  %s1 = inlined_call_operand.vmem [shape: f32[2048,80], index: 1, kind: input, shape index: {}]
  %s2 = inlined_call_operand.hbm [shape: f32[1,80], index: 2, kind: input, shape index: {}]
  %s3 = inlined_call_operand.vmem [shape: f32[80,2], index: 3, kind: input, shape index: {}]
  %s4 = inlined_call_operand.hbm [shape: f32[1,2], index: 4, kind: input, shape index: {}]
  %s5 = inlined_call_operand.vmem [shape: f32[2,1024], index: 5, kind: output, shape index: {}]
  %s6 = sld [smem:[#allocation0]]
  $region38: #{cm_daelstm_forward.2} parent=0
    _
  %s8 = ssub.s32 1, %s6
  %s9 = scalar_select 0, %s8, %s6
  $region1: #{cm_daelstm_forward.2} parent=0
    #allocation2 [shape = 'u8[512]{0}', space=vmem, size = 0x400, scoped, tag = 'input window, operand 2, single buffered']
    #allocation3 [shape = 's32[1]{0}', space=sflag, size = 0x4, scoped, tag = 'scoped memory for cm_daelstm_forward.2']
    #allocation4 [shape = 'u8[512]{0}', space=vmem, size = 0x400, scoped, tag = 'input window, operand 4, single buffered']
    #allocation5 [shape = 's32[1]{0}', space=sflag, size = 0x4, scoped, tag = 'scoped memory for cm_daelstm_forward.2']
    %10 = vsyncpa [#allocation3], 0
    %11 = vsyncpa [#allocation5], 0
    // Predicated region
    $region2: #{cm_daelstm_forward.2} parent=1 // pred_check
      _
    $region3: #{cm_daelstm_forward.2} parent=1 // pred_check_branch
      %13 = sbr.rel (0) target = $region5
    $region4: #{cm_daelstm_forward.2} parent=1 // pred_region
      _
    $region5: #{cm_daelstm_forward.2} parent=1 // pred_fallthru
      _
    // Predicated region
    $region6: #{cm_daelstm_forward.2} parent=1 // pred_check
      _
    $region7: #{cm_daelstm_forward.2} parent=1 // pred_check_branch
      %15 = sbr.rel (0) target = $region9
    $region8: #{cm_daelstm_forward.2} parent=1 // pred_region
      _
    $region9: #{cm_daelstm_forward.2} parent=1 // pred_fallthru
      _
    // Predicated region
    $region10: #{cm_daelstm_forward.2} parent=1 // pred_check
      _
    $region11: #{cm_daelstm_forward.2} parent=1 // pred_check_branch
      %17 = sbr.rel (0) target = $region13
    $region12: #{cm_daelstm_forward.2} parent=1 // pred_region
      %s19 = ssub.s32 16, 16
      %20 = vsyncadd [#allocation3], %s19
      %s22 = sshll.u32 [#allocation2], 4
      %s23 = int_to_ptr.vmem [resolvable:$true] %s22
      %25 = dma.hbm_to_vmem [thread:$0]  %s2, 16, %s23, [#allocation3]
    $region13: #{cm_daelstm_forward.2} parent=1 // pred_fallthru
      _
    // Predicated region
    $region14: #{cm_daelstm_forward.2} parent=1 // pred_check
      _
    $region15: #{cm_daelstm_forward.2} parent=1 // pred_check_branch
      %27 = sbr.rel (0) target = $region17
    $region16: #{cm_daelstm_forward.2} parent=1 // pred_region
      _
    $region17: #{cm_daelstm_forward.2} parent=1 // pred_fallthru
      _
    // Predicated region
    $region18: #{cm_daelstm_forward.2} parent=1 // pred_check
      _
    $region19: #{cm_daelstm_forward.2} parent=1 // pred_check_branch
      %29 = sbr.rel (0) target = $region21
    $region20: #{cm_daelstm_forward.2} parent=1 // pred_region
      %s31 = ssub.s32 16, 16
      %32 = vsyncadd [#allocation5], %s31
      %s34 = sshll.u32 [#allocation4], 4
      %s35 = int_to_ptr.vmem [resolvable:$true] %s34
      %37 = dma.hbm_to_vmem [thread:$0]  %s4, 16, %s35, [#allocation5]
    $region21: #{cm_daelstm_forward.2} parent=1 // pred_fallthru
      _
    // Predicated region
    $region22: #{cm_daelstm_forward.2} parent=1 // pred_check
      _
    $region23: #{cm_daelstm_forward.2} parent=1 // pred_check_branch
      %39 = sbr.rel (0) target = $region25
    $region24: #{cm_daelstm_forward.2} parent=1 // pred_region
      %40 = dma.done [#allocation3], 16
    $region25: #{cm_daelstm_forward.2} parent=1 // pred_fallthru
      _
    // Predicated region
    $region26: #{cm_daelstm_forward.2} parent=1 // pred_check
      _
    $region27: #{cm_daelstm_forward.2} parent=1 // pred_check_branch
      %42 = sbr.rel (0) target = $region29
    $region28: #{cm_daelstm_forward.2} parent=1 // pred_region
      %43 = dma.done [#allocation5], 16
    $region29: #{cm_daelstm_forward.2} parent=1 // pred_fallthru
      _
    %v44 = vld [vmem:[%s0] sm:$0xff]
    %v45 = vld [vmem:[%s0 + $0x8] sm:$0xff]
    %v46 = vld [vmem:[%s0 + $0x10] sm:$0xff]
    %v47 = vld [vmem:[%s0 + $0x18] sm:$0xff]
    %v48 = vld [vmem:[%s1] sm:$0xff]
    %v49 = vld [vmem:[%s1 + $0x8] sm:$0xff]
    %v50 = vld [vmem:[%s1 + $0x10] sm:$0xff]
    %v51 = vld [vmem:[%s1 + $0x18] sm:$0xff]
    %v52 = vld [vmem:[%s1 + $0x20] sm:$0xff]
    %v53 = vld [vmem:[%s1 + $0x28] sm:$0xff]
    %v54 = vld [vmem:[%s1 + $0x30] sm:$0xff]
    %v55 = vld [vmem:[%s1 + $0x38] sm:$0xff]
    %v56 = vld [vmem:[%s1 + $0x40] sm:$0xff]
    %v57 = vld [vmem:[%s1 + $0x48] sm:$0xff]
    %v58 = vld [vmem:[%s1 + $0x50] sm:$0xff]
    %v59 = vld [vmem:[%s1 + $0x58] sm:$0xff]
    %v60 = vld [vmem:[%s1 + $0x60] sm:$0xff]
    %v61 = vld [vmem:[%s1 + $0x68] sm:$0xff]
    %v62 = vld [vmem:[%s1 + $0x70] sm:$0xff]
    %v63 = vld [vmem:[%s1 + $0x78] sm:$0xff]
    %v64 = vld [vmem:[%s1 + $0x80] sm:$0xff]
    %v65 = vld [vmem:[%s1 + $0x88] sm:$0xff]
    %v66 = vld [vmem:[%s1 + $0x90] sm:$0xff]
    %v67 = vld [vmem:[%s1 + $0x98] sm:$0xff]
    %v68 = vld [vmem:[%s1 + $0xa0] sm:$0xff]
    %v69 = vld [vmem:[%s1 + $0xa8] sm:$0xff]
    %v70 = vld [vmem:[%s1 + $0xb0] sm:$0xff]
    %v71 = vld [vmem:[%s1 + $0xb8] sm:$0xff]
    %v72 = vld [vmem:[%s1 + $0xc0] sm:$0xff]
    %v73 = vld [vmem:[%s1 + $0xc8] sm:$0xff]
    %v74 = vld [vmem:[%s1 + $0xd0] sm:$0xff]
    %v75 = vld [vmem:[%s1 + $0xd8] sm:$0xff]
    %v76 = vld [vmem:[%s1 + $0xe0] sm:$0xff]
    %v77 = vld [vmem:[%s1 + $0xe8] sm:$0xff]
    %v78 = vld [vmem:[%s1 + $0xf0] sm:$0xff]
    %v79 = vld [vmem:[%s1 + $0xf8] sm:$0xff]
    %v80 = vld [vmem:[%s1 + $0x100] sm:$0xff]
    %v81 = vld [vmem:[%s1 + $0x108] sm:$0xff]
    %v82 = vld [vmem:[%s1 + $0x110] sm:$0xff]
    %v83 = vld [vmem:[%s1 + $0x118] sm:$0xff]
    %v84 = vld [vmem:[%s1 + $0x120] sm:$0xff]
    %v85 = vld [vmem:[%s1 + $0x128] sm:$0xff]
    %v86 = vld [vmem:[%s1 + $0x130] sm:$0xff]
    %v87 = vld [vmem:[%s1 + $0x138] sm:$0xff]
    %v88 = vld [vmem:[%s1 + $0x140] sm:$0xff]
    %v89 = vld [vmem:[%s1 + $0x148] sm:$0xff]
    %v90 = vld [vmem:[%s1 + $0x150] sm:$0xff]
    %v91 = vld [vmem:[%s1 + $0x158] sm:$0xff]
    %v92 = vld [vmem:[%s1 + $0x160] sm:$0xff]
    %v93 = vld [vmem:[%s1 + $0x168] sm:$0xff]
    %v94 = vld [vmem:[%s1 + $0x170] sm:$0xff]
    %v95 = vld [vmem:[%s1 + $0x178] sm:$0xff]
    %v96 = vld [vmem:[%s1 + $0x180] sm:$0xff]
    %v97 = vld [vmem:[%s1 + $0x188] sm:$0xff]
    %v98 = vld [vmem:[%s1 + $0x190] sm:$0xff]
    %v99 = vld [vmem:[%s1 + $0x198] sm:$0xff]
    %v100 = vld [vmem:[%s1 + $0x1a0] sm:$0xff]
    %v101 = vld [vmem:[%s1 + $0x1a8] sm:$0xff]
    %v102 = vld [vmem:[%s1 + $0x1b0] sm:$0xff]
    %v103 = vld [vmem:[%s1 + $0x1b8] sm:$0xff]
    %v104 = vld [vmem:[%s1 + $0x1c0] sm:$0xff]
    %v105 = vld [vmem:[%s1 + $0x1c8] sm:$0xff]
    %v106 = vld [vmem:[%s1 + $0x1d0] sm:$0xff]
    %v107 = vld [vmem:[%s1 + $0x1d8] sm:$0xff]
    %v108 = vld [vmem:[%s1 + $0x1e0] sm:$0xff]
    %v109 = vld [vmem:[%s1 + $0x1e8] sm:$0xff]
    %v110 = vld [vmem:[%s1 + $0x1f0] sm:$0xff]
    %v111 = vld [vmem:[%s1 + $0x1f8] sm:$0xff]
    %v112 = vld [vmem:[%s1 + $0x200] sm:$0xff]
    %v113 = vld [vmem:[%s1 + $0x208] sm:$0xff]
    %v114 = vld [vmem:[%s1 + $0x210] sm:$0xff]
    %v115 = vld [vmem:[%s1 + $0x218] sm:$0xff]
    %v116 = vld [vmem:[%s1 + $0x220] sm:$0xff]
    %v117 = vld [vmem:[%s1 + $0x228] sm:$0xff]
    %v118 = vld [vmem:[%s1 + $0x230] sm:$0xff]
    %v119 = vld [vmem:[%s1 + $0x238] sm:$0xff]
    %v120 = vld [vmem:[%s1 + $0x240] sm:$0xff]
    %v121 = vld [vmem:[%s1 + $0x248] sm:$0xff]
    %v122 = vld [vmem:[%s1 + $0x250] sm:$0xff]
    %v123 = vld [vmem:[%s1 + $0x258] sm:$0xff]
    %v124 = vld [vmem:[%s1 + $0x260] sm:$0xff]
    %v125 = vld [vmem:[%s1 + $0x268] sm:$0xff]
    %v126 = vld [vmem:[%s1 + $0x270] sm:$0xff]
    %v127 = vld [vmem:[%s1 + $0x278] sm:$0xff]
    %v128 = vld [vmem:[%s1 + $0x280] sm:$0xff]
    %v129 = vld [vmem:[%s1 + $0x288] sm:$0xff]
    %v130 = vld [vmem:[%s1 + $0x290] sm:$0xff]
    %v131 = vld [vmem:[%s1 + $0x298] sm:$0xff]
    %v132 = vld [vmem:[%s1 + $0x2a0] sm:$0xff]
    %v133 = vld [vmem:[%s1 + $0x2a8] sm:$0xff]
    %v134 = vld [vmem:[%s1 + $0x2b0] sm:$0xff]
    %v135 = vld [vmem:[%s1 + $0x2b8] sm:$0xff]
    %v136 = vld [vmem:[%s1 + $0x2c0] sm:$0xff]
    %v137 = vld [vmem:[%s1 + $0x2c8] sm:$0xff]
    %v138 = vld [vmem:[%s1 + $0x2d0] sm:$0xff]
    %v139 = vld [vmem:[%s1 + $0x2d8] sm:$0xff]
    %v140 = vld [vmem:[%s1 + $0x2e0] sm:$0xff]
    %v141 = vld [vmem:[%s1 + $0x2e8] sm:$0xff]
    %v142 = vld [vmem:[%s1 + $0x2f0] sm:$0xff]
    %v143 = vld [vmem:[%s1 + $0x2f8] sm:$0xff]
    %v144 = vld [vmem:[%s1 + $0x300] sm:$0xff]
    %v145 = vld [vmem:[%s1 + $0x308] sm:$0xff]
    %v146 = vld [vmem:[%s1 + $0x310] sm:$0xff]
    %v147 = vld [vmem:[%s1 + $0x318] sm:$0xff]
    %v148 = vld [vmem:[%s1 + $0x320] sm:$0xff]
    %v149 = vld [vmem:[%s1 + $0x328] sm:$0xff]
    %v150 = vld [vmem:[%s1 + $0x330] sm:$0xff]
    %v151 = vld [vmem:[%s1 + $0x338] sm:$0xff]
    %v152 = vld [vmem:[%s1 + $0x340] sm:$0xff]
    %v153 = vld [vmem:[%s1 + $0x348] sm:$0xff]
    %v154 = vld [vmem:[%s1 + $0x350] sm:$0xff]
    %v155 = vld [vmem:[%s1 + $0x358] sm:$0xff]
    %v156 = vld [vmem:[%s1 + $0x360] sm:$0xff]
    %v157 = vld [vmem:[%s1 + $0x368] sm:$0xff]
    %v158 = vld [vmem:[%s1 + $0x370] sm:$0xff]
    %v159 = vld [vmem:[%s1 + $0x378] sm:$0xff]
    %v160 = vld [vmem:[%s1 + $0x380] sm:$0xff]
    %v161 = vld [vmem:[%s1 + $0x388] sm:$0xff]
    %v162 = vld [vmem:[%s1 + $0x390] sm:$0xff]
    %v163 = vld [vmem:[%s1 + $0x398] sm:$0xff]
    %v164 = vld [vmem:[%s1 + $0x3a0] sm:$0xff]
    %v165 = vld [vmem:[%s1 + $0x3a8] sm:$0xff]
    %v166 = vld [vmem:[%s1 + $0x3b0] sm:$0xff]
    %v167 = vld [vmem:[%s1 + $0x3b8] sm:$0xff]
    %v168 = vld [vmem:[%s1 + $0x3c0] sm:$0xff]
    %v169 = vld [vmem:[%s1 + $0x3c8] sm:$0xff]
    %v170 = vld [vmem:[%s1 + $0x3d0] sm:$0xff]
    %v171 = vld [vmem:[%s1 + $0x3d8] sm:$0xff]
    %v172 = vld [vmem:[%s1 + $0x3e0] sm:$0xff]
    %v173 = vld [vmem:[%s1 + $0x3e8] sm:$0xff]
    %v174 = vld [vmem:[%s1 + $0x3f0] sm:$0xff]
    %v175 = vld [vmem:[%s1 + $0x3f8] sm:$0xff]
    %v176 = vld [vmem:[%s1 + $0x400] sm:$0xff]
    %v177 = vld [vmem:[%s1 + $0x408] sm:$0xff]
    %v178 = vld [vmem:[%s1 + $0x410] sm:$0xff]
    %v179 = vld [vmem:[%s1 + $0x418] sm:$0xff]
    %v180 = vld [vmem:[%s1 + $0x420] sm:$0xff]
    %v181 = vld [vmem:[%s1 + $0x428] sm:$0xff]
    %v182 = vld [vmem:[%s1 + $0x430] sm:$0xff]
    %v183 = vld [vmem:[%s1 + $0x438] sm:$0xff]
    %v184 = vld [vmem:[%s1 + $0x440] sm:$0xff]
    %v185 = vld [vmem:[%s1 + $0x448] sm:$0xff]
    %v186 = vld [vmem:[%s1 + $0x450] sm:$0xff]
    %v187 = vld [vmem:[%s1 + $0x458] sm:$0xff]
    %v188 = vld [vmem:[%s1 + $0x460] sm:$0xff]
    %v189 = vld [vmem:[%s1 + $0x468] sm:$0xff]
    %v190 = vld [vmem:[%s1 + $0x470] sm:$0xff]
    %v191 = vld [vmem:[%s1 + $0x478] sm:$0xff]
    %v192 = vld [vmem:[%s1 + $0x480] sm:$0xff]
    %v193 = vld [vmem:[%s1 + $0x488] sm:$0xff]
    %v194 = vld [vmem:[%s1 + $0x490] sm:$0xff]
    %v195 = vld [vmem:[%s1 + $0x498] sm:$0xff]
    %v196 = vld [vmem:[%s1 + $0x4a0] sm:$0xff]
    %v197 = vld [vmem:[%s1 + $0x4a8] sm:$0xff]
    %v198 = vld [vmem:[%s1 + $0x4b0] sm:$0xff]
    %v199 = vld [vmem:[%s1 + $0x4b8] sm:$0xff]
    %v200 = vld [vmem:[%s1 + $0x4c0] sm:$0xff]
    %v201 = vld [vmem:[%s1 + $0x4c8] sm:$0xff]
    %v202 = vld [vmem:[%s1 + $0x4d0] sm:$0xff]
    %v203 = vld [vmem:[%s1 + $0x4d8] sm:$0xff]
    %v204 = vld [vmem:[%s1 + $0x4e0] sm:$0xff]
    %v205 = vld [vmem:[%s1 + $0x4e8] sm:$0xff]
    %v206 = vld [vmem:[%s1 + $0x4f0] sm:$0xff]
    %v207 = vld [vmem:[%s1 + $0x4f8] sm:$0xff]
    %v208 = vld [vmem:[%s1 + $0x500] sm:$0xff]
    %v209 = vld [vmem:[%s1 + $0x508] sm:$0xff]
    %v210 = vld [vmem:[%s1 + $0x510] sm:$0xff]
    %v211 = vld [vmem:[%s1 + $0x518] sm:$0xff]
    %v212 = vld [vmem:[%s1 + $0x520] sm:$0xff]
    %v213 = vld [vmem:[%s1 + $0x528] sm:$0xff]
    %v214 = vld [vmem:[%s1 + $0x530] sm:$0xff]
    %v215 = vld [vmem:[%s1 + $0x538] sm:$0xff]
    %v216 = vld [vmem:[%s1 + $0x540] sm:$0xff]
    %v217 = vld [vmem:[%s1 + $0x548] sm:$0xff]
    %v218 = vld [vmem:[%s1 + $0x550] sm:$0xff]
    %v219 = vld [vmem:[%s1 + $0x558] sm:$0xff]
    %v220 = vld [vmem:[%s1 + $0x560] sm:$0xff]
    %v221 = vld [vmem:[%s1 + $0x568] sm:$0xff]
    %v222 = vld [vmem:[%s1 + $0x570] sm:$0xff]
    %v223 = vld [vmem:[%s1 + $0x578] sm:$0xff]
    %v224 = vld [vmem:[%s1 + $0x580] sm:$0xff]
    %v225 = vld [vmem:[%s1 + $0x588] sm:$0xff]
    %v226 = vld [vmem:[%s1 + $0x590] sm:$0xff]
    %v227 = vld [vmem:[%s1 + $0x598] sm:$0xff]
    %v228 = vld [vmem:[%s1 + $0x5a0] sm:$0xff]
    %v229 = vld [vmem:[%s1 + $0x5a8] sm:$0xff]
    %v230 = vld [vmem:[%s1 + $0x5b0] sm:$0xff]
    %v231 = vld [vmem:[%s1 + $0x5b8] sm:$0xff]
    %v232 = vld [vmem:[%s1 + $0x5c0] sm:$0xff]
    %v233 = vld [vmem:[%s1 + $0x5c8] sm:$0xff]
    %v234 = vld [vmem:[%s1 + $0x5d0] sm:$0xff]
    %v235 = vld [vmem:[%s1 + $0x5d8] sm:$0xff]
    %v236 = vld [vmem:[%s1 + $0x5e0] sm:$0xff]
    %v237 = vld [vmem:[%s1 + $0x5e8] sm:$0xff]
    %v238 = vld [vmem:[%s1 + $0x5f0] sm:$0xff]
    %v239 = vld [vmem:[%s1 + $0x5f8] sm:$0xff]
    %v240 = vld [vmem:[%s1 + $0x600] sm:$0xff]
    %v241 = vld [vmem:[%s1 + $0x608] sm:$0xff]
    %v242 = vld [vmem:[%s1 + $0x610] sm:$0xff]
    %v243 = vld [vmem:[%s1 + $0x618] sm:$0xff]
    %v244 = vld [vmem:[%s1 + $0x620] sm:$0xff]
    %v245 = vld [vmem:[%s1 + $0x628] sm:$0xff]
    %v246 = vld [vmem:[%s1 + $0x630] sm:$0xff]
    %v247 = vld [vmem:[%s1 + $0x638] sm:$0xff]
    %v248 = vld [vmem:[%s1 + $0x640] sm:$0xff]
    %v249 = vld [vmem:[%s1 + $0x648] sm:$0xff]
    %v250 = vld [vmem:[%s1 + $0x650] sm:$0xff]
    %v251 = vld [vmem:[%s1 + $0x658] sm:$0xff]
    %v252 = vld [vmem:[%s1 + $0x660] sm:$0xff]
    %v253 = vld [vmem:[%s1 + $0x668] sm:$0xff]
    %v254 = vld [vmem:[%s1 + $0x670] sm:$0xff]
    %v255 = vld [vmem:[%s1 + $0x678] sm:$0xff]
    %v256 = vld [vmem:[%s1 + $0x680] sm:$0xff]
    %v257 = vld [vmem:[%s1 + $0x688] sm:$0xff]
    %v258 = vld [vmem:[%s1 + $0x690] sm:$0xff]
    %v259 = vld [vmem:[%s1 + $0x698] sm:$0xff]
    %v260 = vld [vmem:[%s1 + $0x6a0] sm:$0xff]
    %v261 = vld [vmem:[%s1 + $0x6a8] sm:$0xff]
    %v262 = vld [vmem:[%s1 + $0x6b0] sm:$0xff]
    %v263 = vld [vmem:[%s1 + $0x6b8] sm:$0xff]
    %v264 = vld [vmem:[%s1 + $0x6c0] sm:$0xff]
    %v265 = vld [vmem:[%s1 + $0x6c8] sm:$0xff]
    %v266 = vld [vmem:[%s1 + $0x6d0] sm:$0xff]
    %v267 = vld [vmem:[%s1 + $0x6d8] sm:$0xff]
    %v268 = vld [vmem:[%s1 + $0x6e0] sm:$0xff]
    %v269 = vld [vmem:[%s1 + $0x6e8] sm:$0xff]
    %v270 = vld [vmem:[%s1 + $0x6f0] sm:$0xff]
    %v271 = vld [vmem:[%s1 + $0x6f8] sm:$0xff]
    %v272 = vld [vmem:[%s1 + $0x700] sm:$0xff]
    %v273 = vld [vmem:[%s1 + $0x708] sm:$0xff]
    %v274 = vld [vmem:[%s1 + $0x710] sm:$0xff]
    %v275 = vld [vmem:[%s1 + $0x718] sm:$0xff]
    %v276 = vld [vmem:[%s1 + $0x720] sm:$0xff]
    %v277 = vld [vmem:[%s1 + $0x728] sm:$0xff]
    %v278 = vld [vmem:[%s1 + $0x730] sm:$0xff]
    %v279 = vld [vmem:[%s1 + $0x738] sm:$0xff]
    %v280 = vld [vmem:[%s1 + $0x740] sm:$0xff]
    %v281 = vld [vmem:[%s1 + $0x748] sm:$0xff]
    %v282 = vld [vmem:[%s1 + $0x750] sm:$0xff]
    %v283 = vld [vmem:[%s1 + $0x758] sm:$0xff]
    %v284 = vld [vmem:[%s1 + $0x760] sm:$0xff]
    %v285 = vld [vmem:[%s1 + $0x768] sm:$0xff]
    %v286 = vld [vmem:[%s1 + $0x770] sm:$0xff]
    %v287 = vld [vmem:[%s1 + $0x778] sm:$0xff]
    %v288 = vld [vmem:[%s1 + $0x780] sm:$0xff]
    %v289 = vld [vmem:[%s1 + $0x788] sm:$0xff]
    %v290 = vld [vmem:[%s1 + $0x790] sm:$0xff]
    %v291 = vld [vmem:[%s1 + $0x798] sm:$0xff]
    %v292 = vld [vmem:[%s1 + $0x7a0] sm:$0xff]
    %v293 = vld [vmem:[%s1 + $0x7a8] sm:$0xff]
    %v294 = vld [vmem:[%s1 + $0x7b0] sm:$0xff]
    %v295 = vld [vmem:[%s1 + $0x7b8] sm:$0xff]
    %v296 = vld [vmem:[%s1 + $0x7c0] sm:$0xff]
    %v297 = vld [vmem:[%s1 + $0x7c8] sm:$0xff]
    %v298 = vld [vmem:[%s1 + $0x7d0] sm:$0xff]
    %v299 = vld [vmem:[%s1 + $0x7d8] sm:$0xff]
    %v300 = vld [vmem:[%s1 + $0x7e0] sm:$0xff]
    %v301 = vld [vmem:[%s1 + $0x7e8] sm:$0xff]
    %v302 = vld [vmem:[%s1 + $0x7f0] sm:$0xff]
    %v303 = vld [vmem:[%s1 + $0x7f8] sm:$0xff]
    %v304 = vld [vmem:[#allocation2] sm:$0x1]
    %v306 = vlaneseq
    %v307 = vshrl.u32 %v306, 7
    %v308 = vsub.s32 0, %v307
    %v309 = vrot.slane %v304, %v308
    %v315 = vcombine.high %v44, %v44
    %v317 = vunpack.c.l.s4 1983009808
    %v318 = vunpack.c.0.s8 %v317
    %v319 = vlaneseq
    %v320 = vshrl.u32 %v319, 7
    %v321 = vsub.s32 %v318, %v320
    %v322 = vrot.slane %v44, %v321
    %v324 = vunpack.c.l.s4 1983009808
    %v325 = vunpack.c.0.s8 %v324
    %v326 = vlaneseq
    %v327 = vshrl.u32 %v326, 7
    %v328 = vsub.s32 %v325, %v327
    %v329 = vrot.slane %v315, %v328
    %v330 = vcombine.high %v322, %v322
    %v331 = vcombine.high %v329, %v329
    %v332 = vcombine.high %v45, %v45
    %v334 = vunpack.c.l.s4 1983009808
    %v335 = vunpack.c.0.s8 %v334
    %v336 = vlaneseq
    %v337 = vshrl.u32 %v336, 7
    %v338 = vsub.s32 %v335, %v337
    %v339 = vrot.slane %v45, %v338
    %v341 = vunpack.c.l.s4 1983009808
    %v342 = vunpack.c.0.s8 %v341
    %v343 = vlaneseq
    %v344 = vshrl.u32 %v343, 7
    %v345 = vsub.s32 %v342, %v344
    %v346 = vrot.slane %v332, %v345
    %v347 = vcombine.high %v339, %v339
    %v348 = vcombine.high %v346, %v346
    %v349 = vcombine.high %v46, %v46
    %v351 = vunpack.c.l.s4 1983009808
    %v352 = vunpack.c.0.s8 %v351
    %v353 = vlaneseq
    %v354 = vshrl.u32 %v353, 7
    %v355 = vsub.s32 %v352, %v354
    %v356 = vrot.slane %v46, %v355
    %v358 = vunpack.c.l.s4 1983009808
    %v359 = vunpack.c.0.s8 %v358
    %v360 = vlaneseq
    %v361 = vshrl.u32 %v360, 7
    %v362 = vsub.s32 %v359, %v361
    %v363 = vrot.slane %v349, %v362
    %v364 = vcombine.high %v356, %v356
    %v365 = vcombine.high %v363, %v363
    %v366 = vcombine.high %v47, %v47
    %v368 = vunpack.c.l.s4 1983009808
    %v369 = vunpack.c.0.s8 %v368
    %v370 = vlaneseq
    %v371 = vshrl.u32 %v370, 7
    %v372 = vsub.s32 %v369, %v371
    %v373 = vrot.slane %v47, %v372
    %v375 = vunpack.c.l.s4 1983009808
    %v376 = vunpack.c.0.s8 %v375
    %v377 = vlaneseq
    %v378 = vshrl.u32 %v377, 7
    %v379 = vsub.s32 %v376, %v378
    %v380 = vrot.slane %v366, %v379
    %v381 = vcombine.high %v373, %v373
    %v382 = vcombine.high %v380, %v380
    %399 = vmatprep.subr.mxu0 0.0
    %400 = vmatpush1.msra.mxu0 %v48
    %401 = vmatprep.subr.mxu0 0.0
    %402 = vmatpush1.msra.mxu0 %v49
    %403 = vmatprep.subr.mxu0 0.0
    %404 = vmatpush1.msra.mxu0 %v50
    %405 = vmatprep.subr.mxu0 0.0
    %406 = vmatpush1.msra.mxu0 %v51
    %407 = vmatprep.subr.mxu0 0.0
    %408 = vmatpush1.msra.mxu0 %v52
    %409 = vmatprep.subr.mxu0 0.0
    %410 = vmatpush1.msra.mxu0 %v53
    %411 = vmatprep.subr.mxu0 0.0
    %412 = vmatpush1.msra.mxu0 %v54
    %413 = vmatprep.subr.mxu0 0.0
    %414 = vmatpush1.msra.mxu0 %v55
    %415 = vmatprep.subr.mxu0 0.0
    %416 = vmatpush1.msra.mxu0 %v56
    %417 = vmatprep.subr.mxu0 0.0
    %418 = vmatpush1.msra.mxu0 %v57
    %419 = vmatprep.subr.mxu0 0.0
    %420 = vmatpush1.msra.mxu0 %v58
    %421 = vmatprep.subr.mxu0 0.0
    %422 = vmatpush1.msra.mxu0 %v59
    %423 = vmatprep.subr.mxu0 0.0
    %424 = vmatpush1.msra.mxu0 %v60
    %425 = vmatprep.subr.mxu0 0.0
    %426 = vmatpush1.msra.mxu0 %v61
    %427 = vmatprep.subr.mxu0 0.0
    %428 = vmatpush1.msra.mxu0 %v62
    %429 = vmatprep.subr.mxu0 0.0
    %430 = vmatpush1.msra.mxu0 %v63
    %431 = vmatprep.subr.mxu0 0.0
    %432 = vmatpush1.msra.mxu0 %v64
    %433 = vmatprep.subr.mxu0 0.0
    %434 = vmatpush1.msra.mxu0 %v65
    %435 = vmatprep.subr.mxu0 0.0
    %436 = vmatpush1.msra.mxu0 %v66
    %437 = vmatprep.subr.mxu0 0.0
    %438 = vmatpush1.msra.mxu0 %v67
    %439 = vmatprep.subr.mxu0 0.0
    %440 = vmatpush1.msra.mxu0 %v68
    %441 = vmatprep.subr.mxu0 0.0
    %442 = vmatpush1.msra.mxu0 %v69
    %443 = vmatprep.subr.mxu0 0.0
    %444 = vmatpush1.msra.mxu0 %v70
    %445 = vmatprep.subr.mxu0 0.0
    %446 = vmatpush1.msra.mxu0 %v71
    %447 = vmatprep.subr.mxu0 0.0
    %448 = vmatpush1.msra.mxu0 %v72
    %449 = vmatprep.subr.mxu0 0.0
    %450 = vmatpush1.msra.mxu0 %v73
    %451 = vmatprep.subr.mxu0 0.0
    %452 = vmatpush1.msra.mxu0 %v74
    %453 = vmatprep.subr.mxu0 0.0
    %454 = vmatpush1.msra.mxu0 %v75
    %455 = vmatprep.subr.mxu0 0.0
    %456 = vmatpush1.msra.mxu0 %v76
    %457 = vmatprep.subr.mxu0 0.0
    %458 = vmatpush1.msra.mxu0 %v77
    %459 = vmatprep.subr.mxu0 0.0
    %460 = vmatpush1.msra.mxu0 %v78
    %461 = vmatprep.subr.mxu0 0.0
    %462 = vmatpush1.msra.mxu0 %v79
    %463 = vmatprep.mubr.f32.mxu0 %v330
    %464 = vmatmul.mubr.f32.gmra.mrb[0].mxu0 %v322
    %v465 = vpop.f32.mrb[0].mxu0
    %v466 = vadd.f32 %v309, %v465
    %v467 = vpop.f32.mrb[0].mxu0
    %468 = vdwg.mxu0
    %469 = vmatprep.subr.mxu0 0.0
    %470 = vmatpush1.msra.mxu0 %v80
    %471 = vmatprep.subr.mxu0 0.0
    %472 = vmatpush1.msra.mxu0 %v81
    %473 = vmatprep.subr.mxu0 0.0
    %474 = vmatpush1.msra.mxu0 %v82
    %475 = vmatprep.subr.mxu0 0.0
    %476 = vmatpush1.msra.mxu0 %v83
    %477 = vmatprep.subr.mxu0 0.0
    %478 = vmatpush1.msra.mxu0 %v84
    %479 = vmatprep.subr.mxu0 0.0
    %480 = vmatpush1.msra.mxu0 %v85
    %481 = vmatprep.subr.mxu0 0.0
    %482 = vmatpush1.msra.mxu0 %v86
    %483 = vmatprep.subr.mxu0 0.0
    %484 = vmatpush1.msra.mxu0 %v87
    %485 = vmatprep.subr.mxu0 0.0
    %486 = vmatpush1.msra.mxu0 %v88
    %487 = vmatprep.subr.mxu0 0.0
    %488 = vmatpush1.msra.mxu0 %v89
    %489 = vmatprep.subr.mxu0 0.0
    %490 = vmatpush1.msra.mxu0 %v90
    %491 = vmatprep.subr.mxu0 0.0
    %492 = vmatpush1.msra.mxu0 %v91
    %493 = vmatprep.subr.mxu0 0.0
    %494 = vmatpush1.msra.mxu0 %v92
    %495 = vmatprep.subr.mxu0 0.0
    %496 = vmatpush1.msra.mxu0 %v93
    %497 = vmatprep.subr.mxu0 0.0
    %498 = vmatpush1.msra.mxu0 %v94
    %499 = vmatprep.subr.mxu0 0.0
    %500 = vmatpush1.msra.mxu0 %v95
    %501 = vmatprep.subr.mxu0 0.0
    %502 = vmatpush1.msra.mxu0 %v96
    %503 = vmatprep.subr.mxu0 0.0
    %504 = vmatpush1.msra.mxu0 %v97
    %505 = vmatprep.subr.mxu0 0.0
    %506 = vmatpush1.msra.mxu0 %v98
    %507 = vmatprep.subr.mxu0 0.0
    %508 = vmatpush1.msra.mxu0 %v99
    %509 = vmatprep.subr.mxu0 0.0
    %510 = vmatpush1.msra.mxu0 %v100
    %511 = vmatprep.subr.mxu0 0.0
    %512 = vmatpush1.msra.mxu0 %v101
    %513 = vmatprep.subr.mxu0 0.0
    %514 = vmatpush1.msra.mxu0 %v102
    %515 = vmatprep.subr.mxu0 0.0
    %516 = vmatpush1.msra.mxu0 %v103
    %517 = vmatprep.subr.mxu0 0.0
    %518 = vmatpush1.msra.mxu0 %v104
    %519 = vmatprep.subr.mxu0 0.0
    %520 = vmatpush1.msra.mxu0 %v105
    %521 = vmatprep.subr.mxu0 0.0
    %522 = vmatpush1.msra.mxu0 %v106
    %523 = vmatprep.subr.mxu0 0.0
    %524 = vmatpush1.msra.mxu0 %v107
    %525 = vmatprep.subr.mxu0 0.0
    %526 = vmatpush1.msra.mxu0 %v108
    %527 = vmatprep.subr.mxu0 0.0
    %528 = vmatpush1.msra.mxu0 %v109
    %529 = vmatprep.subr.mxu0 0.0
    %530 = vmatpush1.msra.mxu0 %v110
    %531 = vmatprep.subr.mxu0 0.0
    %532 = vmatpush1.msra.mxu0 %v111
    %533 = vmatprep.mubr.f32.mxu0 %v331
    %534 = vmatmul.mubr.f32.gmra.mrb[0].mxu0 %v329
    %v535 = vpop.f32.mrb[0].mxu0
    %v536 = vadd.f32 %v466, %v535
    %v537 = vpop.f32.mrb[0].mxu0
    %538 = vdwg.mxu0
    %539 = vmatprep.subr.mxu0 0.0
    %540 = vmatpush1.msra.mxu0 %v112
    %541 = vmatprep.subr.mxu0 0.0
    %542 = vmatpush1.msra.mxu0 %v113
    %543 = vmatprep.subr.mxu0 0.0
    %544 = vmatpush1.msra.mxu0 %v114
    %545 = vmatprep.subr.mxu0 0.0
    %546 = vmatpush1.msra.mxu0 %v115
    %547 = vmatprep.subr.mxu0 0.0
    %548 = vmatpush1.msra.mxu0 %v116
    %549 = vmatprep.subr.mxu0 0.0
    %550 = vmatpush1.msra.mxu0 %v117
    %551 = vmatprep.subr.mxu0 0.0
    %552 = vmatpush1.msra.mxu0 %v118
    %553 = vmatprep.subr.mxu0 0.0
    %554 = vmatpush1.msra.mxu0 %v119
    %555 = vmatprep.subr.mxu0 0.0
    %556 = vmatpush1.msra.mxu0 %v120
    %557 = vmatprep.subr.mxu0 0.0
    %558 = vmatpush1.msra.mxu0 %v121
    %559 = vmatprep.subr.mxu0 0.0
    %560 = vmatpush1.msra.mxu0 %v122
    %561 = vmatprep.subr.mxu0 0.0
    %562 = vmatpush1.msra.mxu0 %v123
    %563 = vmatprep.subr.mxu0 0.0
    %564 = vmatpush1.msra.mxu0 %v124
    %565 = vmatprep.subr.mxu0 0.0
    %566 = vmatpush1.msra.mxu0 %v125
    %567 = vmatprep.subr.mxu0 0.0
    %568 = vmatpush1.msra.mxu0 %v126
    %569 = vmatprep.subr.mxu0 0.0
    %570 = vmatpush1.msra.mxu0 %v127
    %571 = vmatprep.subr.mxu0 0.0
    %572 = vmatpush1.msra.mxu0 %v128
    %573 = vmatprep.subr.mxu0 0.0
    %574 = vmatpush1.msra.mxu0 %v129
    %575 = vmatprep.subr.mxu0 0.0
    %576 = vmatpush1.msra.mxu0 %v130
    %577 = vmatprep.subr.mxu0 0.0
    %578 = vmatpush1.msra.mxu0 %v131
    %579 = vmatprep.subr.mxu0 0.0
    %580 = vmatpush1.msra.mxu0 %v132
    %581 = vmatprep.subr.mxu0 0.0
    %582 = vmatpush1.msra.mxu0 %v133
    %583 = vmatprep.subr.mxu0 0.0
    %584 = vmatpush1.msra.mxu0 %v134
    %585 = vmatprep.subr.mxu0 0.0
    %586 = vmatpush1.msra.mxu0 %v135
    %587 = vmatprep.subr.mxu0 0.0
    %588 = vmatpush1.msra.mxu0 %v136
    %589 = vmatprep.subr.mxu0 0.0
    %590 = vmatpush1.msra.mxu0 %v137
    %591 = vmatprep.subr.mxu0 0.0
    %592 = vmatpush1.msra.mxu0 %v138
    %593 = vmatprep.subr.mxu0 0.0
    %594 = vmatpush1.msra.mxu0 %v139
    %595 = vmatprep.subr.mxu0 0.0
    %596 = vmatpush1.msra.mxu0 %v140
    %597 = vmatprep.subr.mxu0 0.0
    %598 = vmatpush1.msra.mxu0 %v141
    %599 = vmatprep.subr.mxu0 0.0
    %600 = vmatpush1.msra.mxu0 %v142
    %601 = vmatprep.subr.mxu0 0.0
    %602 = vmatpush1.msra.mxu0 %v143
    %603 = vmatprep.mubr.f32.mxu0 %v347
    %604 = vmatmul.mubr.f32.gmra.mrb[0].mxu0 %v339
    %v605 = vpop.f32.mrb[0].mxu0
    %v606 = vadd.f32 %v536, %v605
    %v607 = vpop.f32.mrb[0].mxu0
    %608 = vdwg.mxu0
    %609 = vmatprep.subr.mxu0 0.0
    %610 = vmatpush1.msra.mxu0 %v144
    %611 = vmatprep.subr.mxu0 0.0
    %612 = vmatpush1.msra.mxu0 %v145
    %613 = vmatprep.subr.mxu0 0.0
    %614 = vmatpush1.msra.mxu0 %v146
    %615 = vmatprep.subr.mxu0 0.0
    %616 = vmatpush1.msra.mxu0 %v147
    %617 = vmatprep.subr.mxu0 0.0
    %618 = vmatpush1.msra.mxu0 %v148
    %619 = vmatprep.subr.mxu0 0.0
    %620 = vmatpush1.msra.mxu0 %v149
    %621 = vmatprep.subr.mxu0 0.0
    %622 = vmatpush1.msra.mxu0 %v150
    %623 = vmatprep.subr.mxu0 0.0
    %624 = vmatpush1.msra.mxu0 %v151
    %625 = vmatprep.subr.mxu0 0.0
    %626 = vmatpush1.msra.mxu0 %v152
    %627 = vmatprep.subr.mxu0 0.0
    %628 = vmatpush1.msra.mxu0 %v153
    %629 = vmatprep.subr.mxu0 0.0
    %630 = vmatpush1.msra.mxu0 %v154
    %631 = vmatprep.subr.mxu0 0.0
    %632 = vmatpush1.msra.mxu0 %v155
    %633 = vmatprep.subr.mxu0 0.0
    %634 = vmatpush1.msra.mxu0 %v156
    %635 = vmatprep.subr.mxu0 0.0
    %636 = vmatpush1.msra.mxu0 %v157
    %637 = vmatprep.subr.mxu0 0.0
    %638 = vmatpush1.msra.mxu0 %v158
    %639 = vmatprep.subr.mxu0 0.0
    %640 = vmatpush1.msra.mxu0 %v159
    %641 = vmatprep.subr.mxu0 0.0
    %642 = vmatpush1.msra.mxu0 %v160
    %643 = vmatprep.subr.mxu0 0.0
    %644 = vmatpush1.msra.mxu0 %v161
    %645 = vmatprep.subr.mxu0 0.0
    %646 = vmatpush1.msra.mxu0 %v162
    %647 = vmatprep.subr.mxu0 0.0
    %648 = vmatpush1.msra.mxu0 %v163
    %649 = vmatprep.subr.mxu0 0.0
    %650 = vmatpush1.msra.mxu0 %v164
    %651 = vmatprep.subr.mxu0 0.0
    %652 = vmatpush1.msra.mxu0 %v165
    %653 = vmatprep.subr.mxu0 0.0
    %654 = vmatpush1.msra.mxu0 %v166
    %655 = vmatprep.subr.mxu0 0.0
    %656 = vmatpush1.msra.mxu0 %v167
    %657 = vmatprep.subr.mxu0 0.0
    %658 = vmatpush1.msra.mxu0 %v168
    %659 = vmatprep.subr.mxu0 0.0
    %660 = vmatpush1.msra.mxu0 %v169
    %661 = vmatprep.subr.mxu0 0.0
    %662 = vmatpush1.msra.mxu0 %v170
    %663 = vmatprep.subr.mxu0 0.0
    %664 = vmatpush1.msra.mxu0 %v171
    %665 = vmatprep.subr.mxu0 0.0
    %666 = vmatpush1.msra.mxu0 %v172
    %667 = vmatprep.subr.mxu0 0.0
    %668 = vmatpush1.msra.mxu0 %v173
    %669 = vmatprep.subr.mxu0 0.0
    %670 = vmatpush1.msra.mxu0 %v174
    %671 = vmatprep.subr.mxu0 0.0
    %672 = vmatpush1.msra.mxu0 %v175
    %673 = vmatprep.mubr.f32.mxu0 %v348
    %674 = vmatmul.mubr.f32.gmra.mrb[0].mxu0 %v346
    %v675 = vpop.f32.mrb[0].mxu0
    %v676 = vadd.f32 %v606, %v675
    %v677 = vpop.f32.mrb[0].mxu0
    %678 = vdwg.mxu0
    %679 = vmatprep.subr.mxu0 0.0
    %680 = vmatpush1.msra.mxu0 %v176
    %681 = vmatprep.subr.mxu0 0.0
    %682 = vmatpush1.msra.mxu0 %v177
    %683 = vmatprep.subr.mxu0 0.0
    %684 = vmatpush1.msra.mxu0 %v178
    %685 = vmatprep.subr.mxu0 0.0
    %686 = vmatpush1.msra.mxu0 %v179
    %687 = vmatprep.subr.mxu0 0.0
    %688 = vmatpush1.msra.mxu0 %v180
    %689 = vmatprep.subr.mxu0 0.0
    %690 = vmatpush1.msra.mxu0 %v181
    %691 = vmatprep.subr.mxu0 0.0
    %692 = vmatpush1.msra.mxu0 %v182
    %693 = vmatprep.subr.mxu0 0.0
    %694 = vmatpush1.msra.mxu0 %v183
    %695 = vmatprep.subr.mxu0 0.0
    %696 = vmatpush1.msra.mxu0 %v184
    %697 = vmatprep.subr.mxu0 0.0
    %698 = vmatpush1.msra.mxu0 %v185
    %699 = vmatprep.subr.mxu0 0.0
    %700 = vmatpush1.msra.mxu0 %v186
    %701 = vmatprep.subr.mxu0 0.0
    %702 = vmatpush1.msra.mxu0 %v187
    %703 = vmatprep.subr.mxu0 0.0
    %704 = vmatpush1.msra.mxu0 %v188
    %705 = vmatprep.subr.mxu0 0.0
    %706 = vmatpush1.msra.mxu0 %v189
    %707 = vmatprep.subr.mxu0 0.0
    %708 = vmatpush1.msra.mxu0 %v190
    %709 = vmatprep.subr.mxu0 0.0
    %710 = vmatpush1.msra.mxu0 %v191
    %711 = vmatprep.subr.mxu0 0.0
    %712 = vmatpush1.msra.mxu0 %v192
    %713 = vmatprep.subr.mxu0 0.0
    %714 = vmatpush1.msra.mxu0 %v193
    %715 = vmatprep.subr.mxu0 0.0
    %716 = vmatpush1.msra.mxu0 %v194
    %717 = vmatprep.subr.mxu0 0.0
    %718 = vmatpush1.msra.mxu0 %v195
    %719 = vmatprep.subr.mxu0 0.0
    %720 = vmatpush1.msra.mxu0 %v196
    %721 = vmatprep.subr.mxu0 0.0
    %722 = vmatpush1.msra.mxu0 %v197
    %723 = vmatprep.subr.mxu0 0.0
    %724 = vmatpush1.msra.mxu0 %v198
    %725 = vmatprep.subr.mxu0 0.0
    %726 = vmatpush1.msra.mxu0 %v199
    %727 = vmatprep.subr.mxu0 0.0
    %728 = vmatpush1.msra.mxu0 %v200
    %729 = vmatprep.subr.mxu0 0.0
    %730 = vmatpush1.msra.mxu0 %v201
    %731 = vmatprep.subr.mxu0 0.0
    %732 = vmatpush1.msra.mxu0 %v202
    %733 = vmatprep.subr.mxu0 0.0
    %734 = vmatpush1.msra.mxu0 %v203
    %735 = vmatprep.subr.mxu0 0.0
    %736 = vmatpush1.msra.mxu0 %v204
    %737 = vmatprep.subr.mxu0 0.0
    %738 = vmatpush1.msra.mxu0 %v205
    %739 = vmatprep.subr.mxu0 0.0
    %740 = vmatpush1.msra.mxu0 %v206
    %741 = vmatprep.subr.mxu0 0.0
    %742 = vmatpush1.msra.mxu0 %v207
    %743 = vmatprep.mubr.f32.mxu0 %v364
    %744 = vmatmul.mubr.f32.gmra.mrb[0].mxu0 %v356
    %v745 = vpop.f32.mrb[0].mxu0
    %v746 = vadd.f32 %v676, %v745
    %v747 = vpop.f32.mrb[0].mxu0
    %748 = vdwg.mxu0
    %749 = vmatprep.subr.mxu0 0.0
    %750 = vmatpush1.msra.mxu0 %v208
    %751 = vmatprep.subr.mxu0 0.0
    %752 = vmatpush1.msra.mxu0 %v209
    %753 = vmatprep.subr.mxu0 0.0
    %754 = vmatpush1.msra.mxu0 %v210
    %755 = vmatprep.subr.mxu0 0.0
    %756 = vmatpush1.msra.mxu0 %v211
    %757 = vmatprep.subr.mxu0 0.0
    %758 = vmatpush1.msra.mxu0 %v212
    %759 = vmatprep.subr.mxu0 0.0
    %760 = vmatpush1.msra.mxu0 %v213
    %761 = vmatprep.subr.mxu0 0.0
    %762 = vmatpush1.msra.mxu0 %v214
    %763 = vmatprep.subr.mxu0 0.0
    %764 = vmatpush1.msra.mxu0 %v215
    %765 = vmatprep.subr.mxu0 0.0
    %766 = vmatpush1.msra.mxu0 %v216
    %767 = vmatprep.subr.mxu0 0.0
    %768 = vmatpush1.msra.mxu0 %v217
    %769 = vmatprep.subr.mxu0 0.0
    %770 = vmatpush1.msra.mxu0 %v218
    %771 = vmatprep.subr.mxu0 0.0
    %772 = vmatpush1.msra.mxu0 %v219
    %773 = vmatprep.subr.mxu0 0.0
    %774 = vmatpush1.msra.mxu0 %v220
    %775 = vmatprep.subr.mxu0 0.0
    %776 = vmatpush1.msra.mxu0 %v221
    %777 = vmatprep.subr.mxu0 0.0
    %778 = vmatpush1.msra.mxu0 %v222
    %779 = vmatprep.subr.mxu0 0.0
    %780 = vmatpush1.msra.mxu0 %v223
    %781 = vmatprep.subr.mxu0 0.0
    %782 = vmatpush1.msra.mxu0 %v224
    %783 = vmatprep.subr.mxu0 0.0
    %784 = vmatpush1.msra.mxu0 %v225
    %785 = vmatprep.subr.mxu0 0.0
    %786 = vmatpush1.msra.mxu0 %v226
    %787 = vmatprep.subr.mxu0 0.0
    %788 = vmatpush1.msra.mxu0 %v227
    %789 = vmatprep.subr.mxu0 0.0
    %790 = vmatpush1.msra.mxu0 %v228
    %791 = vmatprep.subr.mxu0 0.0
    %792 = vmatpush1.msra.mxu0 %v229
    %793 = vmatprep.subr.mxu0 0.0
    %794 = vmatpush1.msra.mxu0 %v230
    %795 = vmatprep.subr.mxu0 0.0
    %796 = vmatpush1.msra.mxu0 %v231
    %797 = vmatprep.subr.mxu0 0.0
    %798 = vmatpush1.msra.mxu0 %v232
    %799 = vmatprep.subr.mxu0 0.0
    %800 = vmatpush1.msra.mxu0 %v233
    %801 = vmatprep.subr.mxu0 0.0
    %802 = vmatpush1.msra.mxu0 %v234
    %803 = vmatprep.subr.mxu0 0.0
    %804 = vmatpush1.msra.mxu0 %v235
    %805 = vmatprep.subr.mxu0 0.0
    %806 = vmatpush1.msra.mxu0 %v236
    %807 = vmatprep.subr.mxu0 0.0
    %808 = vmatpush1.msra.mxu0 %v237
    %809 = vmatprep.subr.mxu0 0.0
    %810 = vmatpush1.msra.mxu0 %v238
    %811 = vmatprep.subr.mxu0 0.0
    %812 = vmatpush1.msra.mxu0 %v239
    %813 = vmatprep.mubr.f32.mxu0 %v365
    %814 = vmatmul.mubr.f32.gmra.mrb[0].mxu0 %v363
    %v815 = vpop.f32.mrb[0].mxu0
    %v816 = vadd.f32 %v746, %v815
    %v817 = vpop.f32.mrb[0].mxu0
    %818 = vdwg.mxu0
    %819 = vmatprep.subr.mxu0 0.0
    %820 = vmatpush1.msra.mxu0 %v240
    %821 = vmatprep.subr.mxu0 0.0
    %822 = vmatpush1.msra.mxu0 %v241
    %823 = vmatprep.subr.mxu0 0.0
    %824 = vmatpush1.msra.mxu0 %v242
    %825 = vmatprep.subr.mxu0 0.0
    %826 = vmatpush1.msra.mxu0 %v243
    %827 = vmatprep.subr.mxu0 0.0
    %828 = vmatpush1.msra.mxu0 %v244
    %829 = vmatprep.subr.mxu0 0.0
    %830 = vmatpush1.msra.mxu0 %v245
    %831 = vmatprep.subr.mxu0 0.0
    %832 = vmatpush1.msra.mxu0 %v246
    %833 = vmatprep.subr.mxu0 0.0
    %834 = vmatpush1.msra.mxu0 %v247
    %835 = vmatprep.subr.mxu0 0.0
    %836 = vmatpush1.msra.mxu0 %v248
    %837 = vmatprep.subr.mxu0 0.0
    %838 = vmatpush1.msra.mxu0 %v249
    %839 = vmatprep.subr.mxu0 0.0
    %840 = vmatpush1.msra.mxu0 %v250
    %841 = vmatprep.subr.mxu0 0.0
    %842 = vmatpush1.msra.mxu0 %v251
    %843 = vmatprep.subr.mxu0 0.0
    %844 = vmatpush1.msra.mxu0 %v252
    %845 = vmatprep.subr.mxu0 0.0
    %846 = vmatpush1.msra.mxu0 %v253
    %847 = vmatprep.subr.mxu0 0.0
    %848 = vmatpush1.msra.mxu0 %v254
    %849 = vmatprep.subr.mxu0 0.0
    %850 = vmatpush1.msra.mxu0 %v255
    %851 = vmatprep.subr.mxu0 0.0
    %852 = vmatpush1.msra.mxu0 %v256
    %853 = vmatprep.subr.mxu0 0.0
    %854 = vmatpush1.msra.mxu0 %v257
    %855 = vmatprep.subr.mxu0 0.0
    %856 = vmatpush1.msra.mxu0 %v258
    %857 = vmatprep.subr.mxu0 0.0
    %858 = vmatpush1.msra.mxu0 %v259
    %859 = vmatprep.subr.mxu0 0.0
    %860 = vmatpush1.msra.mxu0 %v260
    %861 = vmatprep.subr.mxu0 0.0
    %862 = vmatpush1.msra.mxu0 %v261
    %863 = vmatprep.subr.mxu0 0.0
    %864 = vmatpush1.msra.mxu0 %v262
    %865 = vmatprep.subr.mxu0 0.0
    %866 = vmatpush1.msra.mxu0 %v263
    %867 = vmatprep.subr.mxu0 0.0
    %868 = vmatpush1.msra.mxu0 %v264
    %869 = vmatprep.subr.mxu0 0.0
    %870 = vmatpush1.msra.mxu0 %v265
    %871 = vmatprep.subr.mxu0 0.0
    %872 = vmatpush1.msra.mxu0 %v266
    %873 = vmatprep.subr.mxu0 0.0
    %874 = vmatpush1.msra.mxu0 %v267
    %875 = vmatprep.subr.mxu0 0.0
    %876 = vmatpush1.msra.mxu0 %v268
    %877 = vmatprep.subr.mxu0 0.0
    %878 = vmatpush1.msra.mxu0 %v269
    %879 = vmatprep.subr.mxu0 0.0
    %880 = vmatpush1.msra.mxu0 %v270
    %881 = vmatprep.subr.mxu0 0.0
    %882 = vmatpush1.msra.mxu0 %v271
    %883 = vmatprep.mubr.f32.mxu0 %v381
    %884 = vmatmul.mubr.f32.gmra.mrb[0].mxu0 %v373
    %v885 = vpop.f32.mrb[0].mxu0
    %v886 = vadd.f32 %v816, %v885
    %v887 = vpop.f32.mrb[0].mxu0
    %888 = vdwg.mxu0
    %889 = vmatprep.subr.mxu0 0.0
    %890 = vmatpush1.msra.mxu0 %v272
    %891 = vmatprep.subr.mxu0 0.0
    %892 = vmatpush1.msra.mxu0 %v273
    %893 = vmatprep.subr.mxu0 0.0
    %894 = vmatpush1.msra.mxu0 %v274
    %895 = vmatprep.subr.mxu0 0.0
    %896 = vmatpush1.msra.mxu0 %v275
    %897 = vmatprep.subr.mxu0 0.0
    %898 = vmatpush1.msra.mxu0 %v276
    %899 = vmatprep.subr.mxu0 0.0
    %900 = vmatpush1.msra.mxu0 %v277
    %901 = vmatprep.subr.mxu0 0.0
    %902 = vmatpush1.msra.mxu0 %v278
    %903 = vmatprep.subr.mxu0 0.0
    %904 = vmatpush1.msra.mxu0 %v279
    %905 = vmatprep.subr.mxu0 0.0
    %906 = vmatpush1.msra.mxu0 %v280
    %907 = vmatprep.subr.mxu0 0.0
    %908 = vmatpush1.msra.mxu0 %v281
    %909 = vmatprep.subr.mxu0 0.0
    %910 = vmatpush1.msra.mxu0 %v282
    %911 = vmatprep.subr.mxu0 0.0
    %912 = vmatpush1.msra.mxu0 %v283
    %913 = vmatprep.subr.mxu0 0.0
    %914 = vmatpush1.msra.mxu0 %v284
    %915 = vmatprep.subr.mxu0 0.0
    %916 = vmatpush1.msra.mxu0 %v285
    %917 = vmatprep.subr.mxu0 0.0
    %918 = vmatpush1.msra.mxu0 %v286
    %919 = vmatprep.subr.mxu0 0.0
    %920 = vmatpush1.msra.mxu0 %v287
    %921 = vmatprep.subr.mxu0 0.0
    %922 = vmatpush1.msra.mxu0 %v288
    %923 = vmatprep.subr.mxu0 0.0
    %924 = vmatpush1.msra.mxu0 %v289
    %925 = vmatprep.subr.mxu0 0.0
    %926 = vmatpush1.msra.mxu0 %v290
    %927 = vmatprep.subr.mxu0 0.0
    %928 = vmatpush1.msra.mxu0 %v291
    %929 = vmatprep.subr.mxu0 0.0
    %930 = vmatpush1.msra.mxu0 %v292
    %931 = vmatprep.subr.mxu0 0.0
    %932 = vmatpush1.msra.mxu0 %v293
    %933 = vmatprep.subr.mxu0 0.0
    %934 = vmatpush1.msra.mxu0 %v294
    %935 = vmatprep.subr.mxu0 0.0
    %936 = vmatpush1.msra.mxu0 %v295
    %937 = vmatprep.subr.mxu0 0.0
    %938 = vmatpush1.msra.mxu0 %v296
    %939 = vmatprep.subr.mxu0 0.0
    %940 = vmatpush1.msra.mxu0 %v297
    %941 = vmatprep.subr.mxu0 0.0
    %942 = vmatpush1.msra.mxu0 %v298
    %943 = vmatprep.subr.mxu0 0.0
    %944 = vmatpush1.msra.mxu0 %v299
    %945 = vmatprep.subr.mxu0 0.0
    %946 = vmatpush1.msra.mxu0 %v300
    %947 = vmatprep.subr.mxu0 0.0
    %948 = vmatpush1.msra.mxu0 %v301
    %949 = vmatprep.subr.mxu0 0.0
    %950 = vmatpush1.msra.mxu0 %v302
    %951 = vmatprep.subr.mxu0 0.0
    %952 = vmatpush1.msra.mxu0 %v303
    %953 = vmatprep.mubr.f32.mxu0 %v382
    %954 = vmatmul.mubr.f32.gmra.mrb[0].mxu0 %v380
    %v955 = vpop.f32.mrb[0].mxu0
    %v956 = vadd.f32 %v886, %v955
    %v957 = vpop.f32.mrb[0].mxu0
    %958 = vdwg.mxu0
    %v959 = vtanh.pop %v956
    %v960 = vld [vmem:[%s3] sm:$0xff]
    %v961 = vld [vmem:[%s3 + $0x8] sm:$0xff]
    %v962 = vld [vmem:[%s3 + $0x10] sm:$0xff]
    %v963 = vld [vmem:[%s3 + $0x18] sm:$0xff]
    %v964 = vld [vmem:[%s3 + $0x20] sm:$0xff]
    %v965 = vld [vmem:[%s3 + $0x28] sm:$0xff]
    %v966 = vld [vmem:[%s3 + $0x30] sm:$0xff]
    %v967 = vld [vmem:[%s3 + $0x38] sm:$0xff]
    %v968 = vld [vmem:[%s3 + $0x40] sm:$0xff]
    %v969 = vld [vmem:[%s3 + $0x48] sm:$0xff]
    %v970 = vld [vmem:[#allocation4] sm:$0x1]
    %v972 = vlaneseq
    %v973 = vshrl.u32 %v972, 7
    %v974 = vsub.s32 0, %v973
    %v975 = vrot.slane %v970, %v974
    %vm977 = vcmask 654336
    %v979 = vsel %vm977, %v959, 0
    %981 = vmatprep.subr.mxu0 0.0
    %982 = vmatpush1.msra.mxu0 %v960
    %983 = vmatprep.subr.mxu0 0.0
    %984 = vmatpush1.msra.mxu0 %v961
    %985 = vmatprep.subr.mxu0 0.0
    %986 = vmatpush1.msra.mxu0 %v962
    %987 = vmatprep.subr.mxu0 0.0
    %988 = vmatpush1.msra.mxu0 %v963
    %989 = vmatprep.subr.mxu0 0.0
    %990 = vmatpush1.msra.mxu0 %v964
    %991 = vmatprep.subr.mxu0 0.0
    %992 = vmatpush1.msra.mxu0 %v965
    %993 = vmatprep.subr.mxu0 0.0
    %994 = vmatpush1.msra.mxu0 %v966
    %995 = vmatprep.subr.mxu0 0.0
    %996 = vmatpush1.msra.mxu0 %v967
    %997 = vmatprep.subr.mxu0 0.0
    %998 = vmatpush1.msra.mxu0 %v968
    %999 = vmatprep.subr.mxu0 0.0
    %1000 = vmatpush1.msra.mxu0 %v969
    %1001 = vmatprep.subr.mxu0 0.0
    %1002 = vmatpush1.msra.mxu0 0.0
    %1003 = vmatprep.subr.mxu0 0.0
    %1004 = vmatpush1.msra.mxu0 0.0
    %1005 = vmatprep.subr.mxu0 0.0
    %1006 = vmatpush1.msra.mxu0 0.0
    %1007 = vmatprep.subr.mxu0 0.0
    %1008 = vmatpush1.msra.mxu0 0.0
    %1009 = vmatprep.subr.mxu0 0.0
    %1010 = vmatpush1.msra.mxu0 0.0
    %1011 = vmatprep.subr.mxu0 0.0
    %1012 = vmatpush1.msra.mxu0 0.0
    %1013 = vmatprep.subr.mxu0 0.0
    %1014 = vmatpush1.msra.mxu0 0.0
    %1015 = vmatprep.subr.mxu0 0.0
    %1016 = vmatpush1.msra.mxu0 0.0
    %1017 = vmatprep.subr.mxu0 0.0
    %1018 = vmatpush1.msra.mxu0 0.0
    %1019 = vmatprep.subr.mxu0 0.0
    %1020 = vmatpush1.msra.mxu0 0.0
    %1021 = vmatprep.subr.mxu0 0.0
    %1022 = vmatpush1.msra.mxu0 0.0
    %1023 = vmatprep.subr.mxu0 0.0
    %1024 = vmatpush1.msra.mxu0 0.0
    %1025 = vmatprep.subr.mxu0 0.0
    %1026 = vmatpush1.msra.mxu0 0.0
    %1027 = vmatprep.subr.mxu0 0.0
    %1028 = vmatpush1.msra.mxu0 0.0
    %1029 = vmatprep.subr.mxu0 0.0
    %1030 = vmatpush1.msra.mxu0 0.0
    %1031 = vmatprep.subr.mxu0 0.0
    %1032 = vmatpush1.msra.mxu0 0.0
    %1033 = vmatprep.subr.mxu0 0.0
    %1034 = vmatpush1.msra.mxu0 0.0
    %1035 = vmatprep.subr.mxu0 0.0
    %1036 = vmatpush1.msra.mxu0 0.0
    %1037 = vmatprep.subr.mxu0 0.0
    %1038 = vmatpush1.msra.mxu0 0.0
    %1039 = vmatprep.subr.mxu0 0.0
    %1040 = vmatpush1.msra.mxu0 0.0
    %1041 = vmatprep.subr.mxu0 0.0
    %1042 = vmatpush1.msra.mxu0 0.0
    %1043 = vmatprep.subr.mxu0 0.0
    %1044 = vmatpush1.msra.mxu0 0.0
    %1045 = vmatprep.mubr.f32.mxu0 0.0
    %1046 = vmatmul.mubr.f32.gmra.mrb[0].mxu0 %v979
    %v1047 = vpop.f32.mrb[0].mxu0
    %v1048 = vadd.f32 %v975, %v1047
    %v1049 = vpop.f32.mrb[0].mxu0
    %1050 = vdwg.mxu0
    %v1051 = vlaneseq
    %v1052 = vand.u32 %v1051, 127
    %v1053 = vadd.s32 %v1052, 128
    %v1054 = vadd.s32 %v1052, 256
    %v1055 = vadd.s32 %v1052, 384
    %v1056 = vadd.s32 %v1052, 512
    %v1057 = vadd.s32 %v1052, 640
    %v1058 = vadd.s32 %v1052, 768
    %v1059 = vadd.s32 %v1052, 896
    %v1060 = vcvt.s32.f32 %v1052
    %v1061 = vcvt.s32.f32 %v1053
    %v1062 = vcvt.s32.f32 %v1054
    %v1063 = vcvt.s32.f32 %v1055
    %v1064 = vcvt.s32.f32 %v1056
    %v1065 = vcvt.s32.f32 %v1057
    %v1066 = vcvt.s32.f32 %v1058
    %v1067 = vcvt.s32.f32 %v1059
    %1069 = vset.pattern.permute.xlu0 0
    %1070 = vperm.xlu0 %1069, %v1048
    %v1071 = vpop.permute.xlu0 %1070
    %v1073 = vmul.f32 %v1071, %v1060
    %v1074 = vmul.f32 %v1071, %v1061
    %v1075 = vmul.f32 %v1071, %v1062
    %v1076 = vmul.f32 %v1071, %v1063
    %v1077 = vmul.f32 %v1071, %v1064
    %v1078 = vmul.f32 %v1071, %v1065
    %v1079 = vmul.f32 %v1071, %v1066
    %v1080 = vmul.f32 %v1071, %v1067
    %1081 = vset.pattern.permute.xlu0 1
    %1082 = vperm.xlu0 %1081, %v1048
    %v1083 = vpop.permute.xlu0 %1082
    %v1085 = vsub.f32 %v1073, %v1083
    %v1086 = vsub.f32 %v1074, %v1083
    %v1087 = vsub.f32 %v1075, %v1083
    %v1088 = vsub.f32 %v1076, %v1083
    %v1089 = vsub.f32 %v1077, %v1083
    %v1090 = vsub.f32 %v1078, %v1083
    %v1091 = vsub.f32 %v1079, %v1083
    %v1092 = vsub.f32 %v1080, %v1083
    %v1093 = vrcp.pop 3.1415927
    %v1094 = vmul.f32 %v1085, %v1093
    %v1095 = vmul.f32 %v1086, %v1093
    %v1096 = vmul.f32 %v1087, %v1093
    %v1097 = vmul.f32 %v1088, %v1093
    %v1098 = vmul.f32 %v1089, %v1093
    %v1099 = vmul.f32 %v1090, %v1093
    %v1100 = vmul.f32 %v1091, %v1093
    %v1101 = vmul.f32 %v1092, %v1093
    %v1110 = vcombine.low %v1094, %v1095
    %v1111 = vcombine.low %v1096, %v1097
    %v1113 = vunpack.c.l.s4 1983009808
    %v1114 = vunpack.c.0.s8 %v1113
    %v1115 = vlaneseq
    %v1116 = vshrl.u32 %v1115, 7
    %v1117 = vsub.s32 %v1114, %v1116
    %v1118 = vrot.slane %v1110, %v1117
    %v1120 = vunpack.c.l.s4 1983009808
    %v1121 = vunpack.c.0.s8 %v1120
    %v1122 = vlaneseq
    %v1123 = vshrl.u32 %v1122, 7
    %v1124 = vsub.s32 %v1121, %v1123
    %v1125 = vrot.slane %v1111, %v1124
    %v1126 = vcombine.low %v1118, %v1125
    %v1127 = vcombine.low %v1098, %v1099
    %v1128 = vcombine.low %v1100, %v1101
    %v1130 = vunpack.c.l.s4 1983009808
    %v1131 = vunpack.c.0.s8 %v1130
    %v1132 = vlaneseq
    %v1133 = vshrl.u32 %v1132, 7
    %v1134 = vsub.s32 %v1131, %v1133
    %v1135 = vrot.slane %v1127, %v1134
    %v1137 = vunpack.c.l.s4 1983009808
    %v1138 = vunpack.c.0.s8 %v1137
    %v1139 = vlaneseq
    %v1140 = vshrl.u32 %v1139, 7
    %v1141 = vsub.s32 %v1138, %v1140
    %v1142 = vrot.slane %v1128, %v1141
    %v1143 = vcombine.low %v1135, %v1142
    %v1146 = vsub.f32 %v46, %v1126
    %v1147 = vsub.f32 %v47, %v1143
    %v1148 = vand.u32 2147483647, %v1146
    %v1149 = vrcp.pop 2.0
    %v1150 = vmul.f32 %v1148, %v1149
    %v1151 = vfloor.f32 %v1150
    %v1152 = vmul.f32 %v1151, 2.0
    %v1153 = vsub.f32 %v1148, %v1152
    %vm1154 = vcmp.eq.f32.partialorder %v1153, 2.0
    %v1155 = vsel %vm1154, 0.0, %v1153
    %v1156 = vand.u32 2147483647, %v1155
    %v1157 = vand.u32 %v1146, 2147483648
    %v1158 = vor.u32 %v1156, %v1157
    %v1159 = vand.u32 2147483647, %v1147
    %v1160 = vrcp.pop 2.0
    %v1161 = vmul.f32 %v1159, %v1160
    %v1162 = vfloor.f32 %v1161
    %v1163 = vmul.f32 %v1162, 2.0
    %v1164 = vsub.f32 %v1159, %v1163
    %vm1165 = vcmp.eq.f32.partialorder %v1164, 2.0
    %v1166 = vsel %vm1165, 0.0, %v1164
    %v1167 = vand.u32 2147483647, %v1166
    %v1168 = vand.u32 %v1147, 2147483648
    %v1169 = vor.u32 %v1167, %v1168
    %vm1170 = vcmp.ne.f32.partialorder %v1158, 0.0
    %vm1171 = vcmp.ne.f32.partialorder %v1169, 0.0
    %vm1172 = vcmp.lt.f32.partialorder %v1158, 0.0
    %vm1173 = vcmp.lt.f32.partialorder %v1169, 0.0
    %vm1174 = vmand %vm1172, %vm1170
    %vm1175 = vmand %vm1173, %vm1171
    %v1176 = vadd.f32 %v1158, 2.0
    %v1177 = vadd.f32 %v1169, 2.0
    %v1178 = vsel %vm1174, %v1176, %v1158
    %v1179 = vsel %vm1175, %v1177, %v1169
    %v1180 = vsub.f32 %v1178, 1.0
    %v1181 = vsub.f32 %v1179, 1.0
    %1182 = vst [vmem:[%s5] sm:$0xff] %v1180
    %1183 = vst [vmem:[%s5 + $0x8] sm:$0xff] %v1181
    // Predicated region
    $region30: #{cm_daelstm_forward.2} parent=1 // pred_check
      _
    $region31: #{cm_daelstm_forward.2} parent=1 // pred_check_branch
      %1185 = sbr.rel (0) target = $region33
    $region32: #{cm_daelstm_forward.2} parent=1 // pred_region
      _
    $region33: #{cm_daelstm_forward.2} parent=1 // pred_fallthru
      _
    // Predicated region
    $region34: #{cm_daelstm_forward.2} parent=1 // pred_check
      _
    $region35: #{cm_daelstm_forward.2} parent=1 // pred_check_branch
      %1187 = sbr.rel (0) target = $region37
    $region36: #{cm_daelstm_forward.2} parent=1 // pred_region
      _
    $region37: #{cm_daelstm_forward.2} parent=1 // pred_fallthru
      _
    %1188 = vsyncpa [#allocation3], 1
    %1189 = vsyncpa [#allocation5], 1

// kernel: cm_daelstm_forward.3
$region0: #{cm_daelstm_forward.3}
  #allocation0 [shape = 'u32[]', space=smem, size = 0x4, offset = 0x4, fixed_abs, tag = 'smem constant byte address 0x4 - core index']
  #allocation1 [shape = 'u32[144,128]{1,0:T(1,128)}', space=vmem, size = 0x12000, scoped, tag = 'internal scratch']
  %s0 = inlined_call_operand.vmem [shape: f32[8192,128], index: 0, kind: input, shape index: {}]
  %s1 = inlined_call_operand.vmem [shape: f32[32,128], index: 1, kind: input, shape index: {}]
  %s2 = inlined_call_operand.vmem [shape: f32[32,128], index: 2, kind: input, shape index: {}]
  %s3 = inlined_call_operand.vmem [shape: f32[32,128], index: 3, kind: input, shape index: {}]
  %s4 = inlined_call_operand.vmem [shape: f32[1,128], index: 4, kind: input, shape index: {}]
  %s5 = inlined_call_operand.vmem [shape: f32[32,32], index: 5, kind: input, shape index: {}]
  %s6 = inlined_call_operand.vmem [shape: f32[1,32], index: 6, kind: input, shape index: {}]
  %s7 = inlined_call_operand.vmem [shape: f32[32,16], index: 7, kind: input, shape index: {}]
  %s8 = inlined_call_operand.vmem [shape: f32[1,16], index: 8, kind: input, shape index: {}]
  %s9 = inlined_call_operand.vmem [shape: f32[16,4], index: 9, kind: input, shape index: {}]
  %s10 = inlined_call_operand.vmem [shape: f32[1,4], index: 10, kind: input, shape index: {}]
  %s11 = inlined_call_operand.vmem [shape: f32[8192,32], index: 11, kind: output, shape index: {0}]
  %s12 = inlined_call_operand.vmem [shape: f32[8,4], index: 12, kind: output, shape index: {1}]
  %13 = xla_tuple %s11, %s12
  %s14 = sld [smem:[#allocation0]]
  $region69: #{cm_daelstm_forward.3} parent=0
    _
  %s16 = ssub.s32 1, %s14
  %s17 = scalar_select 0, %s16, %s14
  // Predicated region
  $region2: #{cm_daelstm_forward.3} parent=0 // pred_check
    _
  $region3: #{cm_daelstm_forward.3} parent=0 // pred_check_branch
    %19 = sbr.rel (0) target = $region5
  $region4: #{cm_daelstm_forward.3} parent=0 // pred_region
    _
  $region5: #{cm_daelstm_forward.3} parent=0 // pred_fallthru
    _
  // Predicated region
  $region6: #{cm_daelstm_forward.3} parent=0 // pred_check
    _
  $region7: #{cm_daelstm_forward.3} parent=0 // pred_check_branch
    %21 = sbr.rel (0) target = $region9
  $region8: #{cm_daelstm_forward.3} parent=0 // pred_region
    _
  $region9: #{cm_daelstm_forward.3} parent=0 // pred_fallthru
    _
  // Predicated region
  $region10: #{cm_daelstm_forward.3} parent=0 // pred_check
    _
  $region11: #{cm_daelstm_forward.3} parent=0 // pred_check_branch
    %23 = sbr.rel (0) target = $region13
  $region12: #{cm_daelstm_forward.3} parent=0 // pred_region
    _
  $region13: #{cm_daelstm_forward.3} parent=0 // pred_fallthru
    _
  // Predicated region
  $region14: #{cm_daelstm_forward.3} parent=0 // pred_check
    _
  $region15: #{cm_daelstm_forward.3} parent=0 // pred_check_branch
    %25 = sbr.rel (0) target = $region17
  $region16: #{cm_daelstm_forward.3} parent=0 // pred_region
    _
  $region17: #{cm_daelstm_forward.3} parent=0 // pred_fallthru
    _
  // Predicated region
  $region18: #{cm_daelstm_forward.3} parent=0 // pred_check
    _
  $region19: #{cm_daelstm_forward.3} parent=0 // pred_check_branch
    %27 = sbr.rel (0) target = $region21
  $region20: #{cm_daelstm_forward.3} parent=0 // pred_region
    _
  $region21: #{cm_daelstm_forward.3} parent=0 // pred_fallthru
    _
  // Predicated region
  $region22: #{cm_daelstm_forward.3} parent=0 // pred_check
    _
  $region23: #{cm_daelstm_forward.3} parent=0 // pred_check_branch
    %29 = sbr.rel (0) target = $region25
  $region24: #{cm_daelstm_forward.3} parent=0 // pred_region
    _
  $region25: #{cm_daelstm_forward.3} parent=0 // pred_fallthru
    _
  // Predicated region
  $region26: #{cm_daelstm_forward.3} parent=0 // pred_check
    _
  $region27: #{cm_daelstm_forward.3} parent=0 // pred_check_branch
    %31 = sbr.rel (0) target = $region29
  $region28: #{cm_daelstm_forward.3} parent=0 // pred_region
    _
  $region29: #{cm_daelstm_forward.3} parent=0 // pred_fallthru
    _
  // Predicated region
  $region30: #{cm_daelstm_forward.3} parent=0 // pred_check
    _
  $region31: #{cm_daelstm_forward.3} parent=0 // pred_check_branch
    %33 = sbr.rel (0) target = $region33
  $region32: #{cm_daelstm_forward.3} parent=0 // pred_region
    _
  $region33: #{cm_daelstm_forward.3} parent=0 // pred_fallthru
    _
  // Predicated region
  $region34: #{cm_daelstm_forward.3} parent=0 // pred_check
    _
  $region35: #{cm_daelstm_forward.3} parent=0 // pred_check_branch
    %35 = sbr.rel (0) target = $region37
  $region36: #{cm_daelstm_forward.3} parent=0 // pred_region
    _
  $region37: #{cm_daelstm_forward.3} parent=0 // pred_fallthru
    _
  // Predicated region
  $region38: #{cm_daelstm_forward.3} parent=0 // pred_check
    _
  $region39: #{cm_daelstm_forward.3} parent=0 // pred_check_branch
    %37 = sbr.rel (0) target = $region41
  $region40: #{cm_daelstm_forward.3} parent=0 // pred_region
    _
  $region41: #{cm_daelstm_forward.3} parent=0 // pred_fallthru
    _
  // Predicated region
  $region42: #{cm_daelstm_forward.3} parent=0 // pred_check
    _
  $region43: #{cm_daelstm_forward.3} parent=0 // pred_check_branch
    %39 = sbr.rel (0) target = $region45
  $region44: #{cm_daelstm_forward.3} parent=0 // pred_region
    _
  $region45: #{cm_daelstm_forward.3} parent=0 // pred_fallthru
    _
  %v40 = vld [vmem:[%s1] sm:$0xff]
  %v41 = vld [vmem:[%s1 + $0x8] sm:$0xff]
  %v42 = vld [vmem:[%s1 + $0x10] sm:$0xff]
  %v43 = vld [vmem:[%s1 + $0x18] sm:$0xff]
  %v44 = vld [vmem:[%s2] sm:$0xff]
  %v45 = vld [vmem:[%s2 + $0x8] sm:$0xff]
  %v46 = vld [vmem:[%s2 + $0x10] sm:$0xff]
  %v47 = vld [vmem:[%s2 + $0x18] sm:$0xff]
  %v48 = vld [vmem:[%s3] sm:$0xff]
  %v49 = vld [vmem:[%s3 + $0x8] sm:$0xff]
  %v50 = vld [vmem:[%s3 + $0x10] sm:$0xff]
  %v51 = vld [vmem:[%s3 + $0x18] sm:$0xff]
  %v52 = vld [vmem:[%s4] sm:$0x1]
  %v54 = vlaneseq
  %v55 = vshrl.u32 %v54, 7
  %v56 = vsub.s32 0, %v55
  %v57 = vrot.slane %v52, %v56
  loop: start=0, step=1, limit=256
  $region46: #{cm_daelstm_forward.3} parent=0 // loop_pre_header
    _
  $region47: #{cm_daelstm_forward.3} parent=0 // loop_header
    %s60 = sphi 0, %s64
    %p61 = scmp.ge.s32.totalorder %s60, 256
    %v65 = vphi 0.0, %v1014
    %v66 = vphi 0.0, %v1008
    %v67 = vphi 0.0, %v1187
    %v68 = vphi 0.0, %v1181
  $region48: #{cm_daelstm_forward.3} parent=0 // loop_header_branch
    %63 = sbr.rel (%p61) target = $region52
  $region49: #{cm_daelstm_forward.3} parent=0 // loop_body
    %s69 = smul.u32 %s60, 32
    %s70 = scalar_lea.vmem %s0, %s69
    %v71 = vld [vmem:[%s70] sm:$0xff]
    %73 = vrot.lane.b32.xlu0 %v65, 32
    %v74 = vpop.permute.xlu0 %73
    %vm75 = vcmask 261120
    %v76 = vsel %vm75, %v74, 0
    %78 = vmatprep.subr.mxu0 0.0
    %79 = vmatpush1.msra.mxu0 %v40
    %80 = vmatprep.subr.mxu0 0.0
    %81 = vmatpush1.msra.mxu0 %v41
    %82 = vmatprep.subr.mxu0 0.0
    %83 = vmatpush1.msra.mxu0 %v42
    %84 = vmatprep.subr.mxu0 0.0
    %85 = vmatpush1.msra.mxu0 %v43
    %86 = vmatprep.subr.mxu0 0.0
    %87 = vmatpush1.msra.mxu0 0.0
    %88 = vmatprep.subr.mxu0 0.0
    %89 = vmatpush1.msra.mxu0 0.0
    %90 = vmatprep.subr.mxu0 0.0
    %91 = vmatpush1.msra.mxu0 0.0
    %92 = vmatprep.subr.mxu0 0.0
    %93 = vmatpush1.msra.mxu0 0.0
    %94 = vmatprep.subr.mxu0 0.0
    %95 = vmatpush1.msra.mxu0 0.0
    %96 = vmatprep.subr.mxu0 0.0
    %97 = vmatpush1.msra.mxu0 0.0
    %98 = vmatprep.subr.mxu0 0.0
    %99 = vmatpush1.msra.mxu0 0.0
    %100 = vmatprep.subr.mxu0 0.0
    %101 = vmatpush1.msra.mxu0 0.0
    %102 = vmatprep.subr.mxu0 0.0
    %103 = vmatpush1.msra.mxu0 0.0
    %104 = vmatprep.subr.mxu0 0.0
    %105 = vmatpush1.msra.mxu0 0.0
    %106 = vmatprep.subr.mxu0 0.0
    %107 = vmatpush1.msra.mxu0 0.0
    %108 = vmatprep.subr.mxu0 0.0
    %109 = vmatpush1.msra.mxu0 0.0
    %110 = vmatprep.subr.mxu0 0.0
    %111 = vmatpush1.msra.mxu0 0.0
    %112 = vmatprep.subr.mxu0 0.0
    %113 = vmatpush1.msra.mxu0 0.0
    %114 = vmatprep.subr.mxu0 0.0
    %115 = vmatpush1.msra.mxu0 0.0
    %116 = vmatprep.subr.mxu0 0.0
    %117 = vmatpush1.msra.mxu0 0.0
    %118 = vmatprep.subr.mxu0 0.0
    %119 = vmatpush1.msra.mxu0 0.0
    %120 = vmatprep.subr.mxu0 0.0
    %121 = vmatpush1.msra.mxu0 0.0
    %122 = vmatprep.subr.mxu0 0.0
    %123 = vmatpush1.msra.mxu0 0.0
    %124 = vmatprep.subr.mxu0 0.0
    %125 = vmatpush1.msra.mxu0 0.0
    %126 = vmatprep.subr.mxu0 0.0
    %127 = vmatpush1.msra.mxu0 0.0
    %128 = vmatprep.subr.mxu0 0.0
    %129 = vmatpush1.msra.mxu0 0.0
    %130 = vmatprep.subr.mxu0 0.0
    %131 = vmatpush1.msra.mxu0 0.0
    %132 = vmatprep.subr.mxu0 0.0
    %133 = vmatpush1.msra.mxu0 0.0
    %134 = vmatprep.subr.mxu0 0.0
    %135 = vmatpush1.msra.mxu0 0.0
    %136 = vmatprep.subr.mxu0 0.0
    %137 = vmatpush1.msra.mxu0 0.0
    %138 = vmatprep.subr.mxu0 0.0
    %139 = vmatpush1.msra.mxu0 0.0
    %140 = vmatprep.subr.mxu0 0.0
    %141 = vmatpush1.msra.mxu0 0.0
    %142 = vmatprep.mubr.f32.mxu0 0.0
    %143 = vmatmul.mubr.f32.gmra.mrb[0].mxu0 %v76
    %v144 = vpop.f32.mrb[0].mxu0
    %v145 = vadd.f32 0.0, %v144
    %v146 = vpop.f32.mrb[0].mxu0
    %147 = vdwg.mxu0
    %v148 = vadd.f32 %v71, %v145
    %v149 = vxor.u32 %v148, 2147483648
    %v150 = vmul.f32 %v149, 1.442695
    %v151 = vpow.pop %v150
    %v152 = vadd.f32 %v151, 1.0
    %v153 = vrcp.pop %v152
    %v154 = vmul.f32 1.0, %v153
    %v155 = vmul.f32 %v154, 2.0
    %v156 = vsub.f32 %v155, 1.0
    %v157 = vmul.f32 %v154, %v66
    %159 = vrot.lane.b32.xlu0 %v156, 64
    %v160 = vpop.permute.xlu0 %159
    %v162 = vmul.f32 %v154, %v160
    %164 = vrot.lane.b32.xlu0 %v162, 32
    %v165 = vpop.permute.xlu0 %164
    %v167 = vadd.f32 %v157, %v165
    %v168 = vtanh.pop %v167
    %170 = vrot.lane.b32.xlu0 %v168, 64
    %v171 = vpop.permute.xlu0 %170
    %v173 = vmul.f32 %v154, %v171
    %175 = vrot.lane.b32.xlu0 %v67, 32
    %v176 = vpop.permute.xlu0 %175
    %v177 = vsel %vm75, %v176, 0
    %179 = vmatprep.subr.mxu0 0.0
    %180 = vmatpush1.msra.mxu0 %v48
    %181 = vmatprep.subr.mxu0 0.0
    %182 = vmatpush1.msra.mxu0 %v49
    %183 = vmatprep.subr.mxu0 0.0
    %184 = vmatpush1.msra.mxu0 %v50
    %185 = vmatprep.subr.mxu0 0.0
    %186 = vmatpush1.msra.mxu0 %v51
    %187 = vmatprep.subr.mxu0 0.0
    %188 = vmatpush1.msra.mxu0 0.0
    %189 = vmatprep.subr.mxu0 0.0
    %190 = vmatpush1.msra.mxu0 0.0
    %191 = vmatprep.subr.mxu0 0.0
    %192 = vmatpush1.msra.mxu0 0.0
    %193 = vmatprep.subr.mxu0 0.0
    %194 = vmatpush1.msra.mxu0 0.0
    %195 = vmatprep.subr.mxu0 0.0
    %196 = vmatpush1.msra.mxu0 0.0
    %197 = vmatprep.subr.mxu0 0.0
    %198 = vmatpush1.msra.mxu0 0.0
    %199 = vmatprep.subr.mxu0 0.0
    %200 = vmatpush1.msra.mxu0 0.0
    %201 = vmatprep.subr.mxu0 0.0
    %202 = vmatpush1.msra.mxu0 0.0
    %203 = vmatprep.subr.mxu0 0.0
    %204 = vmatpush1.msra.mxu0 0.0
    %205 = vmatprep.subr.mxu0 0.0
    %206 = vmatpush1.msra.mxu0 0.0
    %207 = vmatprep.subr.mxu0 0.0
    %208 = vmatpush1.msra.mxu0 0.0
    %209 = vmatprep.subr.mxu0 0.0
    %210 = vmatpush1.msra.mxu0 0.0
    %211 = vmatprep.subr.mxu0 0.0
    %212 = vmatpush1.msra.mxu0 0.0
    %213 = vmatprep.subr.mxu0 0.0
    %214 = vmatpush1.msra.mxu0 0.0
    %215 = vmatprep.subr.mxu0 0.0
    %216 = vmatpush1.msra.mxu0 0.0
    %217 = vmatprep.subr.mxu0 0.0
    %218 = vmatpush1.msra.mxu0 0.0
    %219 = vmatprep.subr.mxu0 0.0
    %220 = vmatpush1.msra.mxu0 0.0
    %221 = vmatprep.subr.mxu0 0.0
    %222 = vmatpush1.msra.mxu0 0.0
    %223 = vmatprep.subr.mxu0 0.0
    %224 = vmatpush1.msra.mxu0 0.0
    %225 = vmatprep.subr.mxu0 0.0
    %226 = vmatpush1.msra.mxu0 0.0
    %227 = vmatprep.subr.mxu0 0.0
    %228 = vmatpush1.msra.mxu0 0.0
    %229 = vmatprep.subr.mxu0 0.0
    %230 = vmatpush1.msra.mxu0 0.0
    %231 = vmatprep.subr.mxu0 0.0
    %232 = vmatpush1.msra.mxu0 0.0
    %233 = vmatprep.subr.mxu0 0.0
    %234 = vmatpush1.msra.mxu0 0.0
    %235 = vmatprep.subr.mxu0 0.0
    %236 = vmatpush1.msra.mxu0 0.0
    %237 = vmatprep.subr.mxu0 0.0
    %238 = vmatpush1.msra.mxu0 0.0
    %239 = vmatprep.subr.mxu0 0.0
    %240 = vmatpush1.msra.mxu0 0.0
    %241 = vmatprep.subr.mxu0 0.0
    %242 = vmatpush1.msra.mxu0 0.0
    %243 = vmatprep.mubr.f32.mxu0 0.0
    %244 = vmatmul.mubr.f32.gmra.mrb[0].mxu0 %v177
    %v245 = vpop.f32.mrb[0].mxu0
    %v246 = vadd.f32 0.0, %v245
    %v247 = vpop.f32.mrb[0].mxu0
    %248 = vdwg.mxu0
    %250 = vrot.lane.b32.xlu0 %v173, 32
    %v251 = vpop.permute.xlu0 %250
    %v252 = vsel %vm75, %v251, 0
    %254 = vmatprep.subr.mxu0 0.0
    %255 = vmatpush1.msra.mxu0 %v44
    %256 = vmatprep.subr.mxu0 0.0
    %257 = vmatpush1.msra.mxu0 %v45
    %258 = vmatprep.subr.mxu0 0.0
    %259 = vmatpush1.msra.mxu0 %v46
    %260 = vmatprep.subr.mxu0 0.0
    %261 = vmatpush1.msra.mxu0 %v47
    %262 = vmatprep.subr.mxu0 0.0
    %263 = vmatpush1.msra.mxu0 0.0
    %264 = vmatprep.subr.mxu0 0.0
    %265 = vmatpush1.msra.mxu0 0.0
    %266 = vmatprep.subr.mxu0 0.0
    %267 = vmatpush1.msra.mxu0 0.0
    %268 = vmatprep.subr.mxu0 0.0
    %269 = vmatpush1.msra.mxu0 0.0
    %270 = vmatprep.subr.mxu0 0.0
    %271 = vmatpush1.msra.mxu0 0.0
    %272 = vmatprep.subr.mxu0 0.0
    %273 = vmatpush1.msra.mxu0 0.0
    %274 = vmatprep.subr.mxu0 0.0
    %275 = vmatpush1.msra.mxu0 0.0
    %276 = vmatprep.subr.mxu0 0.0
    %277 = vmatpush1.msra.mxu0 0.0
    %278 = vmatprep.subr.mxu0 0.0
    %279 = vmatpush1.msra.mxu0 0.0
    %280 = vmatprep.subr.mxu0 0.0
    %281 = vmatpush1.msra.mxu0 0.0
    %282 = vmatprep.subr.mxu0 0.0
    %283 = vmatpush1.msra.mxu0 0.0
    %284 = vmatprep.subr.mxu0 0.0
    %285 = vmatpush1.msra.mxu0 0.0
    %286 = vmatprep.subr.mxu0 0.0
    %287 = vmatpush1.msra.mxu0 0.0
    %288 = vmatprep.subr.mxu0 0.0
    %289 = vmatpush1.msra.mxu0 0.0
    %290 = vmatprep.subr.mxu0 0.0
    %291 = vmatpush1.msra.mxu0 0.0
    %292 = vmatprep.subr.mxu0 0.0
    %293 = vmatpush1.msra.mxu0 0.0
    %294 = vmatprep.subr.mxu0 0.0
    %295 = vmatpush1.msra.mxu0 0.0
    %296 = vmatprep.subr.mxu0 0.0
    %297 = vmatpush1.msra.mxu0 0.0
    %298 = vmatprep.subr.mxu0 0.0
    %299 = vmatpush1.msra.mxu0 0.0
    %300 = vmatprep.subr.mxu0 0.0
    %301 = vmatpush1.msra.mxu0 0.0
    %302 = vmatprep.subr.mxu0 0.0
    %303 = vmatpush1.msra.mxu0 0.0
    %304 = vmatprep.subr.mxu0 0.0
    %305 = vmatpush1.msra.mxu0 0.0
    %306 = vmatprep.subr.mxu0 0.0
    %307 = vmatpush1.msra.mxu0 0.0
    %308 = vmatprep.subr.mxu0 0.0
    %309 = vmatpush1.msra.mxu0 0.0
    %310 = vmatprep.subr.mxu0 0.0
    %311 = vmatpush1.msra.mxu0 0.0
    %312 = vmatprep.subr.mxu0 0.0
    %313 = vmatpush1.msra.mxu0 0.0
    %314 = vmatprep.subr.mxu0 0.0
    %315 = vmatpush1.msra.mxu0 0.0
    %316 = vmatprep.subr.mxu0 0.0
    %317 = vmatpush1.msra.mxu0 0.0
    %318 = vmatprep.mubr.f32.mxu0 0.0
    %319 = vmatmul.mubr.f32.gmra.mrb[0].mxu0 %v252
    %v320 = vpop.f32.mrb[0].mxu0
    %v321 = vadd.f32 %v246, %v320
    %v322 = vpop.f32.mrb[0].mxu0
    %323 = vdwg.mxu0
    %v324 = vadd.f32 %v321, %v57
    %v325 = vxor.u32 %v324, 2147483648
    %v326 = vmul.f32 %v325, 1.442695
    %v327 = vpow.pop %v326
    %v328 = vadd.f32 %v327, 1.0
    %v329 = vrcp.pop %v328
    %v330 = vmul.f32 1.0, %v329
    %v331 = vmul.f32 %v330, 2.0
    %v332 = vsub.f32 %v331, 1.0
    %v333 = vmul.f32 %v330, %v68
    %335 = vrot.lane.b32.xlu0 %v332, 64
    %v336 = vpop.permute.xlu0 %335
    %v338 = vmul.f32 %v330, %v336
    %340 = vrot.lane.b32.xlu0 %v338, 32
    %v341 = vpop.permute.xlu0 %340
    %v343 = vadd.f32 %v333, %v341
    %v344 = vtanh.pop %v343
    %346 = vrot.lane.b32.xlu0 %v344, 64
    %v347 = vpop.permute.xlu0 %346
    %v349 = vmul.f32 %v330, %v347
    %351 = vrot.lane.b32.xlu0 %v349, 32
    %v352 = vpop.permute.xlu0 %351
    %s354 = scalar_lea.vmem %s11, %s69
    %355 = vst.msk [vmem:[%s354] sm:$0xff] %vm75, %v352
    %s356 = smul.u32 %s60, 4
    %s357 = sadd.s32 %s356, 1
    %s358 = smul.u32 %s357, 8
    %s359 = scalar_lea.vmem %s0, %s358
    %v360 = vld [vmem:[%s359] sm:$0xff]
    %361 = vmatprep.subr.mxu0 0.0
    %362 = vmatpush1.msra.mxu0 %v40
    %363 = vmatprep.subr.mxu0 0.0
    %364 = vmatpush1.msra.mxu0 %v41
    %365 = vmatprep.subr.mxu0 0.0
    %366 = vmatpush1.msra.mxu0 %v42
    %367 = vmatprep.subr.mxu0 0.0
    %368 = vmatpush1.msra.mxu0 %v43
    %369 = vmatprep.subr.mxu0 0.0
    %370 = vmatpush1.msra.mxu0 0.0
    %371 = vmatprep.subr.mxu0 0.0
    %372 = vmatpush1.msra.mxu0 0.0
    %373 = vmatprep.subr.mxu0 0.0
    %374 = vmatpush1.msra.mxu0 0.0
    %375 = vmatprep.subr.mxu0 0.0
    %376 = vmatpush1.msra.mxu0 0.0
    %377 = vmatprep.subr.mxu0 0.0
    %378 = vmatpush1.msra.mxu0 0.0
    %379 = vmatprep.subr.mxu0 0.0
    %380 = vmatpush1.msra.mxu0 0.0
    %381 = vmatprep.subr.mxu0 0.0
    %382 = vmatpush1.msra.mxu0 0.0
    %383 = vmatprep.subr.mxu0 0.0
    %384 = vmatpush1.msra.mxu0 0.0
    %385 = vmatprep.subr.mxu0 0.0
    %386 = vmatpush1.msra.mxu0 0.0
    %387 = vmatprep.subr.mxu0 0.0
    %388 = vmatpush1.msra.mxu0 0.0
    %389 = vmatprep.subr.mxu0 0.0
    %390 = vmatpush1.msra.mxu0 0.0
    %391 = vmatprep.subr.mxu0 0.0
    %392 = vmatpush1.msra.mxu0 0.0
    %393 = vmatprep.subr.mxu0 0.0
    %394 = vmatpush1.msra.mxu0 0.0
    %395 = vmatprep.subr.mxu0 0.0
    %396 = vmatpush1.msra.mxu0 0.0
    %397 = vmatprep.subr.mxu0 0.0
    %398 = vmatpush1.msra.mxu0 0.0
    %399 = vmatprep.subr.mxu0 0.0
    %400 = vmatpush1.msra.mxu0 0.0
    %401 = vmatprep.subr.mxu0 0.0
    %402 = vmatpush1.msra.mxu0 0.0
    %403 = vmatprep.subr.mxu0 0.0
    %404 = vmatpush1.msra.mxu0 0.0
    %405 = vmatprep.subr.mxu0 0.0
    %406 = vmatpush1.msra.mxu0 0.0
    %407 = vmatprep.subr.mxu0 0.0
    %408 = vmatpush1.msra.mxu0 0.0
    %409 = vmatprep.subr.mxu0 0.0
    %410 = vmatpush1.msra.mxu0 0.0
    %411 = vmatprep.subr.mxu0 0.0
    %412 = vmatpush1.msra.mxu0 0.0
    %413 = vmatprep.subr.mxu0 0.0
    %414 = vmatpush1.msra.mxu0 0.0
    %415 = vmatprep.subr.mxu0 0.0
    %416 = vmatpush1.msra.mxu0 0.0
    %417 = vmatprep.subr.mxu0 0.0
    %418 = vmatpush1.msra.mxu0 0.0
    %419 = vmatprep.subr.mxu0 0.0
    %420 = vmatpush1.msra.mxu0 0.0
    %421 = vmatprep.subr.mxu0 0.0
    %422 = vmatpush1.msra.mxu0 0.0
    %423 = vmatprep.subr.mxu0 0.0
    %424 = vmatpush1.msra.mxu0 0.0
    %425 = vmatprep.mubr.f32.mxu0 0.0
    %426 = vmatmul.mubr.f32.gmra.mrb[0].mxu0 %v252
    %v427 = vpop.f32.mrb[0].mxu0
    %v428 = vadd.f32 0.0, %v427
    %v429 = vpop.f32.mrb[0].mxu0
    %430 = vdwg.mxu0
    %v431 = vadd.f32 %v360, %v428
    %v432 = vxor.u32 %v431, 2147483648
    %v433 = vmul.f32 %v432, 1.442695
    %v434 = vpow.pop %v433
    %v435 = vadd.f32 %v434, 1.0
    %v436 = vrcp.pop %v435
    %v437 = vmul.f32 1.0, %v436
    %v438 = vmul.f32 %v437, 2.0
    %v439 = vsub.f32 %v438, 1.0
    %v440 = vmul.f32 %v437, %v167
    %442 = vrot.lane.b32.xlu0 %v439, 64
    %v443 = vpop.permute.xlu0 %442
    %v445 = vmul.f32 %v437, %v443
    %447 = vrot.lane.b32.xlu0 %v445, 32
    %v448 = vpop.permute.xlu0 %447
    %v450 = vadd.f32 %v440, %v448
    %v451 = vtanh.pop %v450
    %453 = vrot.lane.b32.xlu0 %v451, 64
    %v454 = vpop.permute.xlu0 %453
    %v456 = vmul.f32 %v437, %v454
    %v457 = vsel %vm75, %v352, 0
    %459 = vmatprep.subr.mxu0 0.0
    %460 = vmatpush1.msra.mxu0 %v48
    %461 = vmatprep.subr.mxu0 0.0
    %462 = vmatpush1.msra.mxu0 %v49
    %463 = vmatprep.subr.mxu0 0.0
    %464 = vmatpush1.msra.mxu0 %v50
    %465 = vmatprep.subr.mxu0 0.0
    %466 = vmatpush1.msra.mxu0 %v51
    %467 = vmatprep.subr.mxu0 0.0
    %468 = vmatpush1.msra.mxu0 0.0
    %469 = vmatprep.subr.mxu0 0.0
    %470 = vmatpush1.msra.mxu0 0.0
    %471 = vmatprep.subr.mxu0 0.0
    %472 = vmatpush1.msra.mxu0 0.0
    %473 = vmatprep.subr.mxu0 0.0
    %474 = vmatpush1.msra.mxu0 0.0
    %475 = vmatprep.subr.mxu0 0.0
    %476 = vmatpush1.msra.mxu0 0.0
    %477 = vmatprep.subr.mxu0 0.0
    %478 = vmatpush1.msra.mxu0 0.0
    %479 = vmatprep.subr.mxu0 0.0
    %480 = vmatpush1.msra.mxu0 0.0
    %481 = vmatprep.subr.mxu0 0.0
    %482 = vmatpush1.msra.mxu0 0.0
    %483 = vmatprep.subr.mxu0 0.0
    %484 = vmatpush1.msra.mxu0 0.0
    %485 = vmatprep.subr.mxu0 0.0
    %486 = vmatpush1.msra.mxu0 0.0
    %487 = vmatprep.subr.mxu0 0.0
    %488 = vmatpush1.msra.mxu0 0.0
    %489 = vmatprep.subr.mxu0 0.0
    %490 = vmatpush1.msra.mxu0 0.0
    %491 = vmatprep.subr.mxu0 0.0
    %492 = vmatpush1.msra.mxu0 0.0
    %493 = vmatprep.subr.mxu0 0.0
    %494 = vmatpush1.msra.mxu0 0.0
    %495 = vmatprep.subr.mxu0 0.0
    %496 = vmatpush1.msra.mxu0 0.0
    %497 = vmatprep.subr.mxu0 0.0
    %498 = vmatpush1.msra.mxu0 0.0
    %499 = vmatprep.subr.mxu0 0.0
    %500 = vmatpush1.msra.mxu0 0.0
    %501 = vmatprep.subr.mxu0 0.0
    %502 = vmatpush1.msra.mxu0 0.0
    %503 = vmatprep.subr.mxu0 0.0
    %504 = vmatpush1.msra.mxu0 0.0
    %505 = vmatprep.subr.mxu0 0.0
    %506 = vmatpush1.msra.mxu0 0.0
    %507 = vmatprep.subr.mxu0 0.0
    %508 = vmatpush1.msra.mxu0 0.0
    %509 = vmatprep.subr.mxu0 0.0
    %510 = vmatpush1.msra.mxu0 0.0
    %511 = vmatprep.subr.mxu0 0.0
    %512 = vmatpush1.msra.mxu0 0.0
    %513 = vmatprep.subr.mxu0 0.0
    %514 = vmatpush1.msra.mxu0 0.0
    %515 = vmatprep.subr.mxu0 0.0
    %516 = vmatpush1.msra.mxu0 0.0
    %517 = vmatprep.subr.mxu0 0.0
    %518 = vmatpush1.msra.mxu0 0.0
    %519 = vmatprep.subr.mxu0 0.0
    %520 = vmatpush1.msra.mxu0 0.0
    %521 = vmatprep.subr.mxu0 0.0
    %522 = vmatpush1.msra.mxu0 0.0
    %523 = vmatprep.mubr.f32.mxu0 0.0
    %524 = vmatmul.mubr.f32.gmra.mrb[0].mxu0 %v457
    %v525 = vpop.f32.mrb[0].mxu0
    %v526 = vadd.f32 0.0, %v525
    %v527 = vpop.f32.mrb[0].mxu0
    %528 = vdwg.mxu0
    %530 = vrot.lane.b32.xlu0 %v456, 32
    %v531 = vpop.permute.xlu0 %530
    %v532 = vsel %vm75, %v531, 0
    %534 = vmatprep.subr.mxu0 0.0
    %535 = vmatpush1.msra.mxu0 %v44
    %536 = vmatprep.subr.mxu0 0.0
    %537 = vmatpush1.msra.mxu0 %v45
    %538 = vmatprep.subr.mxu0 0.0
    %539 = vmatpush1.msra.mxu0 %v46
    %540 = vmatprep.subr.mxu0 0.0
    %541 = vmatpush1.msra.mxu0 %v47
    %542 = vmatprep.subr.mxu0 0.0
    %543 = vmatpush1.msra.mxu0 0.0
    %544 = vmatprep.subr.mxu0 0.0
    %545 = vmatpush1.msra.mxu0 0.0
    %546 = vmatprep.subr.mxu0 0.0
    %547 = vmatpush1.msra.mxu0 0.0
    %548 = vmatprep.subr.mxu0 0.0
    %549 = vmatpush1.msra.mxu0 0.0
    %550 = vmatprep.subr.mxu0 0.0
    %551 = vmatpush1.msra.mxu0 0.0
    %552 = vmatprep.subr.mxu0 0.0
    %553 = vmatpush1.msra.mxu0 0.0
    %554 = vmatprep.subr.mxu0 0.0
    %555 = vmatpush1.msra.mxu0 0.0
    %556 = vmatprep.subr.mxu0 0.0
    %557 = vmatpush1.msra.mxu0 0.0
    %558 = vmatprep.subr.mxu0 0.0
    %559 = vmatpush1.msra.mxu0 0.0
    %560 = vmatprep.subr.mxu0 0.0
    %561 = vmatpush1.msra.mxu0 0.0
    %562 = vmatprep.subr.mxu0 0.0
    %563 = vmatpush1.msra.mxu0 0.0
    %564 = vmatprep.subr.mxu0 0.0
    %565 = vmatpush1.msra.mxu0 0.0
    %566 = vmatprep.subr.mxu0 0.0
    %567 = vmatpush1.msra.mxu0 0.0
    %568 = vmatprep.subr.mxu0 0.0
    %569 = vmatpush1.msra.mxu0 0.0
    %570 = vmatprep.subr.mxu0 0.0
    %571 = vmatpush1.msra.mxu0 0.0
    %572 = vmatprep.subr.mxu0 0.0
    %573 = vmatpush1.msra.mxu0 0.0
    %574 = vmatprep.subr.mxu0 0.0
    %575 = vmatpush1.msra.mxu0 0.0
    %576 = vmatprep.subr.mxu0 0.0
    %577 = vmatpush1.msra.mxu0 0.0
    %578 = vmatprep.subr.mxu0 0.0
    %579 = vmatpush1.msra.mxu0 0.0
    %580 = vmatprep.subr.mxu0 0.0
    %581 = vmatpush1.msra.mxu0 0.0
    %582 = vmatprep.subr.mxu0 0.0
    %583 = vmatpush1.msra.mxu0 0.0
    %584 = vmatprep.subr.mxu0 0.0
    %585 = vmatpush1.msra.mxu0 0.0
    %586 = vmatprep.subr.mxu0 0.0
    %587 = vmatpush1.msra.mxu0 0.0
    %588 = vmatprep.subr.mxu0 0.0
    %589 = vmatpush1.msra.mxu0 0.0
    %590 = vmatprep.subr.mxu0 0.0
    %591 = vmatpush1.msra.mxu0 0.0
    %592 = vmatprep.subr.mxu0 0.0
    %593 = vmatpush1.msra.mxu0 0.0
    %594 = vmatprep.subr.mxu0 0.0
    %595 = vmatpush1.msra.mxu0 0.0
    %596 = vmatprep.subr.mxu0 0.0
    %597 = vmatpush1.msra.mxu0 0.0
    %598 = vmatprep.mubr.f32.mxu0 0.0
    %599 = vmatmul.mubr.f32.gmra.mrb[0].mxu0 %v532
    %v600 = vpop.f32.mrb[0].mxu0
    %v601 = vadd.f32 %v526, %v600
    %v602 = vpop.f32.mrb[0].mxu0
    %603 = vdwg.mxu0
    %v604 = vadd.f32 %v601, %v57
    %v605 = vxor.u32 %v604, 2147483648
    %v606 = vmul.f32 %v605, 1.442695
    %v607 = vpow.pop %v606
    %v608 = vadd.f32 %v607, 1.0
    %v609 = vrcp.pop %v608
    %v610 = vmul.f32 1.0, %v609
    %v611 = vmul.f32 %v610, 2.0
    %v612 = vsub.f32 %v611, 1.0
    %v613 = vmul.f32 %v610, %v343
    %615 = vrot.lane.b32.xlu0 %v612, 64
    %v616 = vpop.permute.xlu0 %615
    %v618 = vmul.f32 %v610, %v616
    %620 = vrot.lane.b32.xlu0 %v618, 32
    %v621 = vpop.permute.xlu0 %620
    %v623 = vadd.f32 %v613, %v621
    %v624 = vtanh.pop %v623
    %626 = vrot.lane.b32.xlu0 %v624, 64
    %v627 = vpop.permute.xlu0 %626
    %v629 = vmul.f32 %v610, %v627
    %631 = vrot.lane.b32.xlu0 %v629, 32
    %v632 = vpop.permute.xlu0 %631
    %s634 = scalar_lea.vmem %s11, %s358
    %635 = vst.msk [vmem:[%s634] sm:$0xff] %vm75, %v632
    %s636 = sadd.s32 %s356, 2
    %s637 = smul.u32 %s636, 8
    %s638 = scalar_lea.vmem %s0, %s637
    %v639 = vld [vmem:[%s638] sm:$0xff]
    %640 = vmatprep.subr.mxu0 0.0
    %641 = vmatpush1.msra.mxu0 %v40
    %642 = vmatprep.subr.mxu0 0.0
    %643 = vmatpush1.msra.mxu0 %v41
    %644 = vmatprep.subr.mxu0 0.0
    %645 = vmatpush1.msra.mxu0 %v42
    %646 = vmatprep.subr.mxu0 0.0
    %647 = vmatpush1.msra.mxu0 %v43
    %648 = vmatprep.subr.mxu0 0.0
    %649 = vmatpush1.msra.mxu0 0.0
    %650 = vmatprep.subr.mxu0 0.0
    %651 = vmatpush1.msra.mxu0 0.0
    %652 = vmatprep.subr.mxu0 0.0
    %653 = vmatpush1.msra.mxu0 0.0
    %654 = vmatprep.subr.mxu0 0.0
    %655 = vmatpush1.msra.mxu0 0.0
    %656 = vmatprep.subr.mxu0 0.0
    %657 = vmatpush1.msra.mxu0 0.0
    %658 = vmatprep.subr.mxu0 0.0
    %659 = vmatpush1.msra.mxu0 0.0
    %660 = vmatprep.subr.mxu0 0.0
    %661 = vmatpush1.msra.mxu0 0.0
    %662 = vmatprep.subr.mxu0 0.0
    %663 = vmatpush1.msra.mxu0 0.0
    %664 = vmatprep.subr.mxu0 0.0
    %665 = vmatpush1.msra.mxu0 0.0
    %666 = vmatprep.subr.mxu0 0.0
    %667 = vmatpush1.msra.mxu0 0.0
    %668 = vmatprep.subr.mxu0 0.0
    %669 = vmatpush1.msra.mxu0 0.0
    %670 = vmatprep.subr.mxu0 0.0
    %671 = vmatpush1.msra.mxu0 0.0
    %672 = vmatprep.subr.mxu0 0.0
    %673 = vmatpush1.msra.mxu0 0.0
    %674 = vmatprep.subr.mxu0 0.0
    %675 = vmatpush1.msra.mxu0 0.0
    %676 = vmatprep.subr.mxu0 0.0
    %677 = vmatpush1.msra.mxu0 0.0
    %678 = vmatprep.subr.mxu0 0.0
    %679 = vmatpush1.msra.mxu0 0.0
    %680 = vmatprep.subr.mxu0 0.0
    %681 = vmatpush1.msra.mxu0 0.0
    %682 = vmatprep.subr.mxu0 0.0
    %683 = vmatpush1.msra.mxu0 0.0
    %684 = vmatprep.subr.mxu0 0.0
    %685 = vmatpush1.msra.mxu0 0.0
    %686 = vmatprep.subr.mxu0 0.0
    %687 = vmatpush1.msra.mxu0 0.0
    %688 = vmatprep.subr.mxu0 0.0
    %689 = vmatpush1.msra.mxu0 0.0
    %690 = vmatprep.subr.mxu0 0.0
    %691 = vmatpush1.msra.mxu0 0.0
    %692 = vmatprep.subr.mxu0 0.0
    %693 = vmatpush1.msra.mxu0 0.0
    %694 = vmatprep.subr.mxu0 0.0
    %695 = vmatpush1.msra.mxu0 0.0
    %696 = vmatprep.subr.mxu0 0.0
    %697 = vmatpush1.msra.mxu0 0.0
    %698 = vmatprep.subr.mxu0 0.0
    %699 = vmatpush1.msra.mxu0 0.0
    %700 = vmatprep.subr.mxu0 0.0
    %701 = vmatpush1.msra.mxu0 0.0
    %702 = vmatprep.subr.mxu0 0.0
    %703 = vmatpush1.msra.mxu0 0.0
    %704 = vmatprep.mubr.f32.mxu0 0.0
    %705 = vmatmul.mubr.f32.gmra.mrb[0].mxu0 %v532
    %v706 = vpop.f32.mrb[0].mxu0
    %v707 = vadd.f32 0.0, %v706
    %v708 = vpop.f32.mrb[0].mxu0
    %709 = vdwg.mxu0
    %v710 = vadd.f32 %v639, %v707
    %v711 = vxor.u32 %v710, 2147483648
    %v712 = vmul.f32 %v711, 1.442695
    %v713 = vpow.pop %v712
    %v714 = vadd.f32 %v713, 1.0
    %v715 = vrcp.pop %v714
    %v716 = vmul.f32 1.0, %v715
    %v717 = vmul.f32 %v716, 2.0
    %v718 = vsub.f32 %v717, 1.0
    %v719 = vmul.f32 %v716, %v450
    %721 = vrot.lane.b32.xlu0 %v718, 64
    %v722 = vpop.permute.xlu0 %721
    %v724 = vmul.f32 %v716, %v722
    %726 = vrot.lane.b32.xlu0 %v724, 32
    %v727 = vpop.permute.xlu0 %726
    %v729 = vadd.f32 %v719, %v727
    %v730 = vtanh.pop %v729
    %732 = vrot.lane.b32.xlu0 %v730, 64
    %v733 = vpop.permute.xlu0 %732
    %v735 = vmul.f32 %v716, %v733
    %v736 = vsel %vm75, %v632, 0
    %738 = vmatprep.subr.mxu0 0.0
    %739 = vmatpush1.msra.mxu0 %v48
    %740 = vmatprep.subr.mxu0 0.0
    %741 = vmatpush1.msra.mxu0 %v49
    %742 = vmatprep.subr.mxu0 0.0
    %743 = vmatpush1.msra.mxu0 %v50
    %744 = vmatprep.subr.mxu0 0.0
    %745 = vmatpush1.msra.mxu0 %v51
    %746 = vmatprep.subr.mxu0 0.0
    %747 = vmatpush1.msra.mxu0 0.0
    %748 = vmatprep.subr.mxu0 0.0
    %749 = vmatpush1.msra.mxu0 0.0
    %750 = vmatprep.subr.mxu0 0.0
    %751 = vmatpush1.msra.mxu0 0.0
    %752 = vmatprep.subr.mxu0 0.0
    %753 = vmatpush1.msra.mxu0 0.0
    %754 = vmatprep.subr.mxu0 0.0
    %755 = vmatpush1.msra.mxu0 0.0
    %756 = vmatprep.subr.mxu0 0.0
    %757 = vmatpush1.msra.mxu0 0.0
    %758 = vmatprep.subr.mxu0 0.0
    %759 = vmatpush1.msra.mxu0 0.0
    %760 = vmatprep.subr.mxu0 0.0
    %761 = vmatpush1.msra.mxu0 0.0
    %762 = vmatprep.subr.mxu0 0.0
    %763 = vmatpush1.msra.mxu0 0.0
    %764 = vmatprep.subr.mxu0 0.0
    %765 = vmatpush1.msra.mxu0 0.0
    %766 = vmatprep.subr.mxu0 0.0
    %767 = vmatpush1.msra.mxu0 0.0
    %768 = vmatprep.subr.mxu0 0.0
    %769 = vmatpush1.msra.mxu0 0.0
    %770 = vmatprep.subr.mxu0 0.0
    %771 = vmatpush1.msra.mxu0 0.0
    %772 = vmatprep.subr.mxu0 0.0
    %773 = vmatpush1.msra.mxu0 0.0
    %774 = vmatprep.subr.mxu0 0.0
    %775 = vmatpush1.msra.mxu0 0.0
    %776 = vmatprep.subr.mxu0 0.0
    %777 = vmatpush1.msra.mxu0 0.0
    %778 = vmatprep.subr.mxu0 0.0
    %779 = vmatpush1.msra.mxu0 0.0
    %780 = vmatprep.subr.mxu0 0.0
    %781 = vmatpush1.msra.mxu0 0.0
    %782 = vmatprep.subr.mxu0 0.0
    %783 = vmatpush1.msra.mxu0 0.0
    %784 = vmatprep.subr.mxu0 0.0
    %785 = vmatpush1.msra.mxu0 0.0
    %786 = vmatprep.subr.mxu0 0.0
    %787 = vmatpush1.msra.mxu0 0.0
    %788 = vmatprep.subr.mxu0 0.0
    %789 = vmatpush1.msra.mxu0 0.0
    %790 = vmatprep.subr.mxu0 0.0
    %791 = vmatpush1.msra.mxu0 0.0
    %792 = vmatprep.subr.mxu0 0.0
    %793 = vmatpush1.msra.mxu0 0.0
    %794 = vmatprep.subr.mxu0 0.0
    %795 = vmatpush1.msra.mxu0 0.0
    %796 = vmatprep.subr.mxu0 0.0
    %797 = vmatpush1.msra.mxu0 0.0
    %798 = vmatprep.subr.mxu0 0.0
    %799 = vmatpush1.msra.mxu0 0.0
    %800 = vmatprep.subr.mxu0 0.0
    %801 = vmatpush1.msra.mxu0 0.0
    %802 = vmatprep.mubr.f32.mxu0 0.0
    %803 = vmatmul.mubr.f32.gmra.mrb[0].mxu0 %v736
    %v804 = vpop.f32.mrb[0].mxu0
    %v805 = vadd.f32 0.0, %v804
    %v806 = vpop.f32.mrb[0].mxu0
    %807 = vdwg.mxu0
    %809 = vrot.lane.b32.xlu0 %v735, 32
    %v810 = vpop.permute.xlu0 %809
    %v811 = vsel %vm75, %v810, 0
    %813 = vmatprep.subr.mxu0 0.0
    %814 = vmatpush1.msra.mxu0 %v44
    %815 = vmatprep.subr.mxu0 0.0
    %816 = vmatpush1.msra.mxu0 %v45
    %817 = vmatprep.subr.mxu0 0.0
    %818 = vmatpush1.msra.mxu0 %v46
    %819 = vmatprep.subr.mxu0 0.0
    %820 = vmatpush1.msra.mxu0 %v47
    %821 = vmatprep.subr.mxu0 0.0
    %822 = vmatpush1.msra.mxu0 0.0
    %823 = vmatprep.subr.mxu0 0.0
    %824 = vmatpush1.msra.mxu0 0.0
    %825 = vmatprep.subr.mxu0 0.0
    %826 = vmatpush1.msra.mxu0 0.0
    %827 = vmatprep.subr.mxu0 0.0
    %828 = vmatpush1.msra.mxu0 0.0
    %829 = vmatprep.subr.mxu0 0.0
    %830 = vmatpush1.msra.mxu0 0.0
    %831 = vmatprep.subr.mxu0 0.0
    %832 = vmatpush1.msra.mxu0 0.0
    %833 = vmatprep.subr.mxu0 0.0
    %834 = vmatpush1.msra.mxu0 0.0
    %835 = vmatprep.subr.mxu0 0.0
    %836 = vmatpush1.msra.mxu0 0.0
    %837 = vmatprep.subr.mxu0 0.0
    %838 = vmatpush1.msra.mxu0 0.0
    %839 = vmatprep.subr.mxu0 0.0
    %840 = vmatpush1.msra.mxu0 0.0
    %841 = vmatprep.subr.mxu0 0.0
    %842 = vmatpush1.msra.mxu0 0.0
    %843 = vmatprep.subr.mxu0 0.0
    %844 = vmatpush1.msra.mxu0 0.0
    %845 = vmatprep.subr.mxu0 0.0
    %846 = vmatpush1.msra.mxu0 0.0
    %847 = vmatprep.subr.mxu0 0.0
    %848 = vmatpush1.msra.mxu0 0.0
    %849 = vmatprep.subr.mxu0 0.0
    %850 = vmatpush1.msra.mxu0 0.0
    %851 = vmatprep.subr.mxu0 0.0
    %852 = vmatpush1.msra.mxu0 0.0
    %853 = vmatprep.subr.mxu0 0.0
    %854 = vmatpush1.msra.mxu0 0.0
    %855 = vmatprep.subr.mxu0 0.0
    %856 = vmatpush1.msra.mxu0 0.0
    %857 = vmatprep.subr.mxu0 0.0
    %858 = vmatpush1.msra.mxu0 0.0
    %859 = vmatprep.subr.mxu0 0.0
    %860 = vmatpush1.msra.mxu0 0.0
    %861 = vmatprep.subr.mxu0 0.0
    %862 = vmatpush1.msra.mxu0 0.0
    %863 = vmatprep.subr.mxu0 0.0
    %864 = vmatpush1.msra.mxu0 0.0
    %865 = vmatprep.subr.mxu0 0.0
    %866 = vmatpush1.msra.mxu0 0.0
    %867 = vmatprep.subr.mxu0 0.0
    %868 = vmatpush1.msra.mxu0 0.0
    %869 = vmatprep.subr.mxu0 0.0
    %870 = vmatpush1.msra.mxu0 0.0
    %871 = vmatprep.subr.mxu0 0.0
    %872 = vmatpush1.msra.mxu0 0.0
    %873 = vmatprep.subr.mxu0 0.0
    %874 = vmatpush1.msra.mxu0 0.0
    %875 = vmatprep.subr.mxu0 0.0
    %876 = vmatpush1.msra.mxu0 0.0
    %877 = vmatprep.mubr.f32.mxu0 0.0
    %878 = vmatmul.mubr.f32.gmra.mrb[0].mxu0 %v811
    %v879 = vpop.f32.mrb[0].mxu0
    %v880 = vadd.f32 %v805, %v879
    %v881 = vpop.f32.mrb[0].mxu0
    %882 = vdwg.mxu0
    %v883 = vadd.f32 %v880, %v57
    %v884 = vxor.u32 %v883, 2147483648
    %v885 = vmul.f32 %v884, 1.442695
    %v886 = vpow.pop %v885
    %v887 = vadd.f32 %v886, 1.0
    %v888 = vrcp.pop %v887
    %v889 = vmul.f32 1.0, %v888
    %v890 = vmul.f32 %v889, 2.0
    %v891 = vsub.f32 %v890, 1.0
    %v892 = vmul.f32 %v889, %v623
    %894 = vrot.lane.b32.xlu0 %v891, 64
    %v895 = vpop.permute.xlu0 %894
    %v897 = vmul.f32 %v889, %v895
    %899 = vrot.lane.b32.xlu0 %v897, 32
    %v900 = vpop.permute.xlu0 %899
    %v902 = vadd.f32 %v892, %v900
    %v903 = vtanh.pop %v902
    %905 = vrot.lane.b32.xlu0 %v903, 64
    %v906 = vpop.permute.xlu0 %905
    %v908 = vmul.f32 %v889, %v906
    %910 = vrot.lane.b32.xlu0 %v908, 32
    %v911 = vpop.permute.xlu0 %910
    %s913 = scalar_lea.vmem %s11, %s637
    %914 = vst.msk [vmem:[%s913] sm:$0xff] %vm75, %v911
    %s915 = sadd.s32 %s356, 3
    %s916 = smul.u32 %s915, 8
    %s917 = scalar_lea.vmem %s0, %s916
    %v918 = vld [vmem:[%s917] sm:$0xff]
    %919 = vmatprep.subr.mxu0 0.0
    %920 = vmatpush1.msra.mxu0 %v40
    %921 = vmatprep.subr.mxu0 0.0
    %922 = vmatpush1.msra.mxu0 %v41
    %923 = vmatprep.subr.mxu0 0.0
    %924 = vmatpush1.msra.mxu0 %v42
    %925 = vmatprep.subr.mxu0 0.0
    %926 = vmatpush1.msra.mxu0 %v43
    %927 = vmatprep.subr.mxu0 0.0
    %928 = vmatpush1.msra.mxu0 0.0
    %929 = vmatprep.subr.mxu0 0.0
    %930 = vmatpush1.msra.mxu0 0.0
    %931 = vmatprep.subr.mxu0 0.0
    %932 = vmatpush1.msra.mxu0 0.0
    %933 = vmatprep.subr.mxu0 0.0
    %934 = vmatpush1.msra.mxu0 0.0
    %935 = vmatprep.subr.mxu0 0.0
    %936 = vmatpush1.msra.mxu0 0.0
    %937 = vmatprep.subr.mxu0 0.0
    %938 = vmatpush1.msra.mxu0 0.0
    %939 = vmatprep.subr.mxu0 0.0
    %940 = vmatpush1.msra.mxu0 0.0
    %941 = vmatprep.subr.mxu0 0.0
    %942 = vmatpush1.msra.mxu0 0.0
    %943 = vmatprep.subr.mxu0 0.0
    %944 = vmatpush1.msra.mxu0 0.0
    %945 = vmatprep.subr.mxu0 0.0
    %946 = vmatpush1.msra.mxu0 0.0
    %947 = vmatprep.subr.mxu0 0.0
    %948 = vmatpush1.msra.mxu0 0.0
    %949 = vmatprep.subr.mxu0 0.0
    %950 = vmatpush1.msra.mxu0 0.0
    %951 = vmatprep.subr.mxu0 0.0
    %952 = vmatpush1.msra.mxu0 0.0
    %953 = vmatprep.subr.mxu0 0.0
    %954 = vmatpush1.msra.mxu0 0.0
    %955 = vmatprep.subr.mxu0 0.0
    %956 = vmatpush1.msra.mxu0 0.0
    %957 = vmatprep.subr.mxu0 0.0
    %958 = vmatpush1.msra.mxu0 0.0
    %959 = vmatprep.subr.mxu0 0.0
    %960 = vmatpush1.msra.mxu0 0.0
    %961 = vmatprep.subr.mxu0 0.0
    %962 = vmatpush1.msra.mxu0 0.0
    %963 = vmatprep.subr.mxu0 0.0
    %964 = vmatpush1.msra.mxu0 0.0
    %965 = vmatprep.subr.mxu0 0.0
    %966 = vmatpush1.msra.mxu0 0.0
    %967 = vmatprep.subr.mxu0 0.0
    %968 = vmatpush1.msra.mxu0 0.0
    %969 = vmatprep.subr.mxu0 0.0
    %970 = vmatpush1.msra.mxu0 0.0
    %971 = vmatprep.subr.mxu0 0.0
    %972 = vmatpush1.msra.mxu0 0.0
    %973 = vmatprep.subr.mxu0 0.0
    %974 = vmatpush1.msra.mxu0 0.0
    %975 = vmatprep.subr.mxu0 0.0
    %976 = vmatpush1.msra.mxu0 0.0
    %977 = vmatprep.subr.mxu0 0.0
    %978 = vmatpush1.msra.mxu0 0.0
    %979 = vmatprep.subr.mxu0 0.0
    %980 = vmatpush1.msra.mxu0 0.0
    %981 = vmatprep.subr.mxu0 0.0
    %982 = vmatpush1.msra.mxu0 0.0
    %983 = vmatprep.mubr.f32.mxu0 0.0
    %984 = vmatmul.mubr.f32.gmra.mrb[0].mxu0 %v811
    %v985 = vpop.f32.mrb[0].mxu0
    %v986 = vadd.f32 0.0, %v985
    %v987 = vpop.f32.mrb[0].mxu0
    %988 = vdwg.mxu0
    %v989 = vadd.f32 %v918, %v986
    %v990 = vxor.u32 %v989, 2147483648
    %v991 = vmul.f32 %v990, 1.442695
    %v992 = vpow.pop %v991
    %v993 = vadd.f32 %v992, 1.0
    %v994 = vrcp.pop %v993
    %v995 = vmul.f32 1.0, %v994
    %v996 = vmul.f32 %v995, 2.0
    %v997 = vsub.f32 %v996, 1.0
    %v998 = vmul.f32 %v995, %v729
    %1000 = vrot.lane.b32.xlu0 %v997, 64
    %v1001 = vpop.permute.xlu0 %1000
    %v1003 = vmul.f32 %v995, %v1001
    %1005 = vrot.lane.b32.xlu0 %v1003, 32
    %v1006 = vpop.permute.xlu0 %1005
    %v1008 = vadd.f32 %v998, %v1006
    %v1009 = vtanh.pop %v1008
    %1011 = vrot.lane.b32.xlu0 %v1009, 64
    %v1012 = vpop.permute.xlu0 %1011
    %v1014 = vmul.f32 %v995, %v1012
    %v1015 = vsel %vm75, %v911, 0
    %1017 = vmatprep.subr.mxu0 0.0
    %1018 = vmatpush1.msra.mxu0 %v48
    %1019 = vmatprep.subr.mxu0 0.0
    %1020 = vmatpush1.msra.mxu0 %v49
    %1021 = vmatprep.subr.mxu0 0.0
    %1022 = vmatpush1.msra.mxu0 %v50
    %1023 = vmatprep.subr.mxu0 0.0
    %1024 = vmatpush1.msra.mxu0 %v51
    %1025 = vmatprep.subr.mxu0 0.0
    %1026 = vmatpush1.msra.mxu0 0.0
    %1027 = vmatprep.subr.mxu0 0.0
    %1028 = vmatpush1.msra.mxu0 0.0
    %1029 = vmatprep.subr.mxu0 0.0
    %1030 = vmatpush1.msra.mxu0 0.0
    %1031 = vmatprep.subr.mxu0 0.0
    %1032 = vmatpush1.msra.mxu0 0.0
    %1033 = vmatprep.subr.mxu0 0.0
    %1034 = vmatpush1.msra.mxu0 0.0
    %1035 = vmatprep.subr.mxu0 0.0
    %1036 = vmatpush1.msra.mxu0 0.0
    %1037 = vmatprep.subr.mxu0 0.0
    %1038 = vmatpush1.msra.mxu0 0.0
    %1039 = vmatprep.subr.mxu0 0.0
    %1040 = vmatpush1.msra.mxu0 0.0
    %1041 = vmatprep.subr.mxu0 0.0
    %1042 = vmatpush1.msra.mxu0 0.0
    %1043 = vmatprep.subr.mxu0 0.0
    %1044 = vmatpush1.msra.mxu0 0.0
    %1045 = vmatprep.subr.mxu0 0.0
    %1046 = vmatpush1.msra.mxu0 0.0
    %1047 = vmatprep.subr.mxu0 0.0
    %1048 = vmatpush1.msra.mxu0 0.0
    %1049 = vmatprep.subr.mxu0 0.0
    %1050 = vmatpush1.msra.mxu0 0.0
    %1051 = vmatprep.subr.mxu0 0.0
    %1052 = vmatpush1.msra.mxu0 0.0
    %1053 = vmatprep.subr.mxu0 0.0
    %1054 = vmatpush1.msra.mxu0 0.0
    %1055 = vmatprep.subr.mxu0 0.0
    %1056 = vmatpush1.msra.mxu0 0.0
    %1057 = vmatprep.subr.mxu0 0.0
    %1058 = vmatpush1.msra.mxu0 0.0
    %1059 = vmatprep.subr.mxu0 0.0
    %1060 = vmatpush1.msra.mxu0 0.0
    %1061 = vmatprep.subr.mxu0 0.0
    %1062 = vmatpush1.msra.mxu0 0.0
    %1063 = vmatprep.subr.mxu0 0.0
    %1064 = vmatpush1.msra.mxu0 0.0
    %1065 = vmatprep.subr.mxu0 0.0
    %1066 = vmatpush1.msra.mxu0 0.0
    %1067 = vmatprep.subr.mxu0 0.0
    %1068 = vmatpush1.msra.mxu0 0.0
    %1069 = vmatprep.subr.mxu0 0.0
    %1070 = vmatpush1.msra.mxu0 0.0
    %1071 = vmatprep.subr.mxu0 0.0
    %1072 = vmatpush1.msra.mxu0 0.0
    %1073 = vmatprep.subr.mxu0 0.0
    %1074 = vmatpush1.msra.mxu0 0.0
    %1075 = vmatprep.subr.mxu0 0.0
    %1076 = vmatpush1.msra.mxu0 0.0
    %1077 = vmatprep.subr.mxu0 0.0
    %1078 = vmatpush1.msra.mxu0 0.0
    %1079 = vmatprep.subr.mxu0 0.0
    %1080 = vmatpush1.msra.mxu0 0.0
    %1081 = vmatprep.mubr.f32.mxu0 0.0
    %1082 = vmatmul.mubr.f32.gmra.mrb[0].mxu0 %v1015
    %v1083 = vpop.f32.mrb[0].mxu0
    %v1084 = vadd.f32 0.0, %v1083
    %v1085 = vpop.f32.mrb[0].mxu0
    %1086 = vdwg.mxu0
    %1088 = vrot.lane.b32.xlu0 %v1014, 32
    %v1089 = vpop.permute.xlu0 %1088
    %v1090 = vsel %vm75, %v1089, 0
    %1092 = vmatprep.subr.mxu0 0.0
    %1093 = vmatpush1.msra.mxu0 %v44
    %1094 = vmatprep.subr.mxu0 0.0
    %1095 = vmatpush1.msra.mxu0 %v45
    %1096 = vmatprep.subr.mxu0 0.0
    %1097 = vmatpush1.msra.mxu0 %v46
    %1098 = vmatprep.subr.mxu0 0.0
    %1099 = vmatpush1.msra.mxu0 %v47
    %1100 = vmatprep.subr.mxu0 0.0
    %1101 = vmatpush1.msra.mxu0 0.0
    %1102 = vmatprep.subr.mxu0 0.0
    %1103 = vmatpush1.msra.mxu0 0.0
    %1104 = vmatprep.subr.mxu0 0.0
    %1105 = vmatpush1.msra.mxu0 0.0
    %1106 = vmatprep.subr.mxu0 0.0
    %1107 = vmatpush1.msra.mxu0 0.0
    %1108 = vmatprep.subr.mxu0 0.0
    %1109 = vmatpush1.msra.mxu0 0.0
    %1110 = vmatprep.subr.mxu0 0.0
    %1111 = vmatpush1.msra.mxu0 0.0
    %1112 = vmatprep.subr.mxu0 0.0
    %1113 = vmatpush1.msra.mxu0 0.0
    %1114 = vmatprep.subr.mxu0 0.0
    %1115 = vmatpush1.msra.mxu0 0.0
    %1116 = vmatprep.subr.mxu0 0.0
    %1117 = vmatpush1.msra.mxu0 0.0
    %1118 = vmatprep.subr.mxu0 0.0
    %1119 = vmatpush1.msra.mxu0 0.0
    %1120 = vmatprep.subr.mxu0 0.0
    %1121 = vmatpush1.msra.mxu0 0.0
    %1122 = vmatprep.subr.mxu0 0.0
    %1123 = vmatpush1.msra.mxu0 0.0
    %1124 = vmatprep.subr.mxu0 0.0
    %1125 = vmatpush1.msra.mxu0 0.0
    %1126 = vmatprep.subr.mxu0 0.0
    %1127 = vmatpush1.msra.mxu0 0.0
    %1128 = vmatprep.subr.mxu0 0.0
    %1129 = vmatpush1.msra.mxu0 0.0
    %1130 = vmatprep.subr.mxu0 0.0
    %1131 = vmatpush1.msra.mxu0 0.0
    %1132 = vmatprep.subr.mxu0 0.0
    %1133 = vmatpush1.msra.mxu0 0.0
    %1134 = vmatprep.subr.mxu0 0.0
    %1135 = vmatpush1.msra.mxu0 0.0
    %1136 = vmatprep.subr.mxu0 0.0
    %1137 = vmatpush1.msra.mxu0 0.0
    %1138 = vmatprep.subr.mxu0 0.0
    %1139 = vmatpush1.msra.mxu0 0.0
    %1140 = vmatprep.subr.mxu0 0.0
    %1141 = vmatpush1.msra.mxu0 0.0
    %1142 = vmatprep.subr.mxu0 0.0
    %1143 = vmatpush1.msra.mxu0 0.0
    %1144 = vmatprep.subr.mxu0 0.0
    %1145 = vmatpush1.msra.mxu0 0.0
    %1146 = vmatprep.subr.mxu0 0.0
    %1147 = vmatpush1.msra.mxu0 0.0
    %1148 = vmatprep.subr.mxu0 0.0
    %1149 = vmatpush1.msra.mxu0 0.0
    %1150 = vmatprep.subr.mxu0 0.0
    %1151 = vmatpush1.msra.mxu0 0.0
    %1152 = vmatprep.subr.mxu0 0.0
    %1153 = vmatpush1.msra.mxu0 0.0
    %1154 = vmatprep.subr.mxu0 0.0
    %1155 = vmatpush1.msra.mxu0 0.0
    %1156 = vmatprep.mubr.f32.mxu0 0.0
    %1157 = vmatmul.mubr.f32.gmra.mrb[0].mxu0 %v1090
    %v1158 = vpop.f32.mrb[0].mxu0
    %v1159 = vadd.f32 %v1084, %v1158
    %v1160 = vpop.f32.mrb[0].mxu0
    %1161 = vdwg.mxu0
    %v1162 = vadd.f32 %v1159, %v57
    %v1163 = vxor.u32 %v1162, 2147483648
    %v1164 = vmul.f32 %v1163, 1.442695
    %v1165 = vpow.pop %v1164
    %v1166 = vadd.f32 %v1165, 1.0
    %v1167 = vrcp.pop %v1166
    %v1168 = vmul.f32 1.0, %v1167
    %v1169 = vmul.f32 %v1168, 2.0
    %v1170 = vsub.f32 %v1169, 1.0
    %v1171 = vmul.f32 %v1168, %v902
    %1173 = vrot.lane.b32.xlu0 %v1170, 64
    %v1174 = vpop.permute.xlu0 %1173
    %v1176 = vmul.f32 %v1168, %v1174
    %1178 = vrot.lane.b32.xlu0 %v1176, 32
    %v1179 = vpop.permute.xlu0 %1178
    %v1181 = vadd.f32 %v1171, %v1179
    %v1182 = vtanh.pop %v1181
    %1184 = vrot.lane.b32.xlu0 %v1182, 64
    %v1185 = vpop.permute.xlu0 %1184
    %v1187 = vmul.f32 %v1168, %v1185
    %1189 = vrot.lane.b32.xlu0 %v1187, 32
    %v1190 = vpop.permute.xlu0 %1189
    %s1192 = scalar_lea.vmem %s11, %s916
    %1193 = vst.msk [vmem:[%s1192] sm:$0xff] %vm75, %v1190
  $region50: #{cm_daelstm_forward.3} parent=0 // loop_footer
    %s64 = sadd.s32 1, %s60
  $region51: #{cm_daelstm_forward.3} parent=0 // loop_footer_branch
    %59 = sbr.rel target = $region47
  $region52: #{cm_daelstm_forward.3} parent=0 // loop_exit
    _
  %v1194 = vld [vmem:[%s5] sm:$0xff]
  %v1195 = vld [vmem:[%s5 + $0x8] sm:$0xff]
  %v1196 = vld [vmem:[%s5 + $0x10] sm:$0xff]
  %v1197 = vld [vmem:[%s5 + $0x18] sm:$0xff]
  %v1198 = vld [vmem:[%s6] sm:$0x1]
  %v1200 = vlaneseq
  %v1201 = vshrl.u32 %v1200, 7
  %v1202 = vsub.s32 0, %v1201
  %v1203 = vrot.slane %v1198, %v1202
  %1206 = vrot.lane.b32.xlu0 %v67, 32
  %v1207 = vpop.permute.xlu0 %1206
  %vm1208 = vcmask 261120
  %v1209 = vsel %vm1208, %v1207, 0
  %1211 = vmatprep.subr.mxu0 0.0
  %1212 = vmatpush1.msra.mxu0 %v1194
  %1213 = vmatprep.subr.mxu0 0.0
  %1214 = vmatpush1.msra.mxu0 %v1195
  %1215 = vmatprep.subr.mxu0 0.0
  %1216 = vmatpush1.msra.mxu0 %v1196
  %1217 = vmatprep.subr.mxu0 0.0
  %1218 = vmatpush1.msra.mxu0 %v1197
  %1219 = vmatprep.subr.mxu0 0.0
  %1220 = vmatpush1.msra.mxu0 0.0
  %1221 = vmatprep.subr.mxu0 0.0
  %1222 = vmatpush1.msra.mxu0 0.0
  %1223 = vmatprep.subr.mxu0 0.0
  %1224 = vmatpush1.msra.mxu0 0.0
  %1225 = vmatprep.subr.mxu0 0.0
  %1226 = vmatpush1.msra.mxu0 0.0
  %1227 = vmatprep.subr.mxu0 0.0
  %1228 = vmatpush1.msra.mxu0 0.0
  %1229 = vmatprep.subr.mxu0 0.0
  %1230 = vmatpush1.msra.mxu0 0.0
  %1231 = vmatprep.subr.mxu0 0.0
  %1232 = vmatpush1.msra.mxu0 0.0
  %1233 = vmatprep.subr.mxu0 0.0
  %1234 = vmatpush1.msra.mxu0 0.0
  %1235 = vmatprep.subr.mxu0 0.0
  %1236 = vmatpush1.msra.mxu0 0.0
  %1237 = vmatprep.subr.mxu0 0.0
  %1238 = vmatpush1.msra.mxu0 0.0
  %1239 = vmatprep.subr.mxu0 0.0
  %1240 = vmatpush1.msra.mxu0 0.0
  %1241 = vmatprep.subr.mxu0 0.0
  %1242 = vmatpush1.msra.mxu0 0.0
  %1243 = vmatprep.subr.mxu0 0.0
  %1244 = vmatpush1.msra.mxu0 0.0
  %1245 = vmatprep.subr.mxu0 0.0
  %1246 = vmatpush1.msra.mxu0 0.0
  %1247 = vmatprep.subr.mxu0 0.0
  %1248 = vmatpush1.msra.mxu0 0.0
  %1249 = vmatprep.subr.mxu0 0.0
  %1250 = vmatpush1.msra.mxu0 0.0
  %1251 = vmatprep.subr.mxu0 0.0
  %1252 = vmatpush1.msra.mxu0 0.0
  %1253 = vmatprep.subr.mxu0 0.0
  %1254 = vmatpush1.msra.mxu0 0.0
  %1255 = vmatprep.subr.mxu0 0.0
  %1256 = vmatpush1.msra.mxu0 0.0
  %1257 = vmatprep.subr.mxu0 0.0
  %1258 = vmatpush1.msra.mxu0 0.0
  %1259 = vmatprep.subr.mxu0 0.0
  %1260 = vmatpush1.msra.mxu0 0.0
  %1261 = vmatprep.subr.mxu0 0.0
  %1262 = vmatpush1.msra.mxu0 0.0
  %1263 = vmatprep.subr.mxu0 0.0
  %1264 = vmatpush1.msra.mxu0 0.0
  %1265 = vmatprep.subr.mxu0 0.0
  %1266 = vmatpush1.msra.mxu0 0.0
  %1267 = vmatprep.subr.mxu0 0.0
  %1268 = vmatpush1.msra.mxu0 0.0
  %1269 = vmatprep.subr.mxu0 0.0
  %1270 = vmatpush1.msra.mxu0 0.0
  %1271 = vmatprep.subr.mxu0 0.0
  %1272 = vmatpush1.msra.mxu0 0.0
  %1273 = vmatprep.subr.mxu0 0.0
  %1274 = vmatpush1.msra.mxu0 0.0
  %1275 = vmatprep.mubr.f32.mxu0 0.0
  %1276 = vmatmul.mubr.f32.gmra.mrb[0].mxu0 %v1209
  %v1277 = vpop.f32.mrb[0].mxu0
  %v1278 = vadd.f32 %v1203, %v1277
  %v1279 = vpop.f32.mrb[0].mxu0
  %1280 = vdwg.mxu0
  %v1281 = vmax.f32 %v1278, 0.0
  %v1282 = vld [vmem:[%s7] sm:$0xff]
  %v1283 = vld [vmem:[%s7 + $0x8] sm:$0xff]
  %v1284 = vld [vmem:[%s7 + $0x10] sm:$0xff]
  %v1285 = vld [vmem:[%s7 + $0x18] sm:$0xff]
  %v1286 = vld [vmem:[%s8] sm:$0x1]
  %v1288 = vlaneseq
  %v1289 = vshrl.u32 %v1288, 7
  %v1290 = vsub.s32 0, %v1289
  %v1291 = vrot.slane %v1286, %v1290
  %v1294 = vsel %vm1208, %v1281, 0
  %1296 = vmatprep.subr.mxu0 0.0
  %1297 = vmatpush1.msra.mxu0 %v1282
  %1298 = vmatprep.subr.mxu0 0.0
  %1299 = vmatpush1.msra.mxu0 %v1283
  %1300 = vmatprep.subr.mxu0 0.0
  %1301 = vmatpush1.msra.mxu0 %v1284
  %1302 = vmatprep.subr.mxu0 0.0
  %1303 = vmatpush1.msra.mxu0 %v1285
  %1304 = vmatprep.subr.mxu0 0.0
  %1305 = vmatpush1.msra.mxu0 0.0
  %1306 = vmatprep.subr.mxu0 0.0
  %1307 = vmatpush1.msra.mxu0 0.0
  %1308 = vmatprep.subr.mxu0 0.0
  %1309 = vmatpush1.msra.mxu0 0.0
  %1310 = vmatprep.subr.mxu0 0.0
  %1311 = vmatpush1.msra.mxu0 0.0
  %1312 = vmatprep.subr.mxu0 0.0
  %1313 = vmatpush1.msra.mxu0 0.0
  %1314 = vmatprep.subr.mxu0 0.0
  %1315 = vmatpush1.msra.mxu0 0.0
  %1316 = vmatprep.subr.mxu0 0.0
  %1317 = vmatpush1.msra.mxu0 0.0
  %1318 = vmatprep.subr.mxu0 0.0
  %1319 = vmatpush1.msra.mxu0 0.0
  %1320 = vmatprep.subr.mxu0 0.0
  %1321 = vmatpush1.msra.mxu0 0.0
  %1322 = vmatprep.subr.mxu0 0.0
  %1323 = vmatpush1.msra.mxu0 0.0
  %1324 = vmatprep.subr.mxu0 0.0
  %1325 = vmatpush1.msra.mxu0 0.0
  %1326 = vmatprep.subr.mxu0 0.0
  %1327 = vmatpush1.msra.mxu0 0.0
  %1328 = vmatprep.subr.mxu0 0.0
  %1329 = vmatpush1.msra.mxu0 0.0
  %1330 = vmatprep.subr.mxu0 0.0
  %1331 = vmatpush1.msra.mxu0 0.0
  %1332 = vmatprep.subr.mxu0 0.0
  %1333 = vmatpush1.msra.mxu0 0.0
  %1334 = vmatprep.subr.mxu0 0.0
  %1335 = vmatpush1.msra.mxu0 0.0
  %1336 = vmatprep.subr.mxu0 0.0
  %1337 = vmatpush1.msra.mxu0 0.0
  %1338 = vmatprep.subr.mxu0 0.0
  %1339 = vmatpush1.msra.mxu0 0.0
  %1340 = vmatprep.subr.mxu0 0.0
  %1341 = vmatpush1.msra.mxu0 0.0
  %1342 = vmatprep.subr.mxu0 0.0
  %1343 = vmatpush1.msra.mxu0 0.0
  %1344 = vmatprep.subr.mxu0 0.0
  %1345 = vmatpush1.msra.mxu0 0.0
  %1346 = vmatprep.subr.mxu0 0.0
  %1347 = vmatpush1.msra.mxu0 0.0
  %1348 = vmatprep.subr.mxu0 0.0
  %1349 = vmatpush1.msra.mxu0 0.0
  %1350 = vmatprep.subr.mxu0 0.0
  %1351 = vmatpush1.msra.mxu0 0.0
  %1352 = vmatprep.subr.mxu0 0.0
  %1353 = vmatpush1.msra.mxu0 0.0
  %1354 = vmatprep.subr.mxu0 0.0
  %1355 = vmatpush1.msra.mxu0 0.0
  %1356 = vmatprep.subr.mxu0 0.0
  %1357 = vmatpush1.msra.mxu0 0.0
  %1358 = vmatprep.subr.mxu0 0.0
  %1359 = vmatpush1.msra.mxu0 0.0
  %1360 = vmatprep.mubr.f32.mxu0 0.0
  %1361 = vmatmul.mubr.f32.gmra.mrb[0].mxu0 %v1294
  %v1362 = vpop.f32.mrb[0].mxu0
  %v1363 = vadd.f32 %v1291, %v1362
  %v1364 = vpop.f32.mrb[0].mxu0
  %1365 = vdwg.mxu0
  %v1366 = vmax.f32 %v1363, 0.0
  %v1367 = vld [vmem:[%s9] sm:$0xff]
  %v1368 = vld [vmem:[%s9 + $0x8] sm:$0xff]
  %v1369 = vld [vmem:[%s10] sm:$0x1]
  %v1371 = vlaneseq
  %v1372 = vshrl.u32 %v1371, 7
  %v1373 = vsub.s32 0, %v1372
  %v1374 = vrot.slane %v1369, %v1373
  %vm1376 = vcmask 130048
  %v1378 = vsel %vm1376, %v1366, 0
  %1380 = vmatprep.subr.mxu0 0.0
  %1381 = vmatpush1.msra.mxu0 %v1367
  %1382 = vmatprep.subr.mxu0 0.0
  %1383 = vmatpush1.msra.mxu0 %v1368
  %1384 = vmatprep.subr.mxu0 0.0
  %1385 = vmatpush1.msra.mxu0 0.0
  %1386 = vmatprep.subr.mxu0 0.0
  %1387 = vmatpush1.msra.mxu0 0.0
  %1388 = vmatprep.subr.mxu0 0.0
  %1389 = vmatpush1.msra.mxu0 0.0
  %1390 = vmatprep.subr.mxu0 0.0
  %1391 = vmatpush1.msra.mxu0 0.0
  %1392 = vmatprep.subr.mxu0 0.0
  %1393 = vmatpush1.msra.mxu0 0.0
  %1394 = vmatprep.subr.mxu0 0.0
  %1395 = vmatpush1.msra.mxu0 0.0
  %1396 = vmatprep.subr.mxu0 0.0
  %1397 = vmatpush1.msra.mxu0 0.0
  %1398 = vmatprep.subr.mxu0 0.0
  %1399 = vmatpush1.msra.mxu0 0.0
  %1400 = vmatprep.subr.mxu0 0.0
  %1401 = vmatpush1.msra.mxu0 0.0
  %1402 = vmatprep.subr.mxu0 0.0
  %1403 = vmatpush1.msra.mxu0 0.0
  %1404 = vmatprep.subr.mxu0 0.0
  %1405 = vmatpush1.msra.mxu0 0.0
  %1406 = vmatprep.subr.mxu0 0.0
  %1407 = vmatpush1.msra.mxu0 0.0
  %1408 = vmatprep.subr.mxu0 0.0
  %1409 = vmatpush1.msra.mxu0 0.0
  %1410 = vmatprep.subr.mxu0 0.0
  %1411 = vmatpush1.msra.mxu0 0.0
  %1412 = vmatprep.subr.mxu0 0.0
  %1413 = vmatpush1.msra.mxu0 0.0
  %1414 = vmatprep.subr.mxu0 0.0
  %1415 = vmatpush1.msra.mxu0 0.0
  %1416 = vmatprep.subr.mxu0 0.0
  %1417 = vmatpush1.msra.mxu0 0.0
  %1418 = vmatprep.subr.mxu0 0.0
  %1419 = vmatpush1.msra.mxu0 0.0
  %1420 = vmatprep.subr.mxu0 0.0
  %1421 = vmatpush1.msra.mxu0 0.0
  %1422 = vmatprep.subr.mxu0 0.0
  %1423 = vmatpush1.msra.mxu0 0.0
  %1424 = vmatprep.subr.mxu0 0.0
  %1425 = vmatpush1.msra.mxu0 0.0
  %1426 = vmatprep.subr.mxu0 0.0
  %1427 = vmatpush1.msra.mxu0 0.0
  %1428 = vmatprep.subr.mxu0 0.0
  %1429 = vmatpush1.msra.mxu0 0.0
  %1430 = vmatprep.subr.mxu0 0.0
  %1431 = vmatpush1.msra.mxu0 0.0
  %1432 = vmatprep.subr.mxu0 0.0
  %1433 = vmatpush1.msra.mxu0 0.0
  %1434 = vmatprep.subr.mxu0 0.0
  %1435 = vmatpush1.msra.mxu0 0.0
  %1436 = vmatprep.subr.mxu0 0.0
  %1437 = vmatpush1.msra.mxu0 0.0
  %1438 = vmatprep.subr.mxu0 0.0
  %1439 = vmatpush1.msra.mxu0 0.0
  %1440 = vmatprep.subr.mxu0 0.0
  %1441 = vmatpush1.msra.mxu0 0.0
  %1442 = vmatprep.subr.mxu0 0.0
  %1443 = vmatpush1.msra.mxu0 0.0
  %1444 = vmatprep.mubr.f32.mxu0 0.0
  %1445 = vmatmul.mubr.f32.gmra.mrb[0].mxu0 %v1378
  %v1446 = vpop.f32.mrb[0].mxu0
  %v1447 = vadd.f32 %v1374, %v1446
  %v1448 = vpop.f32.mrb[0].mxu0
  %1449 = vdwg.mxu0
  %vm1450 = vcmask 31744
  %1451 = vst.msk [vmem:[%s12] sm:$0xff] %vm1450, %v1447
  // Predicated region
  $region53: #{cm_daelstm_forward.3} parent=0 // pred_check
    _
  $region54: #{cm_daelstm_forward.3} parent=0 // pred_check_branch
    %1453 = sbr.rel (0) target = $region56
  $region55: #{cm_daelstm_forward.3} parent=0 // pred_region
    _
  $region56: #{cm_daelstm_forward.3} parent=0 // pred_fallthru
    _
  // Predicated region
  $region57: #{cm_daelstm_forward.3} parent=0 // pred_check
    _
  $region58: #{cm_daelstm_forward.3} parent=0 // pred_check_branch
    %1455 = sbr.rel (0) target = $region60
  $region59: #{cm_daelstm_forward.3} parent=0 // pred_region
    _
  $region60: #{cm_daelstm_forward.3} parent=0 // pred_fallthru
    _
  // Predicated region
  $region61: #{cm_daelstm_forward.3} parent=0 // pred_check
    _
  $region62: #{cm_daelstm_forward.3} parent=0 // pred_check_branch
    %1457 = sbr.rel (0) target = $region64
  $region63: #{cm_daelstm_forward.3} parent=0 // pred_region
    _
  $region64: #{cm_daelstm_forward.3} parent=0 // pred_fallthru
    _
  // Predicated region
  $region65: #{cm_daelstm_forward.3} parent=0 // pred_check
    _
  $region66: #{cm_daelstm_forward.3} parent=0 // pred_check_branch
    %1459 = sbr.rel (0) target = $region68
  $region67: #{cm_daelstm_forward.3} parent=0 // pred_region
    _
  $region68: #{cm_daelstm_forward.3} parent=0 // pred_fallthru
    _

</llo_original>
